<compile_context>
chip_gen: v6e
topology: v6e:2x2x1
jax: 0.10.0
libtpu: 0.0.40
codegen_flags: <defaults>
</compile_context>

<pallas_src>
import functools

import jax
import jax.numpy as jnp
from jax.experimental import pallas as pl
from jax.experimental.pallas import tpu as pltpu


# -----------------------------------------------------------------------------
# Small helpers
# -----------------------------------------------------------------------------
def _round_up(x, m):
    return ((x + m - 1) // m) * m


def _pad_dim(a, axis, target):
    pad = target - a.shape[axis]
    if pad <= 0:
        return a
    widths = [(0, 0)] * a.ndim
    widths[axis] = (0, pad)
    return jnp.pad(a, widths)


def _fold_bn(gamma, beta, mean, var, eps=1e-5):
    scale = gamma / jnp.sqrt(var + eps)
    bias = beta - mean * scale
    return scale, bias


def _const_block_spec(shape):
    """BlockSpec for a grid-invariant (weight/bias) block: single buffer."""
    zeros = (0,) * len(shape)
    index_map = lambda n, _z=zeros: _z
    try:
        return pl.BlockSpec(shape, index_map, pipeline_mode=pl.Buffered(1))
    except (TypeError, AttributeError):
        return pl.BlockSpec(shape, index_map)


# -----------------------------------------------------------------------------
# Fused bottleneck kernel (one image per grid step)
# -----------------------------------------------------------------------------
def _fused_bottleneck_kernel(*refs, s, ho, wo, comp_hw, has_ds, n_comp):
    comp_refs = refs[:n_comp]
    w1_ref, b1_ref, w2_ref, b2_ref, w3_ref, b3_ref = refs[n_comp:n_comp + 6]
    idx = n_comp + 6
    if has_ds:
        wd_ref, bd_ref = refs[idx:idx + 2]
        idx += 2
    o_ref = refs[idx]
    scr_refs = refs[idx + 1:idx + 1 + n_comp]

    cmid = w2_ref.shape[-1]
    m_out = ho * wo

    # ---- Stage 1: conv1 (1x1) + BN1 bias + ReLU into padded bf16 scratch ----
    w1 = w1_ref[...]
    b1 = b1_ref[...]
    for c in range(n_comp):
        hc, wc = comp_hw[c]
        scr = scr_refs[c]
        scr[...] = jnp.zeros_like(scr)                       # zero halo
        xc = comp_refs[c][...].astype(jnp.bfloat16)          # bf16 MXU input
        y = jnp.dot(xc, w1, preferred_element_type=jnp.float32) + b1
        y = jnp.maximum(y, 0.0).astype(jnp.bfloat16)
        scr[1:hc + 1, 1:wc + 1, :] = y.reshape(hc, wc, cmid)

    # ---- Stage 2: conv2 (3x3, stride s) as 9 accumulated matmuls (f32 acc) ----
    acc = jnp.zeros((m_out, cmid), jnp.float32)
    for dy in range(3):
        p = (dy - 1) % s
        r0 = (dy - 1 - p) // s + 1
        for dx in range(3):
            q = (dx - 1) % s
            c0 = (dx - 1 - q) // s + 1
            scr = scr_refs[p * s + q]
            win = scr[r0:r0 + ho, c0:c0 + wo, :]
            acc = acc + jnp.dot(win.reshape(m_out, cmid),
                                w2_ref[dy * 3 + dx],
                                preferred_element_type=jnp.float32)
    out2 = jnp.maximum(acc + b2_ref[...], 0.0).astype(jnp.bfloat16)

    # ---- Stage 3: conv3 (1x1) + BN3 bias ----
    main = jnp.dot(out2, w3_ref[...], preferred_element_type=jnp.float32)
    main = main + b3_ref[...]

    # ---- Residual branch (x[::s, ::s] is exactly component (0, 0)) ----
    iden_in = comp_refs[0][...]
    if has_ds:
        iden = jnp.dot(iden_in.astype(jnp.bfloat16), wd_ref[...],
                       preferred_element_type=jnp.float32) + bd_ref[...]
    else:
        iden = iden_in                                       # f32, Cout_p chans

    o_ref[...] = jnp.maximum(main + iden, 0.0).astype(o_ref.dtype)


# -----------------------------------------------------------------------------
# BottleneckWithSkip forward (wrapper / glue)
# -----------------------------------------------------------------------------
def bottleneck_forward(x_nchw, params, stride):
    """Forward pass. x_nchw: (N, Cin, H, W) float32. Returns NCHW float32."""
    s = int(stride)
    # NOTE: kept for NCHW interface fidelity with the PyTorch module.
    x = jnp.transpose(x_nchw, (0, 2, 3, 1)).astype(jnp.float32)   # -> NHWC
    N, H, W, Cin = x.shape
    Cmid = params["w1"].shape[1]
    Cout = params["w3"].shape[1]
    has_ds = params.get("wd") is not None

    cmid_p = _round_up(Cmid, 128)    # lane-pad channel dims (lane-dense stores)
    cout_p = _round_up(Cout, 128)

    sc1, bb1 = _fold_bn(*params["bn1"])
    sc2, bb2 = _fold_bn(*params["bn2"])
    sc3, bb3 = _fold_bn(*params["bn3"])

    # Identity path: without a downsample conv the identity is x itself, so x's
    # channel dim must match the (lane-padded) output channel dim.
    if not has_ds:
        assert s == 1 and Cin == Cout
        x_in = _pad_dim(x, 3, cout_p)
    else:
        x_in = x
    cin_eff = x_in.shape[-1]

    # Fold BN scales into the conv weights, lane-pad, cast to bf16 (MXU native).
    w1f = _pad_dim(_pad_dim(params["w1"] * sc1[None, :], 1, cmid_p), 0, cin_eff)
    w1f = w1f.astype(jnp.bfloat16)
    b1p = _pad_dim(bb1.reshape(1, Cmid), 1, cmid_p)                    # f32
    w2f = (params["w2"] * sc2[None, None, None, :]).reshape(9, Cmid, Cmid)
    w2f = _pad_dim(_pad_dim(w2f, 2, cmid_p), 1, cmid_p).astype(jnp.bfloat16)
    b2p = _pad_dim(bb2.reshape(1, Cmid), 1, cmid_p)
    w3f = _pad_dim(_pad_dim(params["w3"] * sc3[None, :], 1, cout_p), 0, cmid_p)
    w3f = w3f.astype(jnp.bfloat16)
    b3p = _pad_dim(bb3.reshape(1, Cout), 1, cout_p)
    if has_ds:
        scd, bbd = _fold_bn(*params["bnd"])
        wdf = _pad_dim(params["wd"] * scd[None, :], 1, cout_p).astype(jnp.bfloat16)
        bdp = _pad_dim(bbd.reshape(1, Cout), 1, cout_p)

    Ho = (H - 1) // s + 1
    Wo = (W - 1) // s + 1

    # Polyphase split of x (cheap XLA strided slices, no-op for stride 1) so
    # every in-kernel 3x3 tap is a plain static slice of a VMEM scratch.
    if s == 1:
        comps = [x_in]
    else:
        comps = [x_in[:, p::s, q::s, :] for p in range(s) for q in range(s)]
    comp_hw = tuple((int(c.shape[1]), int(c.shape[2])) for c in comps)
    comps = [c.reshape(N, c.shape[1] * c.shape[2], cin_eff) for c in comps]

    in_specs, args = [], []
    for c in comps:
        m_c = c.shape[1]
        in_specs.append(pl.BlockSpec((None, m_c, cin_eff), lambda n: (n, 0, 0)))
        args.append(c)
    in_specs += [_const_block_spec(w1f.shape), _const_block_spec(b1p.shape),
                 _const_block_spec(w2f.shape), _const_block_spec(b2p.shape),
                 _const_block_spec(w3f.shape), _const_block_spec(b3p.shape)]
    args += [w1f, b1p, w2f, b2p, w3f, b3p]
    if has_ds:
        in_specs += [_const_block_spec(wdf.shape), _const_block_spec(bdp.shape)]
        args += [wdf, bdp]

    scratch_shapes = [pltpu.VMEM((hc + 2, wc + 2, cmid_p), jnp.bfloat16)
                      for (hc, wc) in comp_hw]

    kern = functools.partial(
        _fused_bottleneck_kernel, s=s, ho=Ho, wo=Wo, comp_hw=comp_hw,
        has_ds=has_ds, n_comp=len(comps))

    flops = 2 * N * (H * W * cin_eff * cmid_p
                     + Ho * Wo * 9 * cmid_p * cmid_p
                     + Ho * Wo * cmid_p * cout_p
                     + (Ho * Wo * cin_eff * cout_p if has_ds else 0))
    bytes_accessed = (x_in.size * 4 + N * Ho * Wo * cout_p * 4
                      + (w1f.size + w2f.size + w3f.size) * 2)
    cost = pl.CostEstimate(flops=int(flops), transcendentals=0,
                           bytes_accessed=int(bytes_accessed))

    try:
        vmem_cap = int(pltpu.get_tpu_info().vmem_capacity_bytes)
    except Exception:  # pragma: no cover - conservative fallback
        vmem_cap = 64 * 1024 * 1024
    vmem_limit = min((vmem_cap * 3) // 4, 100 * 1024 * 1024)

    out = pl.pallas_call(
        kern,
        out_shape=jax.ShapeDtypeStruct((N, Ho * Wo, cout_p), jnp.float32),
        grid=(N,),
        in_specs=in_specs,
        out_specs=pl.BlockSpec((None, Ho * Wo, cout_p), lambda n: (n, 0, 0)),
        scratch_shapes=scratch_shapes,
        compiler_params=pltpu.CompilerParams(
            dimension_semantics=("parallel",),
            vmem_limit_bytes=int(vmem_limit)),
        cost_estimate=cost,
    )(*args)

    out = out.reshape(N, Ho, Wo, cout_p)[..., :Cout]
    return jnp.transpose(out, (0, 3, 1, 2))                          # -> NCHW


# -----------------------------------------------------------------------------
# Pure-JAX reference (sanity check)
# -----------------------------------------------------------------------------
def reference_forward(x_nchw, params, stride):
    x = jnp.transpose(x_nchw, (0, 2, 3, 1)).astype(jnp.float32)
    dn = ("NHWC", "HWIO", "NHWC")
    prec = jax.lax.Precision.HIGHEST
    Cin = x.shape[-1]
    Cmid = params["w1"].shape[1]
    Cout = params["w3"].shape[1]

    def conv(inp, w, strides, padding):
        return jax.lax.conv_general_dilated(inp, w, strides, padding,
                                            dimension_numbers=dn,
                                            precision=prec)

    def bn(inp, p):
        sc, bi = _fold_bn(*p)
        return inp * sc + bi

    out = jax.nn.relu(bn(conv(x, params["w1"].reshape(1, 1, Cin, Cmid),
                              (1, 1), "VALID"), params["bn1"]))
    out = jax.nn.relu(bn(conv(out, params["w2"], (stride, stride),
                              ((1, 1), (1, 1))), params["bn2"]))
    out = bn(conv(out, params["w3"].reshape(1, 1, Cmid, Cout), (1, 1),
                  "VALID"), params["bn3"])
    if params.get("wd") is not None:
        iden = bn(conv(x, params["wd"].reshape(1, 1, Cin, Cout),
                       (stride, stride), "VALID"), params["bnd"])
    else:
        iden = x
    out = jax.nn.relu(out + iden)
    return jnp.transpose(out, (0, 3, 1, 2))


# -----------------------------------------------------------------------------
# Deterministic parameter construction
# -----------------------------------------------------------------------------
def make_params(key, in_channels, out_channels, stride, expansion=4):
    cmid = out_channels
    cout = out_channels * expansion
    ks = jax.random.split(key, 12)

    def bn_params(k, c):
        k1, k2, k3, k4 = jax.random.split(k, 4)
        gamma = jax.random.uniform(k1, (c,), jnp.float32, 0.5, 1.5)
        beta = 0.1 * jax.random.normal(k2, (c,), jnp.float32)
        mean = 0.1 * jax.random.normal(k3, (c,), jnp.float32)
        var = jax.random.uniform(k4, (c,), jnp.float32, 0.5, 1.5)
        return (gamma, beta, mean, var)

    params = {
        "w1": 0.2 * jax.random.normal(ks[0], (in_channels, cmid), jnp.float32),
        "bn1": bn_params(ks[1], cmid),
        "w2": 0.1 * jax.random.normal(ks[2], (3, 3, cmid, cmid), jnp.float32),
        "bn2": bn_params(ks[3], cmid),
        "w3": 0.2 * jax.random.normal(ks[4], (cmid, cout), jnp.float32),
        "bn3": bn_params(ks[5], cout),
        "wd": None,
        "bnd": None,
    }
    if stride != 1 or in_channels != cout:
        params["wd"] = 0.2 * jax.random.normal(ks[6], (in_channels, cout),
                                               jnp.float32)
        params["bnd"] = bn_params(ks[7], cout)
    return params


# -----------------------------------------------------------------------------
if __name__ == "__main__":
    key = jax.random.PRNGKey(0)
    fwd = jax.jit(bottleneck_forward, static_argnums=(2,))

    # bf16 MXU inputs / bf16 inter-stage scratch with f32 accumulation and f32
    # epilogues: compare with a generous bf16-level tolerance.
    ATOL, RTOL = 3e-2, 3e-2

    # Case 1: stride 2, downsample branch active.
    k_param, k_x, key = jax.random.split(key, 3)
    N, Cin, H, W = 2, 4, 16, 16
    out_channels, stride = 4, 2
    params = make_params(k_param, Cin, out_channels, stride)
    x = jax.random.normal(k_x, (N, Cin, H, W), jnp.float32)
    out = jax.block_until_ready(fwd(x, params, stride))
    ref = reference_forward(x, params, stride)
    assert out.shape == ref.shape, (out.shape, ref.shape)
    assert bool(jnp.allclose(out, ref, atol=ATOL, rtol=RTOL)), (
        "stride-2 max abs error: %f" % float(jnp.max(jnp.abs(out - ref))))

    # Case 2: stride 1, pure identity skip (Cin == Cout, no downsample).
    k_param2, k_x2, key = jax.random.split(key, 3)
    N2, Cin2, H2, W2 = 2, 16, 16, 16
    out_channels2, stride2 = 4, 1
    params2 = make_params(k_param2, Cin2, out_channels2, stride2)
    x2 = jax.random.normal(k_x2, (N2, Cin2, H2, W2), jnp.float32)
    out2 = jax.block_until_ready(fwd(x2, params2, stride2))
    ref2 = reference_forward(x2, params2, stride2)
    assert out2.shape == ref2.shape, (out2.shape, ref2.shape)
    assert bool(jnp.allclose(out2, ref2, atol=ATOL, rtol=RTOL)), (
        "stride-1 max abs error: %f" % float(jnp.max(jnp.abs(out2 - ref2))))

    print("KERNEL_OK")
</pallas_src>

<mosaic_0001>
module attributes {stable_mosaic.version = 11 : i64} {
  func.func @_fused_bottleneck_kernel(%arg0: i32, %arg1: memref<1x64x4xf32, #tpu.memory_space<vmem>>, %arg2: memref<1x64x4xf32, #tpu.memory_space<vmem>>, %arg3: memref<1x64x4xf32, #tpu.memory_space<vmem>>, %arg4: memref<1x64x4xf32, #tpu.memory_space<vmem>>, %arg5: memref<4x128xbf16, #tpu.memory_space<vmem>>, %arg6: memref<1x128xf32, #tpu.memory_space<vmem>>, %arg7: memref<9x128x128xbf16, #tpu.memory_space<vmem>>, %arg8: memref<1x128xf32, #tpu.memory_space<vmem>>, %arg9: memref<128x128xbf16, #tpu.memory_space<vmem>>, %arg10: memref<1x128xf32, #tpu.memory_space<vmem>>, %arg11: memref<4x128xbf16, #tpu.memory_space<vmem>>, %arg12: memref<1x128xf32, #tpu.memory_space<vmem>>, %arg13: memref<1x64x128xf32, #tpu.memory_space<vmem>>, %arg14: memref<10x10x128xbf16, #tpu.memory_space<vmem>>, %arg15: memref<10x10x128xbf16, #tpu.memory_space<vmem>>, %arg16: memref<10x10x128xbf16, #tpu.memory_space<vmem>>, %arg17: memref<10x10x128xbf16, #tpu.memory_space<vmem>>) attributes {dimension_semantics = [#tpu.dimension_semantics<parallel>], iteration_bounds = array<i64: 2>, scalar_prefetch = 0 : i64, scratch_operands = 4 : i64, tpu.core_type = #tpu.core_type<tc>, window_params = [{transform_indices = @transform_0, window_bounds = array<i64: 1, 64, 4>}, {transform_indices = @transform_1, window_bounds = array<i64: 1, 64, 4>}, {transform_indices = @transform_2, window_bounds = array<i64: 1, 64, 4>}, {transform_indices = @transform_3, window_bounds = array<i64: 1, 64, 4>}, {pipeline_mode = #tpu.pipeline_mode<synchronous>, transform_indices = @transform_4, window_bounds = array<i64: 4, 128>}, {pipeline_mode = #tpu.pipeline_mode<synchronous>, transform_indices = @transform_5, window_bounds = array<i64: 1, 128>}, {pipeline_mode = #tpu.pipeline_mode<synchronous>, transform_indices = @transform_6, window_bounds = array<i64: 9, 128, 128>}, {pipeline_mode = #tpu.pipeline_mode<synchronous>, transform_indices = @transform_7, window_bounds = array<i64: 1, 128>}, {pipeline_mode = #tpu.pipeline_mode<synchronous>, transform_indices = @transform_8, window_bounds = array<i64: 128, 128>}, {pipeline_mode = #tpu.pipeline_mode<synchronous>, transform_indices = @transform_9, window_bounds = array<i64: 1, 128>}, {pipeline_mode = #tpu.pipeline_mode<synchronous>, transform_indices = @transform_10, window_bounds = array<i64: 4, 128>}, {pipeline_mode = #tpu.pipeline_mode<synchronous>, transform_indices = @transform_11, window_bounds = array<i64: 1, 128>}, {transform_indices = @transform_12, window_bounds = array<i64: 1, 64, 128>}]} {
    %c0 = arith.constant 0 : index
    %c0_0 = arith.constant 0 : index
    %0 = vector.load %arg5[%c0, %c0_0] : memref<4x128xbf16, #tpu.memory_space<vmem>>, vector<4x128xbf16>
    %c0_1 = arith.constant 0 : index
    %c0_2 = arith.constant 0 : index
    %1 = vector.load %arg6[%c0_1, %c0_2] : memref<1x128xf32, #tpu.memory_space<vmem>>, vector<1x128xf32>
    %cst = arith.constant 0.000000e+00 : bf16
    %2 = vector.broadcast %cst : bf16 to vector<10x10x128xbf16>
    %c0_3 = arith.constant 0 : index
    %c0_4 = arith.constant 0 : index
    %c0_5 = arith.constant 0 : index
    %3 = vector.load %arg14[%c0_3, %c0_4, %c0_5] : memref<10x10x128xbf16, #tpu.memory_space<vmem>>, vector<10x10x128xbf16>
    tpu.vector_store %arg14[%c0_3, %c0_4, %c0_5], %2 {strides = array<i32>} : memref<10x10x128xbf16, #tpu.memory_space<vmem>>, vector<10x10x128xbf16>,
    %c0_6 = arith.constant 0 : index
    %c0_7 = arith.constant 0 : index
    %c0_8 = arith.constant 0 : index
    %4 = vector.load %arg1[%c0_6, %c0_7, %c0_8] : memref<1x64x4xf32, #tpu.memory_space<vmem>>, vector<1x64x4xf32>
    %5 = vector.shape_cast %4 : vector<1x64x4xf32> to vector<64x4xf32>
    %6 = arith.truncf %5 : vector<64x4xf32> to vector<64x4xbf16>
    %cst_9 = arith.constant dense<0.000000e+00> : vector<64x128xf32>
    %7 = tpu.matmul %6, %0, %cst_9 {dimension_numbers = #tpu.dot_dimension_numbers<[1], [0], [0], [1], [0, 0, 1, 1], [], []>} : vector<64x4xbf16>, vector<4x128xbf16>, vector<64x128xf32> -> vector<64x128xf32>
    %8 = vector.broadcast %1 : vector<1x128xf32> to vector<64x128xf32>
    %9 = arith.addf %7, %8 : vector<64x128xf32>
    %cst_10 = arith.constant 0.000000e+00 : f32
    %10 = vector.broadcast %cst_10 : f32 to vector<64x128xf32>
    %11 = arith.maximumf %9, %10 : vector<64x128xf32>
    %12 = arith.truncf %11 : vector<64x128xf32> to vector<64x128xbf16>
    %13 = vector.shape_cast %12 : vector<64x128xbf16> to vector<8x8x128xbf16>
    %c1 = arith.constant 1 : index
    %c1_11 = arith.constant 1 : index
    %c0_12 = arith.constant 0 : index
    %14 = vector.load %arg14[%c1, %c1_11, %c0_12] : memref<10x10x128xbf16, #tpu.memory_space<vmem>>, vector<8x8x128xbf16>
    tpu.vector_store %arg14[%c1, %c1_11, %c0_12], %13 {strides = array<i32>} : memref<10x10x128xbf16, #tpu.memory_space<vmem>>, vector<8x8x128xbf16>,
    %cst_13 = arith.constant 0.000000e+00 : bf16
    %15 = vector.broadcast %cst_13 : bf16 to vector<10x10x128xbf16>
    %c0_14 = arith.constant 0 : index
    %c0_15 = arith.constant 0 : index
    %c0_16 = arith.constant 0 : index
    %16 = vector.load %arg15[%c0_14, %c0_15, %c0_16] : memref<10x10x128xbf16, #tpu.memory_space<vmem>>, vector<10x10x128xbf16>
    tpu.vector_store %arg15[%c0_14, %c0_15, %c0_16], %15 {strides = array<i32>} : memref<10x10x128xbf16, #tpu.memory_space<vmem>>, vector<10x10x128xbf16>,
    %c0_17 = arith.constant 0 : index
    %c0_18 = arith.constant 0 : index
    %c0_19 = arith.constant 0 : index
    %17 = vector.load %arg2[%c0_17, %c0_18, %c0_19] : memref<1x64x4xf32, #tpu.memory_space<vmem>>, vector<1x64x4xf32>
    %18 = vector.shape_cast %17 : vector<1x64x4xf32> to vector<64x4xf32>
    %19 = arith.truncf %18 : vector<64x4xf32> to vector<64x4xbf16>
    %cst_20 = arith.constant dense<0.000000e+00> : vector<64x128xf32>
    %20 = tpu.matmul %19, %0, %cst_20 {dimension_numbers = #tpu.dot_dimension_numbers<[1], [0], [0], [1], [0, 0, 1, 1], [], []>} : vector<64x4xbf16>, vector<4x128xbf16>, vector<64x128xf32> -> vector<64x128xf32>
    %21 = vector.broadcast %1 : vector<1x128xf32> to vector<64x128xf32>
    %22 = arith.addf %20, %21 : vector<64x128xf32>
    %cst_21 = arith.constant 0.000000e+00 : f32
    %23 = vector.broadcast %cst_21 : f32 to vector<64x128xf32>
    %24 = arith.maximumf %22, %23 : vector<64x128xf32>
    %25 = arith.truncf %24 : vector<64x128xf32> to vector<64x128xbf16>
    %26 = vector.shape_cast %25 : vector<64x128xbf16> to vector<8x8x128xbf16>
    %c1_22 = arith.constant 1 : index
    %c1_23 = arith.constant 1 : index
    %c0_24 = arith.constant 0 : index
    %27 = vector.load %arg15[%c1_22, %c1_23, %c0_24] : memref<10x10x128xbf16, #tpu.memory_space<vmem>>, vector<8x8x128xbf16>
    tpu.vector_store %arg15[%c1_22, %c1_23, %c0_24], %26 {strides = array<i32>} : memref<10x10x128xbf16, #tpu.memory_space<vmem>>, vector<8x8x128xbf16>,
    %cst_25 = arith.constant 0.000000e+00 : bf16
    %28 = vector.broadcast %cst_25 : bf16 to vector<10x10x128xbf16>
    %c0_26 = arith.constant 0 : index
    %c0_27 = arith.constant 0 : index
    %c0_28 = arith.constant 0 : index
    %29 = vector.load %arg16[%c0_26, %c0_27, %c0_28] : memref<10x10x128xbf16, #tpu.memory_space<vmem>>, vector<10x10x128xbf16>
    tpu.vector_store %arg16[%c0_26, %c0_27, %c0_28], %28 {strides = array<i32>} : memref<10x10x128xbf16, #tpu.memory_space<vmem>>, vector<10x10x128xbf16>,
    %c0_29 = arith.constant 0 : index
    %c0_30 = arith.constant 0 : index
    %c0_31 = arith.constant 0 : index
    %30 = vector.load %arg3[%c0_29, %c0_30, %c0_31] : memref<1x64x4xf32, #tpu.memory_space<vmem>>, vector<1x64x4xf32>
    %31 = vector.shape_cast %30 : vector<1x64x4xf32> to vector<64x4xf32>
    %32 = arith.truncf %31 : vector<64x4xf32> to vector<64x4xbf16>
    %cst_32 = arith.constant dense<0.000000e+00> : vector<64x128xf32>
    %33 = tpu.matmul %32, %0, %cst_32 {dimension_numbers = #tpu.dot_dimension_numbers<[1], [0], [0], [1], [0, 0, 1, 1], [], []>} : vector<64x4xbf16>, vector<4x128xbf16>, vector<64x128xf32> -> vector<64x128xf32>
    %34 = vector.broadcast %1 : vector<1x128xf32> to vector<64x128xf32>
    %35 = arith.addf %33, %34 : vector<64x128xf32>
    %cst_33 = arith.constant 0.000000e+00 : f32
    %36 = vector.broadcast %cst_33 : f32 to vector<64x128xf32>
    %37 = arith.maximumf %35, %36 : vector<64x128xf32>
    %38 = arith.truncf %37 : vector<64x128xf32> to vector<64x128xbf16>
    %39 = vector.shape_cast %38 : vector<64x128xbf16> to vector<8x8x128xbf16>
    %c1_34 = arith.constant 1 : index
    %c1_35 = arith.constant 1 : index
    %c0_36 = arith.constant 0 : index
    %40 = vector.load %arg16[%c1_34, %c1_35, %c0_36] : memref<10x10x128xbf16, #tpu.memory_space<vmem>>, vector<8x8x128xbf16>
    tpu.vector_store %arg16[%c1_34, %c1_35, %c0_36], %39 {strides = array<i32>} : memref<10x10x128xbf16, #tpu.memory_space<vmem>>, vector<8x8x128xbf16>,
    %cst_37 = arith.constant 0.000000e+00 : bf16
    %41 = vector.broadcast %cst_37 : bf16 to vector<10x10x128xbf16>
    %c0_38 = arith.constant 0 : index
    %c0_39 = arith.constant 0 : index
    %c0_40 = arith.constant 0 : index
    %42 = vector.load %arg17[%c0_38, %c0_39, %c0_40] : memref<10x10x128xbf16, #tpu.memory_space<vmem>>, vector<10x10x128xbf16>
    tpu.vector_store %arg17[%c0_38, %c0_39, %c0_40], %41 {strides = array<i32>} : memref<10x10x128xbf16, #tpu.memory_space<vmem>>, vector<10x10x128xbf16>,
    %c0_41 = arith.constant 0 : index
    %c0_42 = arith.constant 0 : index
    %c0_43 = arith.constant 0 : index
    %43 = vector.load %arg4[%c0_41, %c0_42, %c0_43] : memref<1x64x4xf32, #tpu.memory_space<vmem>>, vector<1x64x4xf32>
    %44 = vector.shape_cast %43 : vector<1x64x4xf32> to vector<64x4xf32>
    %45 = arith.truncf %44 : vector<64x4xf32> to vector<64x4xbf16>
    %cst_44 = arith.constant dense<0.000000e+00> : vector<64x128xf32>
    %46 = tpu.matmul %45, %0, %cst_44 {dimension_numbers = #tpu.dot_dimension_numbers<[1], [0], [0], [1], [0, 0, 1, 1], [], []>} : vector<64x4xbf16>, vector<4x128xbf16>, vector<64x128xf32> -> vector<64x128xf32>
    %47 = vector.broadcast %1 : vector<1x128xf32> to vector<64x128xf32>
    %48 = arith.addf %46, %47 : vector<64x128xf32>
    %cst_45 = arith.constant 0.000000e+00 : f32
    %49 = vector.broadcast %cst_45 : f32 to vector<64x128xf32>
    %50 = arith.maximumf %48, %49 : vector<64x128xf32>
    %51 = arith.truncf %50 : vector<64x128xf32> to vector<64x128xbf16>
    %52 = vector.shape_cast %51 : vector<64x128xbf16> to vector<8x8x128xbf16>
    %c1_46 = arith.constant 1 : index
    %c1_47 = arith.constant 1 : index
    %c0_48 = arith.constant 0 : index
    %53 = vector.load %arg17[%c1_46, %c1_47, %c0_48] : memref<10x10x128xbf16, #tpu.memory_space<vmem>>, vector<8x8x128xbf16>
    tpu.vector_store %arg17[%c1_46, %c1_47, %c0_48], %52 {strides = array<i32>} : memref<10x10x128xbf16, #tpu.memory_space<vmem>>, vector<8x8x128xbf16>,
    %cst_49 = arith.constant 0.000000e+00 : f32
    %54 = vector.broadcast %cst_49 : f32 to vector<64x128xf32>
    %c0_50 = arith.constant 0 : index
    %c0_51 = arith.constant 0 : index
    %c0_52 = arith.constant 0 : index
    %55 = vector.load %arg17[%c0_50, %c0_51, %c0_52] : memref<10x10x128xbf16, #tpu.memory_space<vmem>>, vector<8x8x128xbf16>
    %56 = vector.shape_cast %55 : vector<8x8x128xbf16> to vector<64x128xbf16>
    %c0_53 = arith.constant 0 : index
    %c0_54 = arith.constant 0 : index
    %c0_55 = arith.constant 0 : index
    %57 = vector.load %arg7[%c0_53, %c0_54, %c0_55] : memref<9x128x128xbf16, #tpu.memory_space<vmem>>, vector<1x128x128xbf16>
    %58 = vector.shape_cast %57 : vector<1x128x128xbf16> to vector<128x128xbf16>
    %cst_56 = arith.constant dense<0.000000e+00> : vector<64x128xf32>
    %59 = tpu.matmul %56, %58, %cst_56 {dimension_numbers = #tpu.dot_dimension_numbers<[1], [0], [0], [1], [0, 0, 1, 1], [], []>} : vector<64x128xbf16>, vector<128x128xbf16>, vector<64x128xf32> -> vector<64x128xf32>
    %60 = arith.addf %54, %59 : vector<64x128xf32>
    %c0_57 = arith.constant 0 : index
    %c1_58 = arith.constant 1 : index
    %c0_59 = arith.constant 0 : index
    %61 = vector.load %arg16[%c0_57, %c1_58, %c0_59] : memref<10x10x128xbf16, #tpu.memory_space<vmem>>, vector<8x8x128xbf16>
    %62 = vector.shape_cast %61 : vector<8x8x128xbf16> to vector<64x128xbf16>
    %c1_60 = arith.constant 1 : index
    %c0_61 = arith.constant 0 : index
    %c0_62 = arith.constant 0 : index
    %63 = vector.load %arg7[%c1_60, %c0_61, %c0_62] : memref<9x128x128xbf16, #tpu.memory_space<vmem>>, vector<1x128x128xbf16>
    %64 = vector.shape_cast %63 : vector<1x128x128xbf16> to vector<128x128xbf16>
    %cst_63 = arith.constant dense<0.000000e+00> : vector<64x128xf32>
    %65 = tpu.matmul %62, %64, %cst_63 {dimension_numbers = #tpu.dot_dimension_numbers<[1], [0], [0], [1], [0, 0, 1, 1], [], []>} : vector<64x128xbf16>, vector<128x128xbf16>, vector<64x128xf32> -> vector<64x128xf32>
    %66 = arith.addf %60, %65 : vector<64x128xf32>
    %c0_64 = arith.constant 0 : index
    %c1_65 = arith.constant 1 : index
    %c0_66 = arith.constant 0 : index
    %67 = vector.load %arg17[%c0_64, %c1_65, %c0_66] : memref<10x10x128xbf16, #tpu.memory_space<vmem>>, vector<8x8x128xbf16>
    %68 = vector.shape_cast %67 : vector<8x8x128xbf16> to vector<64x128xbf16>
    %c2 = arith.constant 2 : index
    %c0_67 = arith.constant 0 : index
    %c0_68 = arith.constant 0 : index
    %69 = vector.load %arg7[%c2, %c0_67, %c0_68] : memref<9x128x128xbf16, #tpu.memory_space<vmem>>, vector<1x128x128xbf16>
    %70 = vector.shape_cast %69 : vector<1x128x128xbf16> to vector<128x128xbf16>
    %cst_69 = arith.constant dense<0.000000e+00> : vector<64x128xf32>
    %71 = tpu.matmul %68, %70, %cst_69 {dimension_numbers = #tpu.dot_dimension_numbers<[1], [0], [0], [1], [0, 0, 1, 1], [], []>} : vector<64x128xbf16>, vector<128x128xbf16>, vector<64x128xf32> -> vector<64x128xf32>
    %72 = arith.addf %66, %71 : vector<64x128xf32>
    %c1_70 = arith.constant 1 : index
    %c0_71 = arith.constant 0 : index
    %c0_72 = arith.constant 0 : index
    %73 = vector.load %arg15[%c1_70, %c0_71, %c0_72] : memref<10x10x128xbf16, #tpu.memory_space<vmem>>, vector<8x8x128xbf16>
    %74 = vector.shape_cast %73 : vector<8x8x128xbf16> to vector<64x128xbf16>
    %c3 = arith.constant 3 : index
    %c0_73 = arith.constant 0 : index
    %c0_74 = arith.constant 0 : index
    %75 = vector.load %arg7[%c3, %c0_73, %c0_74] : memref<9x128x128xbf16, #tpu.memory_space<vmem>>, vector<1x128x128xbf16>
    %76 = vector.shape_cast %75 : vector<1x128x128xbf16> to vector<128x128xbf16>
    %cst_75 = arith.constant dense<0.000000e+00> : vector<64x128xf32>
    %77 = tpu.matmul %74, %76, %cst_75 {dimension_numbers = #tpu.dot_dimension_numbers<[1], [0], [0], [1], [0, 0, 1, 1], [], []>} : vector<64x128xbf16>, vector<128x128xbf16>, vector<64x128xf32> -> vector<64x128xf32>
    %78 = arith.addf %72, %77 : vector<64x128xf32>
    %c1_76 = arith.constant 1 : index
    %c1_77 = arith.constant 1 : index
    %c0_78 = arith.constant 0 : index
    %79 = vector.load %arg14[%c1_76, %c1_77, %c0_78] : memref<10x10x128xbf16, #tpu.memory_space<vmem>>, vector<8x8x128xbf16>
    %80 = vector.shape_cast %79 : vector<8x8x128xbf16> to vector<64x128xbf16>
    %c4 = arith.constant 4 : index
    %c0_79 = arith.constant 0 : index
    %c0_80 = arith.constant 0 : index
    %81 = vector.load %arg7[%c4, %c0_79, %c0_80] : memref<9x128x128xbf16, #tpu.memory_space<vmem>>, vector<1x128x128xbf16>
    %82 = vector.shape_cast %81 : vector<1x128x128xbf16> to vector<128x128xbf16>
    %cst_81 = arith.constant dense<0.000000e+00> : vector<64x128xf32>
    %83 = tpu.matmul %80, %82, %cst_81 {dimension_numbers = #tpu.dot_dimension_numbers<[1], [0], [0], [1], [0, 0, 1, 1], [], []>} : vector<64x128xbf16>, vector<128x128xbf16>, vector<64x128xf32> -> vector<64x128xf32>
    %84 = arith.addf %78, %83 : vector<64x128xf32>
    %c1_82 = arith.constant 1 : index
    %c1_83 = arith.constant 1 : index
    %c0_84 = arith.constant 0 : index
    %85 = vector.load %arg15[%c1_82, %c1_83, %c0_84] : memref<10x10x128xbf16, #tpu.memory_space<vmem>>, vector<8x8x128xbf16>
    %86 = vector.shape_cast %85 : vector<8x8x128xbf16> to vector<64x128xbf16>
    %c5 = arith.constant 5 : index
    %c0_85 = arith.constant 0 : index
    %c0_86 = arith.constant 0 : index
    %87 = vector.load %arg7[%c5, %c0_85, %c0_86] : memref<9x128x128xbf16, #tpu.memory_space<vmem>>, vector<1x128x128xbf16>
    %88 = vector.shape_cast %87 : vector<1x128x128xbf16> to vector<128x128xbf16>
    %cst_87 = arith.constant dense<0.000000e+00> : vector<64x128xf32>
    %89 = tpu.matmul %86, %88, %cst_87 {dimension_numbers = #tpu.dot_dimension_numbers<[1], [0], [0], [1], [0, 0, 1, 1], [], []>} : vector<64x128xbf16>, vector<128x128xbf16>, vector<64x128xf32> -> vector<64x128xf32>
    %90 = arith.addf %84, %89 : vector<64x128xf32>
    %c1_88 = arith.constant 1 : index
    %c0_89 = arith.constant 0 : index
    %c0_90 = arith.constant 0 : index
    %91 = vector.load %arg17[%c1_88, %c0_89, %c0_90] : memref<10x10x128xbf16, #tpu.memory_space<vmem>>, vector<8x8x128xbf16>
    %92 = vector.shape_cast %91 : vector<8x8x128xbf16> to vector<64x128xbf16>
    %c6 = arith.constant 6 : index
    %c0_91 = arith.constant 0 : index
    %c0_92 = arith.constant 0 : index
    %93 = vector.load %arg7[%c6, %c0_91, %c0_92] : memref<9x128x128xbf16, #tpu.memory_space<vmem>>, vector<1x128x128xbf16>
    %94 = vector.shape_cast %93 : vector<1x128x128xbf16> to vector<128x128xbf16>
    %cst_93 = arith.constant dense<0.000000e+00> : vector<64x128xf32>
    %95 = tpu.matmul %92, %94, %cst_93 {dimension_numbers = #tpu.dot_dimension_numbers<[1], [0], [0], [1], [0, 0, 1, 1], [], []>} : vector<64x128xbf16>, vector<128x128xbf16>, vector<64x128xf32> -> vector<64x128xf32>
    %96 = arith.addf %90, %95 : vector<64x128xf32>
    %c1_94 = arith.constant 1 : index
    %c1_95 = arith.constant 1 : index
    %c0_96 = arith.constant 0 : index
    %97 = vector.load %arg16[%c1_94, %c1_95, %c0_96] : memref<10x10x128xbf16, #tpu.memory_space<vmem>>, vector<8x8x128xbf16>
    %98 = vector.shape_cast %97 : vector<8x8x128xbf16> to vector<64x128xbf16>
    %c7 = arith.constant 7 : index
    %c0_97 = arith.constant 0 : index
    %c0_98 = arith.constant 0 : index
    %99 = vector.load %arg7[%c7, %c0_97, %c0_98] : memref<9x128x128xbf16, #tpu.memory_space<vmem>>, vector<1x128x128xbf16>
    %100 = vector.shape_cast %99 : vector<1x128x128xbf16> to vector<128x128xbf16>
    %cst_99 = arith.constant dense<0.000000e+00> : vector<64x128xf32>
    %101 = tpu.matmul %98, %100, %cst_99 {dimension_numbers = #tpu.dot_dimension_numbers<[1], [0], [0], [1], [0, 0, 1, 1], [], []>} : vector<64x128xbf16>, vector<128x128xbf16>, vector<64x128xf32> -> vector<64x128xf32>
    %102 = arith.addf %96, %101 : vector<64x128xf32>
    %c1_100 = arith.constant 1 : index
    %c1_101 = arith.constant 1 : index
    %c0_102 = arith.constant 0 : index
    %103 = vector.load %arg17[%c1_100, %c1_101, %c0_102] : memref<10x10x128xbf16, #tpu.memory_space<vmem>>, vector<8x8x128xbf16>
    %104 = vector.shape_cast %103 : vector<8x8x128xbf16> to vector<64x128xbf16>
    %c8 = arith.constant 8 : index
    %c0_103 = arith.constant 0 : index
    %c0_104 = arith.constant 0 : index
    %105 = vector.load %arg7[%c8, %c0_103, %c0_104] : memref<9x128x128xbf16, #tpu.memory_space<vmem>>, vector<1x128x128xbf16>
    %106 = vector.shape_cast %105 : vector<1x128x128xbf16> to vector<128x128xbf16>
    %cst_105 = arith.constant dense<0.000000e+00> : vector<64x128xf32>
    %107 = tpu.matmul %104, %106, %cst_105 {dimension_numbers = #tpu.dot_dimension_numbers<[1], [0], [0], [1], [0, 0, 1, 1], [], []>} : vector<64x128xbf16>, vector<128x128xbf16>, vector<64x128xf32> -> vector<64x128xf32>
    %108 = arith.addf %102, %107 : vector<64x128xf32>
    %c0_106 = arith.constant 0 : index
    %c0_107 = arith.constant 0 : index
    %109 = vector.load %arg8[%c0_106, %c0_107] : memref<1x128xf32, #tpu.memory_space<vmem>>, vector<1x128xf32>
    %110 = vector.broadcast %109 : vector<1x128xf32> to vector<64x128xf32>
    %111 = arith.addf %108, %110 : vector<64x128xf32>
    %cst_108 = arith.constant 0.000000e+00 : f32
    %112 = vector.broadcast %cst_108 : f32 to vector<64x128xf32>
    %113 = arith.maximumf %111, %112 : vector<64x128xf32>
    %114 = arith.truncf %113 : vector<64x128xf32> to vector<64x128xbf16>
    %c0_109 = arith.constant 0 : index
    %c0_110 = arith.constant 0 : index
    %115 = vector.load %arg9[%c0_109, %c0_110] : memref<128x128xbf16, #tpu.memory_space<vmem>>, vector<128x128xbf16>
    %cst_111 = arith.constant dense<0.000000e+00> : vector<64x128xf32>
    %116 = tpu.matmul %114, %115, %cst_111 {dimension_numbers = #tpu.dot_dimension_numbers<[1], [0], [0], [1], [0, 0, 1, 1], [], []>} : vector<64x128xbf16>, vector<128x128xbf16>, vector<64x128xf32> -> vector<64x128xf32>
    %c0_112 = arith.constant 0 : index
    %c0_113 = arith.constant 0 : index
    %117 = vector.load %arg10[%c0_112, %c0_113] : memref<1x128xf32, #tpu.memory_space<vmem>>, vector<1x128xf32>
    %118 = vector.broadcast %117 : vector<1x128xf32> to vector<64x128xf32>
    %119 = arith.addf %116, %118 : vector<64x128xf32>
    %c0_114 = arith.constant 0 : index
    %c0_115 = arith.constant 0 : index
    %c0_116 = arith.constant 0 : index
    %120 = vector.load %arg1[%c0_114, %c0_115, %c0_116] : memref<1x64x4xf32, #tpu.memory_space<vmem>>, vector<1x64x4xf32>
    %121 = vector.shape_cast %120 : vector<1x64x4xf32> to vector<64x4xf32>
    %122 = arith.truncf %121 : vector<64x4xf32> to vector<64x4xbf16>
    %c0_117 = arith.constant 0 : index
    %c0_118 = arith.constant 0 : index
    %123 = vector.load %arg11[%c0_117, %c0_118] : memref<4x128xbf16, #tpu.memory_space<vmem>>, vector<4x128xbf16>
    %cst_119 = arith.constant dense<0.000000e+00> : vector<64x128xf32>
    %124 = tpu.matmul %122, %123, %cst_119 {dimension_numbers = #tpu.dot_dimension_numbers<[1], [0], [0], [1], [0, 0, 1, 1], [], []>} : vector<64x4xbf16>, vector<4x128xbf16>, vector<64x128xf32> -> vector<64x128xf32>
    %c0_120 = arith.constant 0 : index
    %c0_121 = arith.constant 0 : index
    %125 = vector.load %arg12[%c0_120, %c0_121] : memref<1x128xf32, #tpu.memory_space<vmem>>, vector<1x128xf32>
    %126 = vector.broadcast %125 : vector<1x128xf32> to vector<64x128xf32>
    %127 = arith.addf %124, %126 : vector<64x128xf32>
    %128 = arith.addf %119, %127 : vector<64x128xf32>
    %cst_122 = arith.constant 0.000000e+00 : f32
    %129 = vector.broadcast %cst_122 : f32 to vector<64x128xf32>
    %130 = arith.maximumf %128, %129 : vector<64x128xf32>
    %c0_123 = arith.constant 0 : index
    %c0_124 = arith.constant 0 : index
    %c0_125 = arith.constant 0 : index
    %131 = vector.load %arg13[%c0_123, %c0_124, %c0_125] : memref<1x64x128xf32, #tpu.memory_space<vmem>>, vector<1x64x128xf32>
    %132 = vector.shape_cast %131 : vector<1x64x128xf32> to vector<64x128xf32>
    %133 = vector.shape_cast %130 : vector<64x128xf32> to vector<1x64x128xf32>
    tpu.vector_store %arg13[%c0_123, %c0_124, %c0_125], %133 {strides = array<i32>} : memref<1x64x128xf32, #tpu.memory_space<vmem>>, vector<1x64x128xf32>,
    return
  }
  func.func @transform_0(%arg0: i32) -> (i32, i32, i32) {
    %c0_i32 = arith.constant 0 : i32
    %c0_i32_0 = arith.constant 0 : i32
    %c0_i32_1 = arith.constant 0 : i32
    return %arg0, %c0_i32, %c0_i32_0 : i32, i32, i32
  }
  func.func @transform_1(%arg0: i32) -> (i32, i32, i32) {
    %c0_i32 = arith.constant 0 : i32
    %c0_i32_0 = arith.constant 0 : i32
    %c0_i32_1 = arith.constant 0 : i32
    return %arg0, %c0_i32, %c0_i32_0 : i32, i32, i32
  }
  func.func @transform_2(%arg0: i32) -> (i32, i32, i32) {
    %c0_i32 = arith.constant 0 : i32
    %c0_i32_0 = arith.constant 0 : i32
    %c0_i32_1 = arith.constant 0 : i32
    return %arg0, %c0_i32, %c0_i32_0 : i32, i32, i32
  }
  func.func @transform_3(%arg0: i32) -> (i32, i32, i32) {
    %c0_i32 = arith.constant 0 : i32
    %c0_i32_0 = arith.constant 0 : i32
    %c0_i32_1 = arith.constant 0 : i32
    return %arg0, %c0_i32, %c0_i32_0 : i32, i32, i32
  }
  func.func @transform_4(%arg0: i32) -> (i32, i32) {
    %c0_i32 = arith.constant 0 : i32
    %c0_i32_0 = arith.constant 0 : i32
    %c0_i32_1 = arith.constant 0 : i32
    return %c0_i32, %c0_i32_0 : i32, i32
  }
  func.func @transform_5(%arg0: i32) -> (i32, i32) {
    %c0_i32 = arith.constant 0 : i32
    %c0_i32_0 = arith.constant 0 : i32
    %c0_i32_1 = arith.constant 0 : i32
    return %c0_i32, %c0_i32_0 : i32, i32
  }
  func.func @transform_6(%arg0: i32) -> (i32, i32, i32) {
    %c0_i32 = arith.constant 0 : i32
    %c0_i32_0 = arith.constant 0 : i32
    %c0_i32_1 = arith.constant 0 : i32
    %c0_i32_2 = arith.constant 0 : i32
    return %c0_i32, %c0_i32_0, %c0_i32_1 : i32, i32, i32
  }
  func.func @transform_7(%arg0: i32) -> (i32, i32) {
    %c0_i32 = arith.constant 0 : i32
    %c0_i32_0 = arith.constant 0 : i32
    %c0_i32_1 = arith.constant 0 : i32
    return %c0_i32, %c0_i32_0 : i32, i32
  }
  func.func @transform_8(%arg0: i32) -> (i32, i32) {
    %c0_i32 = arith.constant 0 : i32
    %c0_i32_0 = arith.constant 0 : i32
    %c0_i32_1 = arith.constant 0 : i32
    return %c0_i32, %c0_i32_0 : i32, i32
  }
  func.func @transform_9(%arg0: i32) -> (i32, i32) {
    %c0_i32 = arith.constant 0 : i32
    %c0_i32_0 = arith.constant 0 : i32
    %c0_i32_1 = arith.constant 0 : i32
    return %c0_i32, %c0_i32_0 : i32, i32
  }
  func.func @transform_10(%arg0: i32) -> (i32, i32) {
    %c0_i32 = arith.constant 0 : i32
    %c0_i32_0 = arith.constant 0 : i32
    %c0_i32_1 = arith.constant 0 : i32
    return %c0_i32, %c0_i32_0 : i32, i32
  }
  func.func @transform_11(%arg0: i32) -> (i32, i32) {
    %c0_i32 = arith.constant 0 : i32
    %c0_i32_0 = arith.constant 0 : i32
    %c0_i32_1 = arith.constant 0 : i32
    return %c0_i32, %c0_i32_0 : i32, i32
  }
  func.func @transform_12(%arg0: i32) -> (i32, i32, i32) {
    %c0_i32 = arith.constant 0 : i32
    %c0_i32_0 = arith.constant 0 : i32
    %c0_i32_1 = arith.constant 0 : i32
    return %arg0, %c0_i32, %c0_i32_0 : i32, i32, i32
  }
}

</mosaic_0001>

<llo_original>
// kernel: bottleneck_forward.1
$region0: #{bottleneck_forward.1}
  #allocation0 [shape = 'u32[]', space=smem, size = 0x4, offset = 0x4, fixed_abs, tag = 'smem constant byte address 0x4 - core index']
  #allocation1 [shape = 'u32[144,128]{1,0:T(1,128)}', space=vmem, size = 0x12000, scoped, tag = 'internal scratch']
  #allocation2 [shape = 'bf16[10,10,128]{2,1,0:T(8,128)(2,1)}', space=vmem, size = 0xa000, scoped, tag = 'scratch operand']
  #allocation3 [shape = 'bf16[10,10,128]{2,1,0:T(8,128)(2,1)}', space=vmem, size = 0xa000, scoped, tag = 'scratch operand']
  #allocation4 [shape = 'bf16[10,10,128]{2,1,0:T(8,128)(2,1)}', space=vmem, size = 0xa000, scoped, tag = 'scratch operand']
  #allocation5 [shape = 'bf16[10,10,128]{2,1,0:T(8,128)(2,1)}', space=vmem, size = 0xa000, scoped, tag = 'scratch operand']
  %s0 = inlined_call_operand.vmem [shape: f32[2,64,4], index: 0, kind: input, shape index: {}]
  %s1 = inlined_call_operand.vmem [shape: f32[2,64,4], index: 1, kind: input, shape index: {}]
  %s2 = inlined_call_operand.vmem [shape: f32[2,64,4], index: 2, kind: input, shape index: {}]
  %s3 = inlined_call_operand.vmem [shape: f32[2,64,4], index: 3, kind: input, shape index: {}]
  %s4 = inlined_call_operand.vmem [shape: bf16[4,128], index: 4, kind: input, shape index: {}]
  %s5 = inlined_call_operand.vmem [shape: f32[1,128], index: 5, kind: input, shape index: {}]
  %s6 = inlined_call_operand.vmem [shape: bf16[9,128,128], index: 6, kind: input, shape index: {}]
  %s7 = inlined_call_operand.vmem [shape: f32[1,128], index: 7, kind: input, shape index: {}]
  %s8 = inlined_call_operand.vmem [shape: bf16[128,128], index: 8, kind: input, shape index: {}]
  %s9 = inlined_call_operand.vmem [shape: f32[1,128], index: 9, kind: input, shape index: {}]
  %s10 = inlined_call_operand.vmem [shape: bf16[4,128], index: 10, kind: input, shape index: {}]
  %s11 = inlined_call_operand.vmem [shape: f32[1,128], index: 11, kind: input, shape index: {}]
  %s12 = inlined_call_operand.vmem [shape: f32[2,64,128], index: 12, kind: output, shape index: {}]
  %s13 = sld [smem:[#allocation0]]
  $region81: #{bottleneck_forward.1} parent=0
    _
  %s15 = ssub.s32 1, %s13
  %s16 = scalar_select 0, %s15, %s13
  loop: start=0, step=1, limit=4
  $region2: #{bottleneck_forward.1} parent=0 // loop_pre_header
    _
  $region3: #{bottleneck_forward.1} parent=0 // loop_header
    %s18 = sphi 0, %s22
    %p19 = scmp.ge.s32.totalorder %s18, 4
    %s28 = sphi 0, %s30
    %s31 = sphi 0, %s28
    %s32 = sphi 0, %s31
    %s48 = sphi 0, %s32
    %s54 = sphi 0, %s56
    %s57 = sphi 0, %s54
    %s58 = sphi 0, %s57
    %s74 = sphi 0, %s58
    %s80 = sphi 0, %s82
    %s83 = sphi 0, %s80
    %s84 = sphi 0, %s83
    %s100 = sphi 0, %s84
    %s106 = sphi 0, %s108
    %s109 = sphi 0, %s106
    %s110 = sphi 0, %s109
    %s126 = sphi 0, %s110
    %s130 = sphi 0, %s130
    %s132 = sphi 0, %s130
    %s133 = sphi 0, %s132
    %s147 = sphi 0, %s133
    %s151 = sphi 0, %s151
    %s153 = sphi 0, %s151
    %s154 = sphi 0, %s153
    %s168 = sphi 0, %s154
    %s172 = sphi 0, %s172
    %s174 = sphi 0, %s172
    %s175 = sphi 0, %s174
    %s189 = sphi 0, %s175
    %s193 = sphi 0, %s193
    %s195 = sphi 0, %s193
    %s196 = sphi 0, %s195
    %s210 = sphi 0, %s196
    %s214 = sphi 0, %s214
    %s216 = sphi 0, %s214
    %s217 = sphi 0, %s216
    %s231 = sphi 0, %s217
    %s235 = sphi 0, %s235
    %s237 = sphi 0, %s235
    %s238 = sphi 0, %s237
    %s252 = sphi 0, %s238
    %s256 = sphi 0, %s256
    %s258 = sphi 0, %s256
    %s259 = sphi 0, %s258
    %s273 = sphi 0, %s259
    %s277 = sphi 0, %s277
    %s279 = sphi 0, %s277
    %s280 = sphi 0, %s279
    %s294 = sphi 0, %s280
    %s300 = sphi 0, %s302
    %s303 = sphi 0, %s300
    %s304 = sphi 0, %s303
    %s320 = sphi 0, %s304
  $region4: #{bottleneck_forward.1} parent=0 // loop_header_branch
    %21 = sbr.rel (%p19) target = $region8
  $region5: #{bottleneck_forward.1} parent=0 // loop_body
    %s23 = ssub.s32 %s18, 1
    %s24 = ssub.s32 %s18, 2
    %s25 = sadd.s32 %s18, 1
    %s26 = ssub.s32 %s18, %s25
    %p27 = scmp.eq.s32.totalorder %s26, 0
    %s29 = sadd.s32 %s28, 1
    %s30 = scalar_select %p27, %s28, %s29
    %p33 = pneg %p27
    %p34 = scmp.eq.s32.totalorder %s18, 1
    %p35 = por %p33, %p34
    %p36 = scmp.ne.s32.totalorder %s28, %s31
    %p37 = scmp.eq.s32.totalorder %s18, 0
    %p38 = por %p36, %p37
    %p39 = scmp.ne.s32.totalorder %s28, %s31
    %p40 = scmp.eq.s32.totalorder %s23, 1
    %p41 = por %p39, %p40
    %p42 = scmp.ne.s32.totalorder %s31, %s32
    %p43 = scmp.eq.s32.totalorder %s23, 0
    %p44 = por %p42, %p43
    %p45 = scmp.ne.s32.totalorder %s31, %s32
    %p46 = scmp.eq.s32.totalorder %s24, 1
    %p47 = por %p45, %p46
    %p49 = scmp.ne.s32.totalorder %s32, %s48
    %p50 = scmp.eq.s32.totalorder %s24, 0
    %p51 = por %p49, %p50
    %s52 = ssub.s32 %s18, %s25
    %p53 = scmp.eq.s32.totalorder %s52, 0
    %s55 = sadd.s32 %s54, 1
    %s56 = scalar_select %p53, %s54, %s55
    %p59 = pneg %p53
    %p60 = scmp.eq.s32.totalorder %s18, 1
    %p61 = por %p59, %p60
    %p62 = scmp.ne.s32.totalorder %s54, %s57
    %p63 = scmp.eq.s32.totalorder %s18, 0
    %p64 = por %p62, %p63
    %p65 = scmp.ne.s32.totalorder %s54, %s57
    %p66 = scmp.eq.s32.totalorder %s23, 1
    %p67 = por %p65, %p66
    %p68 = scmp.ne.s32.totalorder %s57, %s58
    %p69 = scmp.eq.s32.totalorder %s23, 0
    %p70 = por %p68, %p69
    %p71 = scmp.ne.s32.totalorder %s57, %s58
    %p72 = scmp.eq.s32.totalorder %s24, 1
    %p73 = por %p71, %p72
    %p75 = scmp.ne.s32.totalorder %s58, %s74
    %p76 = scmp.eq.s32.totalorder %s24, 0
    %p77 = por %p75, %p76
    %s78 = ssub.s32 %s18, %s25
    %p79 = scmp.eq.s32.totalorder %s78, 0
    %s81 = sadd.s32 %s80, 1
    %s82 = scalar_select %p79, %s80, %s81
    %p85 = pneg %p79
    %p86 = scmp.eq.s32.totalorder %s18, 1
    %p87 = por %p85, %p86
    %p88 = scmp.ne.s32.totalorder %s80, %s83
    %p89 = scmp.eq.s32.totalorder %s18, 0
    %p90 = por %p88, %p89
    %p91 = scmp.ne.s32.totalorder %s80, %s83
    %p92 = scmp.eq.s32.totalorder %s23, 1
    %p93 = por %p91, %p92
    %p94 = scmp.ne.s32.totalorder %s83, %s84
    %p95 = scmp.eq.s32.totalorder %s23, 0
    %p96 = por %p94, %p95
    %p97 = scmp.ne.s32.totalorder %s83, %s84
    %p98 = scmp.eq.s32.totalorder %s24, 1
    %p99 = por %p97, %p98
    %p101 = scmp.ne.s32.totalorder %s84, %s100
    %p102 = scmp.eq.s32.totalorder %s24, 0
    %p103 = por %p101, %p102
    %s104 = ssub.s32 %s18, %s25
    %p105 = scmp.eq.s32.totalorder %s104, 0
    %s107 = sadd.s32 %s106, 1
    %s108 = scalar_select %p105, %s106, %s107
    %p111 = pneg %p105
    %p112 = scmp.eq.s32.totalorder %s18, 1
    %p113 = por %p111, %p112
    %p114 = scmp.ne.s32.totalorder %s106, %s109
    %p115 = scmp.eq.s32.totalorder %s18, 0
    %p116 = por %p114, %p115
    %p117 = scmp.ne.s32.totalorder %s106, %s109
    %p118 = scmp.eq.s32.totalorder %s23, 1
    %p119 = por %p117, %p118
    %p120 = scmp.ne.s32.totalorder %s109, %s110
    %p121 = scmp.eq.s32.totalorder %s23, 0
    %p122 = por %p120, %p121
    %p123 = scmp.ne.s32.totalorder %s109, %s110
    %p124 = scmp.eq.s32.totalorder %s24, 1
    %p125 = por %p123, %p124
    %p127 = scmp.ne.s32.totalorder %s110, %s126
    %p128 = scmp.eq.s32.totalorder %s24, 0
    %p129 = por %p127, %p128
    %s131 = sadd.s32 %s130, 1
    %p134 = scmp.eq.s32.totalorder %s18, 1
    %p135 = scmp.ne.s32.totalorder %s130, %s132
    %p136 = scmp.eq.s32.totalorder %s18, 0
    %p137 = por %p135, %p136
    %p138 = scmp.ne.s32.totalorder %s130, %s132
    %p139 = scmp.eq.s32.totalorder %s23, 1
    %p140 = por %p138, %p139
    %p141 = scmp.ne.s32.totalorder %s132, %s133
    %p142 = scmp.eq.s32.totalorder %s23, 0
    %p143 = por %p141, %p142
    %p144 = scmp.ne.s32.totalorder %s132, %s133
    %p145 = scmp.eq.s32.totalorder %s24, 1
    %p146 = por %p144, %p145
    %p148 = scmp.ne.s32.totalorder %s133, %s147
    %p149 = scmp.eq.s32.totalorder %s24, 0
    %p150 = por %p148, %p149
    %s152 = sadd.s32 %s151, 1
    %p155 = scmp.eq.s32.totalorder %s18, 1
    %p156 = scmp.ne.s32.totalorder %s151, %s153
    %p157 = scmp.eq.s32.totalorder %s18, 0
    %p158 = por %p156, %p157
    %p159 = scmp.ne.s32.totalorder %s151, %s153
    %p160 = scmp.eq.s32.totalorder %s23, 1
    %p161 = por %p159, %p160
    %p162 = scmp.ne.s32.totalorder %s153, %s154
    %p163 = scmp.eq.s32.totalorder %s23, 0
    %p164 = por %p162, %p163
    %p165 = scmp.ne.s32.totalorder %s153, %s154
    %p166 = scmp.eq.s32.totalorder %s24, 1
    %p167 = por %p165, %p166
    %p169 = scmp.ne.s32.totalorder %s154, %s168
    %p170 = scmp.eq.s32.totalorder %s24, 0
    %p171 = por %p169, %p170
    %s173 = sadd.s32 %s172, 1
    %p176 = scmp.eq.s32.totalorder %s18, 1
    %p177 = scmp.ne.s32.totalorder %s172, %s174
    %p178 = scmp.eq.s32.totalorder %s18, 0
    %p179 = por %p177, %p178
    %p180 = scmp.ne.s32.totalorder %s172, %s174
    %p181 = scmp.eq.s32.totalorder %s23, 1
    %p182 = por %p180, %p181
    %p183 = scmp.ne.s32.totalorder %s174, %s175
    %p184 = scmp.eq.s32.totalorder %s23, 0
    %p185 = por %p183, %p184
    %p186 = scmp.ne.s32.totalorder %s174, %s175
    %p187 = scmp.eq.s32.totalorder %s24, 1
    %p188 = por %p186, %p187
    %p190 = scmp.ne.s32.totalorder %s175, %s189
    %p191 = scmp.eq.s32.totalorder %s24, 0
    %p192 = por %p190, %p191
    %s194 = sadd.s32 %s193, 1
    %p197 = scmp.eq.s32.totalorder %s18, 1
    %p198 = scmp.ne.s32.totalorder %s193, %s195
    %p199 = scmp.eq.s32.totalorder %s18, 0
    %p200 = por %p198, %p199
    %p201 = scmp.ne.s32.totalorder %s193, %s195
    %p202 = scmp.eq.s32.totalorder %s23, 1
    %p203 = por %p201, %p202
    %p204 = scmp.ne.s32.totalorder %s195, %s196
    %p205 = scmp.eq.s32.totalorder %s23, 0
    %p206 = por %p204, %p205
    %p207 = scmp.ne.s32.totalorder %s195, %s196
    %p208 = scmp.eq.s32.totalorder %s24, 1
    %p209 = por %p207, %p208
    %p211 = scmp.ne.s32.totalorder %s196, %s210
    %p212 = scmp.eq.s32.totalorder %s24, 0
    %p213 = por %p211, %p212
    %s215 = sadd.s32 %s214, 1
    %p218 = scmp.eq.s32.totalorder %s18, 1
    %p219 = scmp.ne.s32.totalorder %s214, %s216
    %p220 = scmp.eq.s32.totalorder %s18, 0
    %p221 = por %p219, %p220
    %p222 = scmp.ne.s32.totalorder %s214, %s216
    %p223 = scmp.eq.s32.totalorder %s23, 1
    %p224 = por %p222, %p223
    %p225 = scmp.ne.s32.totalorder %s216, %s217
    %p226 = scmp.eq.s32.totalorder %s23, 0
    %p227 = por %p225, %p226
    %p228 = scmp.ne.s32.totalorder %s216, %s217
    %p229 = scmp.eq.s32.totalorder %s24, 1
    %p230 = por %p228, %p229
    %p232 = scmp.ne.s32.totalorder %s217, %s231
    %p233 = scmp.eq.s32.totalorder %s24, 0
    %p234 = por %p232, %p233
    %s236 = sadd.s32 %s235, 1
    %p239 = scmp.eq.s32.totalorder %s18, 1
    %p240 = scmp.ne.s32.totalorder %s235, %s237
    %p241 = scmp.eq.s32.totalorder %s18, 0
    %p242 = por %p240, %p241
    %p243 = scmp.ne.s32.totalorder %s235, %s237
    %p244 = scmp.eq.s32.totalorder %s23, 1
    %p245 = por %p243, %p244
    %p246 = scmp.ne.s32.totalorder %s237, %s238
    %p247 = scmp.eq.s32.totalorder %s23, 0
    %p248 = por %p246, %p247
    %p249 = scmp.ne.s32.totalorder %s237, %s238
    %p250 = scmp.eq.s32.totalorder %s24, 1
    %p251 = por %p249, %p250
    %p253 = scmp.ne.s32.totalorder %s238, %s252
    %p254 = scmp.eq.s32.totalorder %s24, 0
    %p255 = por %p253, %p254
    %s257 = sadd.s32 %s256, 1
    %p260 = scmp.eq.s32.totalorder %s18, 1
    %p261 = scmp.ne.s32.totalorder %s256, %s258
    %p262 = scmp.eq.s32.totalorder %s18, 0
    %p263 = por %p261, %p262
    %p264 = scmp.ne.s32.totalorder %s256, %s258
    %p265 = scmp.eq.s32.totalorder %s23, 1
    %p266 = por %p264, %p265
    %p267 = scmp.ne.s32.totalorder %s258, %s259
    %p268 = scmp.eq.s32.totalorder %s23, 0
    %p269 = por %p267, %p268
    %p270 = scmp.ne.s32.totalorder %s258, %s259
    %p271 = scmp.eq.s32.totalorder %s24, 1
    %p272 = por %p270, %p271
    %p274 = scmp.ne.s32.totalorder %s259, %s273
    %p275 = scmp.eq.s32.totalorder %s24, 0
    %p276 = por %p274, %p275
    %s278 = sadd.s32 %s277, 1
    %p281 = scmp.eq.s32.totalorder %s18, 1
    %p282 = scmp.ne.s32.totalorder %s277, %s279
    %p283 = scmp.eq.s32.totalorder %s18, 0
    %p284 = por %p282, %p283
    %p285 = scmp.ne.s32.totalorder %s277, %s279
    %p286 = scmp.eq.s32.totalorder %s23, 1
    %p287 = por %p285, %p286
    %p288 = scmp.ne.s32.totalorder %s279, %s280
    %p289 = scmp.eq.s32.totalorder %s23, 0
    %p290 = por %p288, %p289
    %p291 = scmp.ne.s32.totalorder %s279, %s280
    %p292 = scmp.eq.s32.totalorder %s24, 1
    %p293 = por %p291, %p292
    %p295 = scmp.ne.s32.totalorder %s280, %s294
    %p296 = scmp.eq.s32.totalorder %s24, 0
    %p297 = por %p295, %p296
    %s298 = ssub.s32 %s18, %s25
    %p299 = scmp.eq.s32.totalorder %s298, 0
    %s301 = sadd.s32 %s300, 1
    %s302 = scalar_select %p299, %s300, %s301
    %p305 = pneg %p299
    %p306 = scmp.eq.s32.totalorder %s18, 1
    %p307 = por %p305, %p306
    %p308 = scmp.ne.s32.totalorder %s300, %s303
    %p309 = scmp.eq.s32.totalorder %s18, 0
    %p310 = por %p308, %p309
    %p311 = scmp.ne.s32.totalorder %s300, %s303
    %p312 = scmp.eq.s32.totalorder %s23, 1
    %p313 = por %p311, %p312
    %p314 = scmp.ne.s32.totalorder %s303, %s304
    %p315 = scmp.eq.s32.totalorder %s23, 0
    %p316 = por %p314, %p315
    %p317 = scmp.ne.s32.totalorder %s303, %s304
    %p318 = scmp.eq.s32.totalorder %s24, 1
    %p319 = por %p317, %p318
    %p321 = scmp.ne.s32.totalorder %s304, %s320
    %p322 = scmp.eq.s32.totalorder %s24, 0
    %p323 = por %p321, %p322
    %p324 = scmp.le.s32.totalorder 1, %s18
    %p325 = scmp.lt.s32.totalorder %s18, 3
    %p326 = pnand %p324, %p325
    %p327 = pneg %p326
    // Predicated region
    $region9: #{bottleneck_forward.1} parent=5 // pred_check
      _
    $region10: #{bottleneck_forward.1} parent=5 // pred_check_branch
      %329 = sbr.rel (%p326) target = $region12
    $region11: #{bottleneck_forward.1} parent=5 // pred_region
      %s330 = ssub.s32 %s18, 1
      // Predicated region
      $region13: #{bottleneck_forward.1} parent=11 // pred_check
        %p331 = pneg %p143
      $region14: #{bottleneck_forward.1} parent=11 // pred_check_branch
        %333 = sbr.rel (%p331) target = $region16
      $region15: #{bottleneck_forward.1} parent=11 // pred_region
        _
      $region16: #{bottleneck_forward.1} parent=11 // pred_fallthru
        _
      // Predicated region
      $region17: #{bottleneck_forward.1} parent=11 // pred_check
        %p334 = pneg %p164
      $region18: #{bottleneck_forward.1} parent=11 // pred_check_branch
        %336 = sbr.rel (%p334) target = $region20
      $region19: #{bottleneck_forward.1} parent=11 // pred_region
        _
      $region20: #{bottleneck_forward.1} parent=11 // pred_fallthru
        _
      // Predicated region
      $region21: #{bottleneck_forward.1} parent=11 // pred_check
        %p337 = pneg %p185
      $region22: #{bottleneck_forward.1} parent=11 // pred_check_branch
        %339 = sbr.rel (%p337) target = $region24
      $region23: #{bottleneck_forward.1} parent=11 // pred_region
        _
      $region24: #{bottleneck_forward.1} parent=11 // pred_fallthru
        _
      // Predicated region
      $region25: #{bottleneck_forward.1} parent=11 // pred_check
        %p340 = pneg %p206
      $region26: #{bottleneck_forward.1} parent=11 // pred_check_branch
        %342 = sbr.rel (%p340) target = $region28
      $region27: #{bottleneck_forward.1} parent=11 // pred_region
        _
      $region28: #{bottleneck_forward.1} parent=11 // pred_fallthru
        _
      // Predicated region
      $region29: #{bottleneck_forward.1} parent=11 // pred_check
        %p343 = pneg %p227
      $region30: #{bottleneck_forward.1} parent=11 // pred_check_branch
        %345 = sbr.rel (%p343) target = $region32
      $region31: #{bottleneck_forward.1} parent=11 // pred_region
        _
      $region32: #{bottleneck_forward.1} parent=11 // pred_fallthru
        _
      // Predicated region
      $region33: #{bottleneck_forward.1} parent=11 // pred_check
        %p346 = pneg %p248
      $region34: #{bottleneck_forward.1} parent=11 // pred_check_branch
        %348 = sbr.rel (%p346) target = $region36
      $region35: #{bottleneck_forward.1} parent=11 // pred_region
        _
      $region36: #{bottleneck_forward.1} parent=11 // pred_fallthru
        _
      // Predicated region
      $region37: #{bottleneck_forward.1} parent=11 // pred_check
        %p349 = pneg %p269
      $region38: #{bottleneck_forward.1} parent=11 // pred_check_branch
        %351 = sbr.rel (%p349) target = $region40
      $region39: #{bottleneck_forward.1} parent=11 // pred_region
        _
      $region40: #{bottleneck_forward.1} parent=11 // pred_fallthru
        _
      // Predicated region
      $region41: #{bottleneck_forward.1} parent=11 // pred_check
        %p352 = pneg %p290
      $region42: #{bottleneck_forward.1} parent=11 // pred_check_branch
        %354 = sbr.rel (%p352) target = $region44
      $region43: #{bottleneck_forward.1} parent=11 // pred_region
        _
      $region44: #{bottleneck_forward.1} parent=11 // pred_fallthru
        _
    $region12: #{bottleneck_forward.1} parent=5 // pred_fallthru
      _
    %p355 = scmp.lt.s32.totalorder %s18, 2
    // Predicated region
    $region45: #{bottleneck_forward.1} parent=5 // pred_check
      %p356 = pneg %p355
    $region46: #{bottleneck_forward.1} parent=5 // pred_check_branch
      %358 = sbr.rel (%p356) target = $region48
    $region47: #{bottleneck_forward.1} parent=5 // pred_region
      // Predicated region
      $region49: #{bottleneck_forward.1} parent=47 // pred_check
        %p359 = pneg %p38
      $region50: #{bottleneck_forward.1} parent=47 // pred_check_branch
        %361 = sbr.rel (%p359) target = $region52
      $region51: #{bottleneck_forward.1} parent=47 // pred_region
        %p362 = scmp.lt.s32.totalorder %s18, 1
        %s363 = scalar_select %p362, %s18, 1
        %s364 = smul.addr %s363, 8
        %s365 = smul.addr %s364, 8
        %s366 = scalar_lea.vmem %s0, %s365
      $region52: #{bottleneck_forward.1} parent=47 // pred_fallthru
        _
      // Predicated region
      $region53: #{bottleneck_forward.1} parent=47 // pred_check
        %p367 = pneg %p64
      $region54: #{bottleneck_forward.1} parent=47 // pred_check_branch
        %369 = sbr.rel (%p367) target = $region56
      $region55: #{bottleneck_forward.1} parent=47 // pred_region
        %p370 = scmp.lt.s32.totalorder %s18, 1
        %s371 = scalar_select %p370, %s18, 1
        %s372 = smul.addr %s371, 8
        %s373 = smul.addr %s372, 8
        %s374 = scalar_lea.vmem %s1, %s373
      $region56: #{bottleneck_forward.1} parent=47 // pred_fallthru
        _
      // Predicated region
      $region57: #{bottleneck_forward.1} parent=47 // pred_check
        %p375 = pneg %p90
      $region58: #{bottleneck_forward.1} parent=47 // pred_check_branch
        %377 = sbr.rel (%p375) target = $region60
      $region59: #{bottleneck_forward.1} parent=47 // pred_region
        %p378 = scmp.lt.s32.totalorder %s18, 1
        %s379 = scalar_select %p378, %s18, 1
        %s380 = smul.addr %s379, 8
        %s381 = smul.addr %s380, 8
        %s382 = scalar_lea.vmem %s2, %s381
      $region60: #{bottleneck_forward.1} parent=47 // pred_fallthru
        _
      // Predicated region
      $region61: #{bottleneck_forward.1} parent=47 // pred_check
        %p383 = pneg %p116
      $region62: #{bottleneck_forward.1} parent=47 // pred_check_branch
        %385 = sbr.rel (%p383) target = $region64
      $region63: #{bottleneck_forward.1} parent=47 // pred_region
        %p386 = scmp.lt.s32.totalorder %s18, 1
        %s387 = scalar_select %p386, %s18, 1
        %s388 = smul.addr %s387, 8
        %s389 = smul.addr %s388, 8
        %s390 = scalar_lea.vmem %s3, %s389
      $region64: #{bottleneck_forward.1} parent=47 // pred_fallthru
        _
    $region48: #{bottleneck_forward.1} parent=5 // pred_fallthru
      _
    %p391 = scmp.le.s32.totalorder 1, %s18
    %p392 = scmp.lt.s32.totalorder %s18, 3
    %p393 = pnand %p391, %p392
    %p394 = pneg %p393
    // Predicated region
    $region65: #{bottleneck_forward.1} parent=5 // pred_check
      _
    $region66: #{bottleneck_forward.1} parent=5 // pred_check_branch
      %396 = sbr.rel (%p393) target = $region68
    $region67: #{bottleneck_forward.1} parent=5 // pred_region
      %s397 = ssub.s32 %s18, 1
      %p398 = scmp.lt.s32.totalorder %s23, 1
      %s399 = scalar_select %p398, %s23, 1
      %s400 = smul.addr %s399, 8
      %s401 = smul.addr %s400, 8
      %s402 = scalar_lea.vmem %s0, %s401
      %p403 = pneg %p44
      %p404 = pneg %p41
      %p405 = scmp.lt.s32.totalorder %s23, 1
      %s406 = scalar_select %p405, %s23, 1
      %s407 = smul.addr %s406, 8
      %s408 = smul.addr %s407, 8
      %s409 = scalar_lea.vmem %s1, %s408
      %p410 = pneg %p70
      %p411 = pneg %p67
      %p412 = scmp.lt.s32.totalorder %s23, 1
      %s413 = scalar_select %p412, %s23, 1
      %s414 = smul.addr %s413, 8
      %s415 = smul.addr %s414, 8
      %s416 = scalar_lea.vmem %s2, %s415
      %p417 = pneg %p96
      %p418 = pneg %p93
      %p419 = scmp.lt.s32.totalorder %s23, 1
      %s420 = scalar_select %p419, %s23, 1
      %s421 = smul.addr %s420, 8
      %s422 = smul.addr %s421, 8
      %s423 = scalar_lea.vmem %s3, %s422
      %p424 = pneg %p122
      %p425 = pneg %p119
      %p426 = pneg %p143
      %p427 = pneg %p140
      %p428 = pneg %p164
      %p429 = pneg %p161
      %p430 = pneg %p185
      %p431 = pneg %p182
      %p432 = pneg %p206
      %p433 = pneg %p203
      %p434 = pneg %p227
      %p435 = pneg %p224
      %p436 = pneg %p248
      %p437 = pneg %p245
      %p438 = pneg %p269
      %p439 = pneg %p266
      %p440 = pneg %p290
      %p441 = pneg %p287
      %p442 = pneg %p316
      %p443 = pneg %p313
      %p444 = scmp.lt.s32.totalorder %s23, 1
      %s445 = scalar_select %p444, %s23, 1
      %s446 = smul.addr %s445, 8
      %s447 = smul.addr %s446, 8
      %s448 = scalar_lea.vmem %s12, %s447
      %p449 = scmp.lt.s32.totalorder %s23, 1
      %s450 = scalar_select %p449, %s23, 1
      %s451 = smul.addr %s450, 8
      %s452 = smul.addr %s451, 8
      %s453 = scalar_lea.vmem %s0, %s452
      %p454 = scmp.lt.s32.totalorder %s23, 1
      %s455 = scalar_select %p454, %s23, 1
      %s456 = smul.addr %s455, 8
      %s457 = smul.addr %s456, 8
      %s458 = scalar_lea.vmem %s1, %s457
      %p459 = scmp.lt.s32.totalorder %s23, 1
      %s460 = scalar_select %p459, %s23, 1
      %s461 = smul.addr %s460, 8
      %s462 = smul.addr %s461, 8
      %s463 = scalar_lea.vmem %s2, %s462
      %p464 = scmp.lt.s32.totalorder %s23, 1
      %s465 = scalar_select %p464, %s23, 1
      %s466 = smul.addr %s465, 8
      %s467 = smul.addr %s466, 8
      %s468 = scalar_lea.vmem %s3, %s467
      %p469 = scmp.lt.s32.totalorder %s23, 1
      %s470 = scalar_select %p469, %s23, 1
      %s471 = smul.addr %s470, 8
      %s472 = smul.addr %s471, 8
      %s473 = scalar_lea.vmem %s12, %s472
      %v475 = vld [vmem:[%s4] sm:$0x3]
      %v476 = vld [vmem:[%s5] sm:$0x1]
      %477 = vst [vmem:[#allocation2] sm:$0xf] 0
      %478 = vst [vmem:[#allocation2 + $0x4] sm:$0x1] 0
      %479 = vst [vmem:[#allocation2 + $0x8] sm:$0xf] 0
      %480 = vst [vmem:[#allocation2 + $0xc] sm:$0x1] 0
      %481 = vst [vmem:[#allocation2 + $0x10] sm:$0xf] 0
      %482 = vst [vmem:[#allocation2 + $0x14] sm:$0x1] 0
      %483 = vst [vmem:[#allocation2 + $0x18] sm:$0xf] 0
      %484 = vst [vmem:[#allocation2 + $0x1c] sm:$0x1] 0
      %485 = vst [vmem:[#allocation2 + $0x20] sm:$0xf] 0
      %486 = vst [vmem:[#allocation2 + $0x24] sm:$0x1] 0
      %487 = vst [vmem:[#allocation2 + $0x28] sm:$0xf] 0
      %488 = vst [vmem:[#allocation2 + $0x2c] sm:$0x1] 0
      %489 = vst [vmem:[#allocation2 + $0x30] sm:$0xf] 0
      %490 = vst [vmem:[#allocation2 + $0x34] sm:$0x1] 0
      %491 = vst [vmem:[#allocation2 + $0x38] sm:$0xf] 0
      %492 = vst [vmem:[#allocation2 + $0x3c] sm:$0x1] 0
      %493 = vst [vmem:[#allocation2 + $0x40] sm:$0xf] 0
      %494 = vst [vmem:[#allocation2 + $0x44] sm:$0x1] 0
      %495 = vst [vmem:[#allocation2 + $0x48] sm:$0xf] 0
      %496 = vst [vmem:[#allocation2 + $0x4c] sm:$0x1] 0
      %v497 = vld [vmem:[%s453] sm:$0xff]
      %v498 = vld [vmem:[%s453 + $0x8] sm:$0xff]
      %v499 = vld [vmem:[%s453 + $0x10] sm:$0xff]
      %v500 = vld [vmem:[%s453 + $0x18] sm:$0xff]
      %v501 = vld [vmem:[%s453 + $0x20] sm:$0xff]
      %v502 = vld [vmem:[%s453 + $0x28] sm:$0xff]
      %v503 = vld [vmem:[%s453 + $0x30] sm:$0xff]
      %v504 = vld [vmem:[%s453 + $0x38] sm:$0xff]
      %v505 = vpack.c.bf16 %v498, %v497
      %v506 = vpack.c.bf16 %v500, %v499
      %v507 = vpack.c.bf16 %v502, %v501
      %v508 = vpack.c.bf16 %v504, %v503
      %v510 = vlaneseq
      %v511 = vshrl.u32 %v510, 7
      %v512 = vsub.s32 0, %v511
      %v513 = vrot.slane %v476, %v512
      %vm515 = vcmask 31744
      %v517 = vsel %vm515, %v505, 0
      %v520 = vsel %vm515, %v506, 0
      %v523 = vsel %vm515, %v507, 0
      %v526 = vsel %vm515, %v508, 0
      %vm528 = vcmask 1041408
      %v530 = vsel %vm528, %v475, 0
      %532 = vmatprep.subr.bf16.mxu0 0
      %533 = vmatpush1.bf16.msra.mxu0 0
      %534 = vmatprep.subr.bf16.mxu0 0
      %535 = vmatpush1.bf16.msra.mxu0 0
      %536 = vmatprep.subr.bf16.mxu0 0
      %537 = vmatpush1.bf16.msra.mxu0 0
      %538 = vmatprep.subr.bf16.mxu0 0
      %539 = vmatpush1.bf16.msra.mxu0 0
      %540 = vmatprep.subr.bf16.mxu0 0
      %541 = vmatpush1.bf16.msra.mxu0 0
      %542 = vmatprep.subr.bf16.mxu0 0
      %543 = vmatpush1.bf16.msra.mxu0 0
      %544 = vmatprep.subr.bf16.mxu0 0
      %545 = vmatpush1.bf16.msra.mxu0 0
      %546 = vmatprep.subr.bf16.mxu0 0
      %547 = vmatpush1.bf16.msra.mxu0 %v530
      %548 = vmatprep.subr.bf16.mxu0 0
      %549 = vmatpush2.bf16.msra.mxu0 0
      %550 = vmatprep.subr.bf16.mxu0 0
      %551 = vmatpush2.bf16.msra.mxu0 0
      %552 = vmatprep.subr.bf16.mxu0 0
      %553 = vmatpush2.bf16.msra.mxu0 0
      %554 = vmatprep.subr.bf16.mxu0 0
      %555 = vmatpush2.bf16.msra.mxu0 0
      %556 = vmatprep.subr.bf16.mxu0 0
      %557 = vmatpush2.bf16.msra.mxu0 0
      %558 = vmatprep.subr.bf16.mxu0 0
      %559 = vmatpush2.bf16.msra.mxu0 0
      %560 = vmatprep.subr.bf16.mxu0 0
      %561 = vmatpush2.bf16.msra.mxu0 0
      %562 = vmatprep.subr.bf16.mxu0 0
      %563 = vmatpush2.bf16.msra.mxu0 0
      %564 = vmatprep.mubr.bf16.mxu0 0
      %565 = vmatmul.mubr.bf16.gmra.mxu0 %v517
      %v566 = vpop.f32.mrf.mxu0
      %v567 = vadd.f32 %v513, %v566
      %v568 = vpop.f32.mrf.mxu0
      %v569 = vpop.f32.mrf.mxu0
      %v570 = vadd.f32 %v513, %v569
      %v571 = vpop.f32.mrf.mxu0
      %572 = vmatprep.mubr.bf16.mxu0 0
      %573 = vmatmul.mubr.bf16.gmra.mxu0 %v520
      %v574 = vpop.f32.mrf.mxu0
      %v575 = vadd.f32 %v513, %v574
      %v576 = vpop.f32.mrf.mxu0
      %v577 = vpop.f32.mrf.mxu0
      %v578 = vadd.f32 %v513, %v577
      %v579 = vpop.f32.mrf.mxu0
      %580 = vmatprep.mubr.bf16.mxu0 0
      %581 = vmatmul.mubr.bf16.gmra.mxu0 %v523
      %v582 = vpop.f32.mrf.mxu0
      %v583 = vadd.f32 %v513, %v582
      %v584 = vpop.f32.mrf.mxu0
      %v585 = vpop.f32.mrf.mxu0
      %v586 = vadd.f32 %v513, %v585
      %v587 = vpop.f32.mrf.mxu0
      %588 = vmatprep.mubr.bf16.mxu0 0
      %589 = vmatmul.mubr.bf16.gmra.mxu0 %v526
      %v590 = vpop.f32.mrf.mxu0
      %v591 = vadd.f32 %v513, %v590
      %v592 = vpop.f32.mrf.mxu0
      %v593 = vpop.f32.mrf.mxu0
      %v594 = vadd.f32 %v513, %v593
      %v595 = vpop.f32.mrf.mxu0
      %596 = vdwg.mxu0
      %v597 = vmax.f32 %v567, 0.0
      %v598 = vmax.f32 %v570, 0.0
      %v599 = vmax.f32 %v575, 0.0
      %v600 = vmax.f32 %v578, 0.0
      %v601 = vmax.f32 %v583, 0.0
      %v602 = vmax.f32 %v586, 0.0
      %v603 = vmax.f32 %v591, 0.0
      %v604 = vmax.f32 %v594, 0.0
      %v605 = vpack.c.bf16 %v598, %v597
      %v606 = vpack.c.bf16 %v600, %v599
      %v607 = vpack.c.bf16 %v602, %v601
      %v608 = vpack.c.bf16 %v604, %v603
      %v613 = vunpack.c.l.b16 %v605
      %v614 = vunpack.c.h.b16 %v605
      %v615 = vunpack.c.l.b16 %v606
      %v616 = vunpack.c.h.b16 %v606
      %v617 = vunpack.c.l.b16 %v607
      %v618 = vunpack.c.h.b16 %v607
      %v619 = vunpack.c.l.b16 %v608
      %v620 = vunpack.c.h.b16 %v608
      %v621 = vpack.c.b16 %v613, %v613
      %v622 = vpack.c.b16 %v614, %v614
      %v623 = vpack.c.b16 %v615, %v615
      %v624 = vpack.c.b16 %v616, %v616
      %v625 = vpack.c.b16 %v617, %v617
      %v626 = vpack.c.b16 %v618, %v618
      %v627 = vpack.c.b16 %v619, %v619
      %v628 = vpack.c.b16 %v620, %v620
      %v630 = vshrl.u32 %v621, 16
      %v632 = vrot.slane %v630, 7
      %v633 = vshll.u32 %v621, 16
      %v635 = vor.u32 %v632, %v633
      %v636 = vrot.slane %v632, 4
      %v638 = vshrl.u32 %v622, 16
      %v640 = vrot.slane %v638, 7
      %v641 = vshll.u32 %v622, 16
      %v643 = vor.u32 %v640, %v641
      %v644 = vrot.slane %v640, 4
      %v646 = vshrl.u32 %v623, 16
      %v648 = vrot.slane %v646, 7
      %v649 = vshll.u32 %v623, 16
      %v651 = vor.u32 %v648, %v649
      %v652 = vrot.slane %v648, 4
      %v654 = vshrl.u32 %v624, 16
      %v656 = vrot.slane %v654, 7
      %v657 = vshll.u32 %v624, 16
      %v659 = vor.u32 %v656, %v657
      %v660 = vrot.slane %v656, 4
      %v662 = vshrl.u32 %v625, 16
      %v664 = vrot.slane %v662, 7
      %v665 = vshll.u32 %v625, 16
      %v667 = vor.u32 %v664, %v665
      %v668 = vrot.slane %v664, 4
      %v670 = vshrl.u32 %v626, 16
      %v672 = vrot.slane %v670, 7
      %v673 = vshll.u32 %v626, 16
      %v675 = vor.u32 %v672, %v673
      %v676 = vrot.slane %v672, 4
      %v678 = vshrl.u32 %v627, 16
      %v680 = vrot.slane %v678, 7
      %v681 = vshll.u32 %v627, 16
      %v683 = vor.u32 %v680, %v681
      %v684 = vrot.slane %v680, 4
      %v686 = vshrl.u32 %v628, 16
      %v688 = vrot.slane %v686, 7
      %v689 = vshll.u32 %v628, 16
      %v691 = vor.u32 %v688, %v689
      %v692 = vrot.slane %v688, 4
      %s709 = scalar_lea.vmem [#allocation2], 8
      %vm710 = vcmask 1043456
      %vm711 = vsmask.f32 7938
      %vm712 = vmand %vm710, %vm711
      %v713 = vld [vmem:[%s709] sm:$0xf]
      %v714 = vsel %vm712, %v635, %v713
      %715 = vst [vmem:[%s709] sm:$0xf] %v714
      %vm716 = vcmask 1040384
      %vm717 = vsmask.f32 256
      %vm718 = vmand %vm716, %vm717
      %v719 = vld [vmem:[%s709 + $0x4] sm:$0x1]
      %v720 = vsel %vm718, %v636, %v719
      %721 = vst [vmem:[%s709 + $0x4] sm:$0x1] %v720
      %v722 = vld [vmem:[%s709 + $0x8] sm:$0xf]
      %v723 = vsel %vm712, %v643, %v722
      %724 = vst [vmem:[%s709 + $0x8] sm:$0xf] %v723
      %v725 = vld [vmem:[%s709 + $0xc] sm:$0x1]
      %v726 = vsel %vm718, %v644, %v725
      %727 = vst [vmem:[%s709 + $0xc] sm:$0x1] %v726
      %v728 = vld [vmem:[%s709 + $0x10] sm:$0xf]
      %v729 = vsel %vm712, %v651, %v728
      %730 = vst [vmem:[%s709 + $0x10] sm:$0xf] %v729
      %v731 = vld [vmem:[%s709 + $0x14] sm:$0x1]
      %v732 = vsel %vm718, %v652, %v731
      %733 = vst [vmem:[%s709 + $0x14] sm:$0x1] %v732
      %v734 = vld [vmem:[%s709 + $0x18] sm:$0xf]
      %v735 = vsel %vm712, %v659, %v734
      %736 = vst [vmem:[%s709 + $0x18] sm:$0xf] %v735
      %v737 = vld [vmem:[%s709 + $0x1c] sm:$0x1]
      %v738 = vsel %vm718, %v660, %v737
      %739 = vst [vmem:[%s709 + $0x1c] sm:$0x1] %v738
      %v740 = vld [vmem:[%s709 + $0x20] sm:$0xf]
      %v741 = vsel %vm712, %v667, %v740
      %742 = vst [vmem:[%s709 + $0x20] sm:$0xf] %v741
      %v743 = vld [vmem:[%s709 + $0x24] sm:$0x1]
      %v744 = vsel %vm718, %v668, %v743
      %745 = vst [vmem:[%s709 + $0x24] sm:$0x1] %v744
      %v746 = vld [vmem:[%s709 + $0x28] sm:$0xf]
      %v747 = vsel %vm712, %v675, %v746
      %748 = vst [vmem:[%s709 + $0x28] sm:$0xf] %v747
      %v749 = vld [vmem:[%s709 + $0x2c] sm:$0x1]
      %v750 = vsel %vm718, %v676, %v749
      %751 = vst [vmem:[%s709 + $0x2c] sm:$0x1] %v750
      %v752 = vld [vmem:[%s709 + $0x30] sm:$0xf]
      %v753 = vsel %vm712, %v683, %v752
      %754 = vst [vmem:[%s709 + $0x30] sm:$0xf] %v753
      %v755 = vld [vmem:[%s709 + $0x34] sm:$0x1]
      %v756 = vsel %vm718, %v684, %v755
      %757 = vst [vmem:[%s709 + $0x34] sm:$0x1] %v756
      %v758 = vld [vmem:[%s709 + $0x38] sm:$0xf]
      %v759 = vsel %vm712, %v691, %v758
      %760 = vst [vmem:[%s709 + $0x38] sm:$0xf] %v759
      %v761 = vld [vmem:[%s709 + $0x3c] sm:$0x1]
      %v762 = vsel %vm718, %v692, %v761
      %763 = vst [vmem:[%s709 + $0x3c] sm:$0x1] %v762
      %764 = vst [vmem:[#allocation3] sm:$0xf] 0
      %765 = vst [vmem:[#allocation3 + $0x4] sm:$0x1] 0
      %766 = vst [vmem:[#allocation3 + $0x8] sm:$0xf] 0
      %767 = vst [vmem:[#allocation3 + $0xc] sm:$0x1] 0
      %768 = vst [vmem:[#allocation3 + $0x10] sm:$0xf] 0
      %769 = vst [vmem:[#allocation3 + $0x14] sm:$0x1] 0
      %770 = vst [vmem:[#allocation3 + $0x18] sm:$0xf] 0
      %771 = vst [vmem:[#allocation3 + $0x1c] sm:$0x1] 0
      %772 = vst [vmem:[#allocation3 + $0x20] sm:$0xf] 0
      %773 = vst [vmem:[#allocation3 + $0x24] sm:$0x1] 0
      %774 = vst [vmem:[#allocation3 + $0x28] sm:$0xf] 0
      %775 = vst [vmem:[#allocation3 + $0x2c] sm:$0x1] 0
      %776 = vst [vmem:[#allocation3 + $0x30] sm:$0xf] 0
      %777 = vst [vmem:[#allocation3 + $0x34] sm:$0x1] 0
      %778 = vst [vmem:[#allocation3 + $0x38] sm:$0xf] 0
      %779 = vst [vmem:[#allocation3 + $0x3c] sm:$0x1] 0
      %780 = vst [vmem:[#allocation3 + $0x40] sm:$0xf] 0
      %781 = vst [vmem:[#allocation3 + $0x44] sm:$0x1] 0
      %782 = vst [vmem:[#allocation3 + $0x48] sm:$0xf] 0
      %783 = vst [vmem:[#allocation3 + $0x4c] sm:$0x1] 0
      %v784 = vld [vmem:[%s458] sm:$0xff]
      %v785 = vld [vmem:[%s458 + $0x8] sm:$0xff]
      %v786 = vld [vmem:[%s458 + $0x10] sm:$0xff]
      %v787 = vld [vmem:[%s458 + $0x18] sm:$0xff]
      %v788 = vld [vmem:[%s458 + $0x20] sm:$0xff]
      %v789 = vld [vmem:[%s458 + $0x28] sm:$0xff]
      %v790 = vld [vmem:[%s458 + $0x30] sm:$0xff]
      %v791 = vld [vmem:[%s458 + $0x38] sm:$0xff]
      %v792 = vpack.c.bf16 %v785, %v784
      %v793 = vpack.c.bf16 %v787, %v786
      %v794 = vpack.c.bf16 %v789, %v788
      %v795 = vpack.c.bf16 %v791, %v790
      %v797 = vsel %vm515, %v792, 0
      %v800 = vsel %vm515, %v793, 0
      %v803 = vsel %vm515, %v794, 0
      %v806 = vsel %vm515, %v795, 0
      %808 = vmatprep.subr.bf16.mxu0 0
      %809 = vmatpush1.bf16.msra.mxu0 0
      %810 = vmatprep.subr.bf16.mxu0 0
      %811 = vmatpush1.bf16.msra.mxu0 0
      %812 = vmatprep.subr.bf16.mxu0 0
      %813 = vmatpush1.bf16.msra.mxu0 0
      %814 = vmatprep.subr.bf16.mxu0 0
      %815 = vmatpush1.bf16.msra.mxu0 0
      %816 = vmatprep.subr.bf16.mxu0 0
      %817 = vmatpush1.bf16.msra.mxu0 0
      %818 = vmatprep.subr.bf16.mxu0 0
      %819 = vmatpush1.bf16.msra.mxu0 0
      %820 = vmatprep.subr.bf16.mxu0 0
      %821 = vmatpush1.bf16.msra.mxu0 0
      %822 = vmatprep.subr.bf16.mxu0 0
      %823 = vmatpush1.bf16.msra.mxu0 %v530
      %824 = vmatprep.subr.bf16.mxu0 0
      %825 = vmatpush2.bf16.msra.mxu0 0
      %826 = vmatprep.subr.bf16.mxu0 0
      %827 = vmatpush2.bf16.msra.mxu0 0
      %828 = vmatprep.subr.bf16.mxu0 0
      %829 = vmatpush2.bf16.msra.mxu0 0
      %830 = vmatprep.subr.bf16.mxu0 0
      %831 = vmatpush2.bf16.msra.mxu0 0
      %832 = vmatprep.subr.bf16.mxu0 0
      %833 = vmatpush2.bf16.msra.mxu0 0
      %834 = vmatprep.subr.bf16.mxu0 0
      %835 = vmatpush2.bf16.msra.mxu0 0
      %836 = vmatprep.subr.bf16.mxu0 0
      %837 = vmatpush2.bf16.msra.mxu0 0
      %838 = vmatprep.subr.bf16.mxu0 0
      %839 = vmatpush2.bf16.msra.mxu0 0
      %840 = vmatprep.mubr.bf16.mxu0 0
      %841 = vmatmul.mubr.bf16.gmra.mxu0 %v797
      %v842 = vpop.f32.mrf.mxu0
      %v843 = vadd.f32 %v513, %v842
      %v844 = vpop.f32.mrf.mxu0
      %v845 = vpop.f32.mrf.mxu0
      %v846 = vadd.f32 %v513, %v845
      %v847 = vpop.f32.mrf.mxu0
      %848 = vmatprep.mubr.bf16.mxu0 0
      %849 = vmatmul.mubr.bf16.gmra.mxu0 %v800
      %v850 = vpop.f32.mrf.mxu0
      %v851 = vadd.f32 %v513, %v850
      %v852 = vpop.f32.mrf.mxu0
      %v853 = vpop.f32.mrf.mxu0
      %v854 = vadd.f32 %v513, %v853
      %v855 = vpop.f32.mrf.mxu0
      %856 = vmatprep.mubr.bf16.mxu0 0
      %857 = vmatmul.mubr.bf16.gmra.mxu0 %v803
      %v858 = vpop.f32.mrf.mxu0
      %v859 = vadd.f32 %v513, %v858
      %v860 = vpop.f32.mrf.mxu0
      %v861 = vpop.f32.mrf.mxu0
      %v862 = vadd.f32 %v513, %v861
      %v863 = vpop.f32.mrf.mxu0
      %864 = vmatprep.mubr.bf16.mxu0 0
      %865 = vmatmul.mubr.bf16.gmra.mxu0 %v806
      %v866 = vpop.f32.mrf.mxu0
      %v867 = vadd.f32 %v513, %v866
      %v868 = vpop.f32.mrf.mxu0
      %v869 = vpop.f32.mrf.mxu0
      %v870 = vadd.f32 %v513, %v869
      %v871 = vpop.f32.mrf.mxu0
      %872 = vdwg.mxu0
      %v873 = vmax.f32 %v843, 0.0
      %v874 = vmax.f32 %v846, 0.0
      %v875 = vmax.f32 %v851, 0.0
      %v876 = vmax.f32 %v854, 0.0
      %v877 = vmax.f32 %v859, 0.0
      %v878 = vmax.f32 %v862, 0.0
      %v879 = vmax.f32 %v867, 0.0
      %v880 = vmax.f32 %v870, 0.0
      %v881 = vpack.c.bf16 %v874, %v873
      %v882 = vpack.c.bf16 %v876, %v875
      %v883 = vpack.c.bf16 %v878, %v877
      %v884 = vpack.c.bf16 %v880, %v879
      %v889 = vunpack.c.l.b16 %v881
      %v890 = vunpack.c.h.b16 %v881
      %v891 = vunpack.c.l.b16 %v882
      %v892 = vunpack.c.h.b16 %v882
      %v893 = vunpack.c.l.b16 %v883
      %v894 = vunpack.c.h.b16 %v883
      %v895 = vunpack.c.l.b16 %v884
      %v896 = vunpack.c.h.b16 %v884
      %v897 = vpack.c.b16 %v889, %v889
      %v898 = vpack.c.b16 %v890, %v890
      %v899 = vpack.c.b16 %v891, %v891
      %v900 = vpack.c.b16 %v892, %v892
      %v901 = vpack.c.b16 %v893, %v893
      %v902 = vpack.c.b16 %v894, %v894
      %v903 = vpack.c.b16 %v895, %v895
      %v904 = vpack.c.b16 %v896, %v896
      %v906 = vshrl.u32 %v897, 16
      %v908 = vrot.slane %v906, 7
      %v909 = vshll.u32 %v897, 16
      %v911 = vor.u32 %v908, %v909
      %v912 = vrot.slane %v908, 4
      %v914 = vshrl.u32 %v898, 16
      %v916 = vrot.slane %v914, 7
      %v917 = vshll.u32 %v898, 16
      %v919 = vor.u32 %v916, %v917
      %v920 = vrot.slane %v916, 4
      %v922 = vshrl.u32 %v899, 16
      %v924 = vrot.slane %v922, 7
      %v925 = vshll.u32 %v899, 16
      %v927 = vor.u32 %v924, %v925
      %v928 = vrot.slane %v924, 4
      %v930 = vshrl.u32 %v900, 16
      %v932 = vrot.slane %v930, 7
      %v933 = vshll.u32 %v900, 16
      %v935 = vor.u32 %v932, %v933
      %v936 = vrot.slane %v932, 4
      %v938 = vshrl.u32 %v901, 16
      %v940 = vrot.slane %v938, 7
      %v941 = vshll.u32 %v901, 16
      %v943 = vor.u32 %v940, %v941
      %v944 = vrot.slane %v940, 4
      %v946 = vshrl.u32 %v902, 16
      %v948 = vrot.slane %v946, 7
      %v949 = vshll.u32 %v902, 16
      %v951 = vor.u32 %v948, %v949
      %v952 = vrot.slane %v948, 4
      %v954 = vshrl.u32 %v903, 16
      %v956 = vrot.slane %v954, 7
      %v957 = vshll.u32 %v903, 16
      %v959 = vor.u32 %v956, %v957
      %v960 = vrot.slane %v956, 4
      %v962 = vshrl.u32 %v904, 16
      %v964 = vrot.slane %v962, 7
      %v965 = vshll.u32 %v904, 16
      %v967 = vor.u32 %v964, %v965
      %v968 = vrot.slane %v964, 4
      %s985 = scalar_lea.vmem [#allocation3], 8
      %v986 = vld [vmem:[%s985] sm:$0xf]
      %v987 = vsel %vm712, %v911, %v986
      %988 = vst [vmem:[%s985] sm:$0xf] %v987
      %v989 = vld [vmem:[%s985 + $0x4] sm:$0x1]
      %v990 = vsel %vm718, %v912, %v989
      %991 = vst [vmem:[%s985 + $0x4] sm:$0x1] %v990
      %v992 = vld [vmem:[%s985 + $0x8] sm:$0xf]
      %v993 = vsel %vm712, %v919, %v992
      %994 = vst [vmem:[%s985 + $0x8] sm:$0xf] %v993
      %v995 = vld [vmem:[%s985 + $0xc] sm:$0x1]
      %v996 = vsel %vm718, %v920, %v995
      %997 = vst [vmem:[%s985 + $0xc] sm:$0x1] %v996
      %v998 = vld [vmem:[%s985 + $0x10] sm:$0xf]
      %v999 = vsel %vm712, %v927, %v998
      %1000 = vst [vmem:[%s985 + $0x10] sm:$0xf] %v999
      %v1001 = vld [vmem:[%s985 + $0x14] sm:$0x1]
      %v1002 = vsel %vm718, %v928, %v1001
      %1003 = vst [vmem:[%s985 + $0x14] sm:$0x1] %v1002
      %v1004 = vld [vmem:[%s985 + $0x18] sm:$0xf]
      %v1005 = vsel %vm712, %v935, %v1004
      %1006 = vst [vmem:[%s985 + $0x18] sm:$0xf] %v1005
      %v1007 = vld [vmem:[%s985 + $0x1c] sm:$0x1]
      %v1008 = vsel %vm718, %v936, %v1007
      %1009 = vst [vmem:[%s985 + $0x1c] sm:$0x1] %v1008
      %v1010 = vld [vmem:[%s985 + $0x20] sm:$0xf]
      %v1011 = vsel %vm712, %v943, %v1010
      %1012 = vst [vmem:[%s985 + $0x20] sm:$0xf] %v1011
      %v1013 = vld [vmem:[%s985 + $0x24] sm:$0x1]
      %v1014 = vsel %vm718, %v944, %v1013
      %1015 = vst [vmem:[%s985 + $0x24] sm:$0x1] %v1014
      %v1016 = vld [vmem:[%s985 + $0x28] sm:$0xf]
      %v1017 = vsel %vm712, %v951, %v1016
      %1018 = vst [vmem:[%s985 + $0x28] sm:$0xf] %v1017
      %v1019 = vld [vmem:[%s985 + $0x2c] sm:$0x1]
      %v1020 = vsel %vm718, %v952, %v1019
      %1021 = vst [vmem:[%s985 + $0x2c] sm:$0x1] %v1020
      %v1022 = vld [vmem:[%s985 + $0x30] sm:$0xf]
      %v1023 = vsel %vm712, %v959, %v1022
      %1024 = vst [vmem:[%s985 + $0x30] sm:$0xf] %v1023
      %v1025 = vld [vmem:[%s985 + $0x34] sm:$0x1]
      %v1026 = vsel %vm718, %v960, %v1025
      %1027 = vst [vmem:[%s985 + $0x34] sm:$0x1] %v1026
      %v1028 = vld [vmem:[%s985 + $0x38] sm:$0xf]
      %v1029 = vsel %vm712, %v967, %v1028
      %1030 = vst [vmem:[%s985 + $0x38] sm:$0xf] %v1029
      %v1031 = vld [vmem:[%s985 + $0x3c] sm:$0x1]
      %v1032 = vsel %vm718, %v968, %v1031
      %1033 = vst [vmem:[%s985 + $0x3c] sm:$0x1] %v1032
      %1034 = vst [vmem:[#allocation4] sm:$0xf] 0
      %1035 = vst [vmem:[#allocation4 + $0x4] sm:$0x1] 0
      %1036 = vst [vmem:[#allocation4 + $0x8] sm:$0xf] 0
      %1037 = vst [vmem:[#allocation4 + $0xc] sm:$0x1] 0
      %1038 = vst [vmem:[#allocation4 + $0x10] sm:$0xf] 0
      %1039 = vst [vmem:[#allocation4 + $0x14] sm:$0x1] 0
      %1040 = vst [vmem:[#allocation4 + $0x18] sm:$0xf] 0
      %1041 = vst [vmem:[#allocation4 + $0x1c] sm:$0x1] 0
      %1042 = vst [vmem:[#allocation4 + $0x20] sm:$0xf] 0
      %1043 = vst [vmem:[#allocation4 + $0x24] sm:$0x1] 0
      %1044 = vst [vmem:[#allocation4 + $0x28] sm:$0xf] 0
      %1045 = vst [vmem:[#allocation4 + $0x2c] sm:$0x1] 0
      %1046 = vst [vmem:[#allocation4 + $0x30] sm:$0xf] 0
      %1047 = vst [vmem:[#allocation4 + $0x34] sm:$0x1] 0
      %1048 = vst [vmem:[#allocation4 + $0x38] sm:$0xf] 0
      %1049 = vst [vmem:[#allocation4 + $0x3c] sm:$0x1] 0
      %1050 = vst [vmem:[#allocation4 + $0x40] sm:$0xf] 0
      %1051 = vst [vmem:[#allocation4 + $0x44] sm:$0x1] 0
      %1052 = vst [vmem:[#allocation4 + $0x48] sm:$0xf] 0
      %1053 = vst [vmem:[#allocation4 + $0x4c] sm:$0x1] 0
      %v1054 = vld [vmem:[%s463] sm:$0xff]
      %v1055 = vld [vmem:[%s463 + $0x8] sm:$0xff]
      %v1056 = vld [vmem:[%s463 + $0x10] sm:$0xff]
      %v1057 = vld [vmem:[%s463 + $0x18] sm:$0xff]
      %v1058 = vld [vmem:[%s463 + $0x20] sm:$0xff]
      %v1059 = vld [vmem:[%s463 + $0x28] sm:$0xff]
      %v1060 = vld [vmem:[%s463 + $0x30] sm:$0xff]
      %v1061 = vld [vmem:[%s463 + $0x38] sm:$0xff]
      %v1062 = vpack.c.bf16 %v1055, %v1054
      %v1063 = vpack.c.bf16 %v1057, %v1056
      %v1064 = vpack.c.bf16 %v1059, %v1058
      %v1065 = vpack.c.bf16 %v1061, %v1060
      %v1067 = vsel %vm515, %v1062, 0
      %v1070 = vsel %vm515, %v1063, 0
      %v1073 = vsel %vm515, %v1064, 0
      %v1076 = vsel %vm515, %v1065, 0
      %1078 = vmatprep.subr.bf16.mxu0 0
      %1079 = vmatpush1.bf16.msra.mxu0 0
      %1080 = vmatprep.subr.bf16.mxu0 0
      %1081 = vmatpush1.bf16.msra.mxu0 0
      %1082 = vmatprep.subr.bf16.mxu0 0
      %1083 = vmatpush1.bf16.msra.mxu0 0
      %1084 = vmatprep.subr.bf16.mxu0 0
      %1085 = vmatpush1.bf16.msra.mxu0 0
      %1086 = vmatprep.subr.bf16.mxu0 0
      %1087 = vmatpush1.bf16.msra.mxu0 0
      %1088 = vmatprep.subr.bf16.mxu0 0
      %1089 = vmatpush1.bf16.msra.mxu0 0
      %1090 = vmatprep.subr.bf16.mxu0 0
      %1091 = vmatpush1.bf16.msra.mxu0 0
      %1092 = vmatprep.subr.bf16.mxu0 0
      %1093 = vmatpush1.bf16.msra.mxu0 %v530
      %1094 = vmatprep.subr.bf16.mxu0 0
      %1095 = vmatpush2.bf16.msra.mxu0 0
      %1096 = vmatprep.subr.bf16.mxu0 0
      %1097 = vmatpush2.bf16.msra.mxu0 0
      %1098 = vmatprep.subr.bf16.mxu0 0
      %1099 = vmatpush2.bf16.msra.mxu0 0
      %1100 = vmatprep.subr.bf16.mxu0 0
      %1101 = vmatpush2.bf16.msra.mxu0 0
      %1102 = vmatprep.subr.bf16.mxu0 0
      %1103 = vmatpush2.bf16.msra.mxu0 0
      %1104 = vmatprep.subr.bf16.mxu0 0
      %1105 = vmatpush2.bf16.msra.mxu0 0
      %1106 = vmatprep.subr.bf16.mxu0 0
      %1107 = vmatpush2.bf16.msra.mxu0 0
      %1108 = vmatprep.subr.bf16.mxu0 0
      %1109 = vmatpush2.bf16.msra.mxu0 0
      %1110 = vmatprep.mubr.bf16.mxu0 0
      %1111 = vmatmul.mubr.bf16.gmra.mxu0 %v1067
      %v1112 = vpop.f32.mrf.mxu0
      %v1113 = vadd.f32 %v513, %v1112
      %v1114 = vpop.f32.mrf.mxu0
      %v1115 = vpop.f32.mrf.mxu0
      %v1116 = vadd.f32 %v513, %v1115
      %v1117 = vpop.f32.mrf.mxu0
      %1118 = vmatprep.mubr.bf16.mxu0 0
      %1119 = vmatmul.mubr.bf16.gmra.mxu0 %v1070
      %v1120 = vpop.f32.mrf.mxu0
      %v1121 = vadd.f32 %v513, %v1120
      %v1122 = vpop.f32.mrf.mxu0
      %v1123 = vpop.f32.mrf.mxu0
      %v1124 = vadd.f32 %v513, %v1123
      %v1125 = vpop.f32.mrf.mxu0
      %1126 = vmatprep.mubr.bf16.mxu0 0
      %1127 = vmatmul.mubr.bf16.gmra.mxu0 %v1073
      %v1128 = vpop.f32.mrf.mxu0
      %v1129 = vadd.f32 %v513, %v1128
      %v1130 = vpop.f32.mrf.mxu0
      %v1131 = vpop.f32.mrf.mxu0
      %v1132 = vadd.f32 %v513, %v1131
      %v1133 = vpop.f32.mrf.mxu0
      %1134 = vmatprep.mubr.bf16.mxu0 0
      %1135 = vmatmul.mubr.bf16.gmra.mxu0 %v1076
      %v1136 = vpop.f32.mrf.mxu0
      %v1137 = vadd.f32 %v513, %v1136
      %v1138 = vpop.f32.mrf.mxu0
      %v1139 = vpop.f32.mrf.mxu0
      %v1140 = vadd.f32 %v513, %v1139
      %v1141 = vpop.f32.mrf.mxu0
      %1142 = vdwg.mxu0
      %v1143 = vmax.f32 %v1113, 0.0
      %v1144 = vmax.f32 %v1116, 0.0
      %v1145 = vmax.f32 %v1121, 0.0
      %v1146 = vmax.f32 %v1124, 0.0
      %v1147 = vmax.f32 %v1129, 0.0
      %v1148 = vmax.f32 %v1132, 0.0
      %v1149 = vmax.f32 %v1137, 0.0
      %v1150 = vmax.f32 %v1140, 0.0
      %v1151 = vpack.c.bf16 %v1144, %v1143
      %v1152 = vpack.c.bf16 %v1146, %v1145
      %v1153 = vpack.c.bf16 %v1148, %v1147
      %v1154 = vpack.c.bf16 %v1150, %v1149
      %v1159 = vunpack.c.l.b16 %v1151
      %v1160 = vunpack.c.h.b16 %v1151
      %v1161 = vunpack.c.l.b16 %v1152
      %v1162 = vunpack.c.h.b16 %v1152
      %v1163 = vunpack.c.l.b16 %v1153
      %v1164 = vunpack.c.h.b16 %v1153
      %v1165 = vunpack.c.l.b16 %v1154
      %v1166 = vunpack.c.h.b16 %v1154
      %v1167 = vpack.c.b16 %v1159, %v1159
      %v1168 = vpack.c.b16 %v1160, %v1160
      %v1169 = vpack.c.b16 %v1161, %v1161
      %v1170 = vpack.c.b16 %v1162, %v1162
      %v1171 = vpack.c.b16 %v1163, %v1163
      %v1172 = vpack.c.b16 %v1164, %v1164
      %v1173 = vpack.c.b16 %v1165, %v1165
      %v1174 = vpack.c.b16 %v1166, %v1166
      %v1176 = vshrl.u32 %v1167, 16
      %v1178 = vrot.slane %v1176, 7
      %v1179 = vshll.u32 %v1167, 16
      %v1181 = vor.u32 %v1178, %v1179
      %v1182 = vrot.slane %v1178, 4
      %v1184 = vshrl.u32 %v1168, 16
      %v1186 = vrot.slane %v1184, 7
      %v1187 = vshll.u32 %v1168, 16
      %v1189 = vor.u32 %v1186, %v1187
      %v1190 = vrot.slane %v1186, 4
      %v1192 = vshrl.u32 %v1169, 16
      %v1194 = vrot.slane %v1192, 7
      %v1195 = vshll.u32 %v1169, 16
      %v1197 = vor.u32 %v1194, %v1195
      %v1198 = vrot.slane %v1194, 4
      %v1200 = vshrl.u32 %v1170, 16
      %v1202 = vrot.slane %v1200, 7
      %v1203 = vshll.u32 %v1170, 16
      %v1205 = vor.u32 %v1202, %v1203
      %v1206 = vrot.slane %v1202, 4
      %v1208 = vshrl.u32 %v1171, 16
      %v1210 = vrot.slane %v1208, 7
      %v1211 = vshll.u32 %v1171, 16
      %v1213 = vor.u32 %v1210, %v1211
      %v1214 = vrot.slane %v1210, 4
      %v1216 = vshrl.u32 %v1172, 16
      %v1218 = vrot.slane %v1216, 7
      %v1219 = vshll.u32 %v1172, 16
      %v1221 = vor.u32 %v1218, %v1219
      %v1222 = vrot.slane %v1218, 4
      %v1224 = vshrl.u32 %v1173, 16
      %v1226 = vrot.slane %v1224, 7
      %v1227 = vshll.u32 %v1173, 16
      %v1229 = vor.u32 %v1226, %v1227
      %v1230 = vrot.slane %v1226, 4
      %v1232 = vshrl.u32 %v1174, 16
      %v1234 = vrot.slane %v1232, 7
      %v1235 = vshll.u32 %v1174, 16
      %v1237 = vor.u32 %v1234, %v1235
      %v1238 = vrot.slane %v1234, 4
      %s1255 = scalar_lea.vmem [#allocation4], 8
      %v1256 = vld [vmem:[%s1255] sm:$0xf]
      %v1257 = vsel %vm712, %v1181, %v1256
      %1258 = vst [vmem:[%s1255] sm:$0xf] %v1257
      %v1259 = vld [vmem:[%s1255 + $0x4] sm:$0x1]
      %v1260 = vsel %vm718, %v1182, %v1259
      %1261 = vst [vmem:[%s1255 + $0x4] sm:$0x1] %v1260
      %v1262 = vld [vmem:[%s1255 + $0x8] sm:$0xf]
      %v1263 = vsel %vm712, %v1189, %v1262
      %1264 = vst [vmem:[%s1255 + $0x8] sm:$0xf] %v1263
      %v1265 = vld [vmem:[%s1255 + $0xc] sm:$0x1]
      %v1266 = vsel %vm718, %v1190, %v1265
      %1267 = vst [vmem:[%s1255 + $0xc] sm:$0x1] %v1266
      %v1268 = vld [vmem:[%s1255 + $0x10] sm:$0xf]
      %v1269 = vsel %vm712, %v1197, %v1268
      %1270 = vst [vmem:[%s1255 + $0x10] sm:$0xf] %v1269
      %v1271 = vld [vmem:[%s1255 + $0x14] sm:$0x1]
      %v1272 = vsel %vm718, %v1198, %v1271
      %1273 = vst [vmem:[%s1255 + $0x14] sm:$0x1] %v1272
      %v1274 = vld [vmem:[%s1255 + $0x18] sm:$0xf]
      %v1275 = vsel %vm712, %v1205, %v1274
      %1276 = vst [vmem:[%s1255 + $0x18] sm:$0xf] %v1275
      %v1277 = vld [vmem:[%s1255 + $0x1c] sm:$0x1]
      %v1278 = vsel %vm718, %v1206, %v1277
      %1279 = vst [vmem:[%s1255 + $0x1c] sm:$0x1] %v1278
      %v1280 = vld [vmem:[%s1255 + $0x20] sm:$0xf]
      %v1281 = vsel %vm712, %v1213, %v1280
      %1282 = vst [vmem:[%s1255 + $0x20] sm:$0xf] %v1281
      %v1283 = vld [vmem:[%s1255 + $0x24] sm:$0x1]
      %v1284 = vsel %vm718, %v1214, %v1283
      %1285 = vst [vmem:[%s1255 + $0x24] sm:$0x1] %v1284
      %v1286 = vld [vmem:[%s1255 + $0x28] sm:$0xf]
      %v1287 = vsel %vm712, %v1221, %v1286
      %1288 = vst [vmem:[%s1255 + $0x28] sm:$0xf] %v1287
      %v1289 = vld [vmem:[%s1255 + $0x2c] sm:$0x1]
      %v1290 = vsel %vm718, %v1222, %v1289
      %1291 = vst [vmem:[%s1255 + $0x2c] sm:$0x1] %v1290
      %v1292 = vld [vmem:[%s1255 + $0x30] sm:$0xf]
      %v1293 = vsel %vm712, %v1229, %v1292
      %1294 = vst [vmem:[%s1255 + $0x30] sm:$0xf] %v1293
      %v1295 = vld [vmem:[%s1255 + $0x34] sm:$0x1]
      %v1296 = vsel %vm718, %v1230, %v1295
      %1297 = vst [vmem:[%s1255 + $0x34] sm:$0x1] %v1296
      %v1298 = vld [vmem:[%s1255 + $0x38] sm:$0xf]
      %v1299 = vsel %vm712, %v1237, %v1298
      %1300 = vst [vmem:[%s1255 + $0x38] sm:$0xf] %v1299
      %v1301 = vld [vmem:[%s1255 + $0x3c] sm:$0x1]
      %v1302 = vsel %vm718, %v1238, %v1301
      %1303 = vst [vmem:[%s1255 + $0x3c] sm:$0x1] %v1302
      %1304 = vst [vmem:[#allocation5] sm:$0xf] 0
      %1305 = vst [vmem:[#allocation5 + $0x4] sm:$0x1] 0
      %1306 = vst [vmem:[#allocation5 + $0x8] sm:$0xf] 0
      %1307 = vst [vmem:[#allocation5 + $0xc] sm:$0x1] 0
      %1308 = vst [vmem:[#allocation5 + $0x10] sm:$0xf] 0
      %1309 = vst [vmem:[#allocation5 + $0x14] sm:$0x1] 0
      %1310 = vst [vmem:[#allocation5 + $0x18] sm:$0xf] 0
      %1311 = vst [vmem:[#allocation5 + $0x1c] sm:$0x1] 0
      %1312 = vst [vmem:[#allocation5 + $0x20] sm:$0xf] 0
      %1313 = vst [vmem:[#allocation5 + $0x24] sm:$0x1] 0
      %1314 = vst [vmem:[#allocation5 + $0x28] sm:$0xf] 0
      %1315 = vst [vmem:[#allocation5 + $0x2c] sm:$0x1] 0
      %1316 = vst [vmem:[#allocation5 + $0x30] sm:$0xf] 0
      %1317 = vst [vmem:[#allocation5 + $0x34] sm:$0x1] 0
      %1318 = vst [vmem:[#allocation5 + $0x38] sm:$0xf] 0
      %1319 = vst [vmem:[#allocation5 + $0x3c] sm:$0x1] 0
      %1320 = vst [vmem:[#allocation5 + $0x40] sm:$0xf] 0
      %1321 = vst [vmem:[#allocation5 + $0x44] sm:$0x1] 0
      %1322 = vst [vmem:[#allocation5 + $0x48] sm:$0xf] 0
      %1323 = vst [vmem:[#allocation5 + $0x4c] sm:$0x1] 0
      %v1324 = vld [vmem:[%s468] sm:$0xff]
      %v1325 = vld [vmem:[%s468 + $0x8] sm:$0xff]
      %v1326 = vld [vmem:[%s468 + $0x10] sm:$0xff]
      %v1327 = vld [vmem:[%s468 + $0x18] sm:$0xff]
      %v1328 = vld [vmem:[%s468 + $0x20] sm:$0xff]
      %v1329 = vld [vmem:[%s468 + $0x28] sm:$0xff]
      %v1330 = vld [vmem:[%s468 + $0x30] sm:$0xff]
      %v1331 = vld [vmem:[%s468 + $0x38] sm:$0xff]
      %v1332 = vpack.c.bf16 %v1325, %v1324
      %v1333 = vpack.c.bf16 %v1327, %v1326
      %v1334 = vpack.c.bf16 %v1329, %v1328
      %v1335 = vpack.c.bf16 %v1331, %v1330
      %v1337 = vsel %vm515, %v1332, 0
      %v1340 = vsel %vm515, %v1333, 0
      %v1343 = vsel %vm515, %v1334, 0
      %v1346 = vsel %vm515, %v1335, 0
      %1348 = vmatprep.subr.bf16.mxu0 0
      %1349 = vmatpush1.bf16.msra.mxu0 0
      %1350 = vmatprep.subr.bf16.mxu0 0
      %1351 = vmatpush1.bf16.msra.mxu0 0
      %1352 = vmatprep.subr.bf16.mxu0 0
      %1353 = vmatpush1.bf16.msra.mxu0 0
      %1354 = vmatprep.subr.bf16.mxu0 0
      %1355 = vmatpush1.bf16.msra.mxu0 0
      %1356 = vmatprep.subr.bf16.mxu0 0
      %1357 = vmatpush1.bf16.msra.mxu0 0
      %1358 = vmatprep.subr.bf16.mxu0 0
      %1359 = vmatpush1.bf16.msra.mxu0 0
      %1360 = vmatprep.subr.bf16.mxu0 0
      %1361 = vmatpush1.bf16.msra.mxu0 0
      %1362 = vmatprep.subr.bf16.mxu0 0
      %1363 = vmatpush1.bf16.msra.mxu0 %v530
      %1364 = vmatprep.subr.bf16.mxu0 0
      %1365 = vmatpush2.bf16.msra.mxu0 0
      %1366 = vmatprep.subr.bf16.mxu0 0
      %1367 = vmatpush2.bf16.msra.mxu0 0
      %1368 = vmatprep.subr.bf16.mxu0 0
      %1369 = vmatpush2.bf16.msra.mxu0 0
      %1370 = vmatprep.subr.bf16.mxu0 0
      %1371 = vmatpush2.bf16.msra.mxu0 0
      %1372 = vmatprep.subr.bf16.mxu0 0
      %1373 = vmatpush2.bf16.msra.mxu0 0
      %1374 = vmatprep.subr.bf16.mxu0 0
      %1375 = vmatpush2.bf16.msra.mxu0 0
      %1376 = vmatprep.subr.bf16.mxu0 0
      %1377 = vmatpush2.bf16.msra.mxu0 0
      %1378 = vmatprep.subr.bf16.mxu0 0
      %1379 = vmatpush2.bf16.msra.mxu0 0
      %1380 = vmatprep.mubr.bf16.mxu0 0
      %1381 = vmatmul.mubr.bf16.gmra.mxu0 %v1337
      %v1382 = vpop.f32.mrf.mxu0
      %v1383 = vadd.f32 %v513, %v1382
      %v1384 = vpop.f32.mrf.mxu0
      %v1385 = vpop.f32.mrf.mxu0
      %v1386 = vadd.f32 %v513, %v1385
      %v1387 = vpop.f32.mrf.mxu0
      %1388 = vmatprep.mubr.bf16.mxu0 0
      %1389 = vmatmul.mubr.bf16.gmra.mxu0 %v1340
      %v1390 = vpop.f32.mrf.mxu0
      %v1391 = vadd.f32 %v513, %v1390
      %v1392 = vpop.f32.mrf.mxu0
      %v1393 = vpop.f32.mrf.mxu0
      %v1394 = vadd.f32 %v513, %v1393
      %v1395 = vpop.f32.mrf.mxu0
      %1396 = vmatprep.mubr.bf16.mxu0 0
      %1397 = vmatmul.mubr.bf16.gmra.mxu0 %v1343
      %v1398 = vpop.f32.mrf.mxu0
      %v1399 = vadd.f32 %v513, %v1398
      %v1400 = vpop.f32.mrf.mxu0
      %v1401 = vpop.f32.mrf.mxu0
      %v1402 = vadd.f32 %v513, %v1401
      %v1403 = vpop.f32.mrf.mxu0
      %1404 = vmatprep.mubr.bf16.mxu0 0
      %1405 = vmatmul.mubr.bf16.gmra.mxu0 %v1346
      %v1406 = vpop.f32.mrf.mxu0
      %v1407 = vadd.f32 %v513, %v1406
      %v1408 = vpop.f32.mrf.mxu0
      %v1409 = vpop.f32.mrf.mxu0
      %v1410 = vadd.f32 %v513, %v1409
      %v1411 = vpop.f32.mrf.mxu0
      %1412 = vdwg.mxu0
      %v1413 = vmax.f32 %v1383, 0.0
      %v1414 = vmax.f32 %v1386, 0.0
      %v1415 = vmax.f32 %v1391, 0.0
      %v1416 = vmax.f32 %v1394, 0.0
      %v1417 = vmax.f32 %v1399, 0.0
      %v1418 = vmax.f32 %v1402, 0.0
      %v1419 = vmax.f32 %v1407, 0.0
      %v1420 = vmax.f32 %v1410, 0.0
      %v1421 = vpack.c.bf16 %v1414, %v1413
      %v1422 = vpack.c.bf16 %v1416, %v1415
      %v1423 = vpack.c.bf16 %v1418, %v1417
      %v1424 = vpack.c.bf16 %v1420, %v1419
      %v1429 = vunpack.c.l.b16 %v1421
      %v1430 = vunpack.c.h.b16 %v1421
      %v1431 = vunpack.c.l.b16 %v1422
      %v1432 = vunpack.c.h.b16 %v1422
      %v1433 = vunpack.c.l.b16 %v1423
      %v1434 = vunpack.c.h.b16 %v1423
      %v1435 = vunpack.c.l.b16 %v1424
      %v1436 = vunpack.c.h.b16 %v1424
      %v1437 = vpack.c.b16 %v1429, %v1429
      %v1438 = vpack.c.b16 %v1430, %v1430
      %v1439 = vpack.c.b16 %v1431, %v1431
      %v1440 = vpack.c.b16 %v1432, %v1432
      %v1441 = vpack.c.b16 %v1433, %v1433
      %v1442 = vpack.c.b16 %v1434, %v1434
      %v1443 = vpack.c.b16 %v1435, %v1435
      %v1444 = vpack.c.b16 %v1436, %v1436
      %v1446 = vshrl.u32 %v1437, 16
      %v1448 = vrot.slane %v1446, 7
      %v1449 = vshll.u32 %v1437, 16
      %v1451 = vor.u32 %v1448, %v1449
      %v1452 = vrot.slane %v1448, 4
      %v1454 = vshrl.u32 %v1438, 16
      %v1456 = vrot.slane %v1454, 7
      %v1457 = vshll.u32 %v1438, 16
      %v1459 = vor.u32 %v1456, %v1457
      %v1460 = vrot.slane %v1456, 4
      %v1462 = vshrl.u32 %v1439, 16
      %v1464 = vrot.slane %v1462, 7
      %v1465 = vshll.u32 %v1439, 16
      %v1467 = vor.u32 %v1464, %v1465
      %v1468 = vrot.slane %v1464, 4
      %v1470 = vshrl.u32 %v1440, 16
      %v1472 = vrot.slane %v1470, 7
      %v1473 = vshll.u32 %v1440, 16
      %v1475 = vor.u32 %v1472, %v1473
      %v1476 = vrot.slane %v1472, 4
      %v1478 = vshrl.u32 %v1441, 16
      %v1480 = vrot.slane %v1478, 7
      %v1481 = vshll.u32 %v1441, 16
      %v1483 = vor.u32 %v1480, %v1481
      %v1484 = vrot.slane %v1480, 4
      %v1486 = vshrl.u32 %v1442, 16
      %v1488 = vrot.slane %v1486, 7
      %v1489 = vshll.u32 %v1442, 16
      %v1491 = vor.u32 %v1488, %v1489
      %v1492 = vrot.slane %v1488, 4
      %v1494 = vshrl.u32 %v1443, 16
      %v1496 = vrot.slane %v1494, 7
      %v1497 = vshll.u32 %v1443, 16
      %v1499 = vor.u32 %v1496, %v1497
      %v1500 = vrot.slane %v1496, 4
      %v1502 = vshrl.u32 %v1444, 16
      %v1504 = vrot.slane %v1502, 7
      %v1505 = vshll.u32 %v1444, 16
      %v1507 = vor.u32 %v1504, %v1505
      %v1508 = vrot.slane %v1504, 4
      %s1525 = scalar_lea.vmem [#allocation5], 8
      %v1526 = vld [vmem:[%s1525] sm:$0xf]
      %v1527 = vsel %vm712, %v1451, %v1526
      %1528 = vst [vmem:[%s1525] sm:$0xf] %v1527
      %v1529 = vld [vmem:[%s1525 + $0x4] sm:$0x1]
      %v1530 = vsel %vm718, %v1452, %v1529
      %1531 = vst [vmem:[%s1525 + $0x4] sm:$0x1] %v1530
      %v1532 = vld [vmem:[%s1525 + $0x8] sm:$0xf]
      %v1533 = vsel %vm712, %v1459, %v1532
      %1534 = vst [vmem:[%s1525 + $0x8] sm:$0xf] %v1533
      %v1535 = vld [vmem:[%s1525 + $0xc] sm:$0x1]
      %v1536 = vsel %vm718, %v1460, %v1535
      %1537 = vst [vmem:[%s1525 + $0xc] sm:$0x1] %v1536
      %v1538 = vld [vmem:[%s1525 + $0x10] sm:$0xf]
      %v1539 = vsel %vm712, %v1467, %v1538
      %1540 = vst [vmem:[%s1525 + $0x10] sm:$0xf] %v1539
      %v1541 = vld [vmem:[%s1525 + $0x14] sm:$0x1]
      %v1542 = vsel %vm718, %v1468, %v1541
      %1543 = vst [vmem:[%s1525 + $0x14] sm:$0x1] %v1542
      %v1544 = vld [vmem:[%s1525 + $0x18] sm:$0xf]
      %v1545 = vsel %vm712, %v1475, %v1544
      %1546 = vst [vmem:[%s1525 + $0x18] sm:$0xf] %v1545
      %v1547 = vld [vmem:[%s1525 + $0x1c] sm:$0x1]
      %v1548 = vsel %vm718, %v1476, %v1547
      %1549 = vst [vmem:[%s1525 + $0x1c] sm:$0x1] %v1548
      %v1550 = vld [vmem:[%s1525 + $0x20] sm:$0xf]
      %v1551 = vsel %vm712, %v1483, %v1550
      %1552 = vst [vmem:[%s1525 + $0x20] sm:$0xf] %v1551
      %v1553 = vld [vmem:[%s1525 + $0x24] sm:$0x1]
      %v1554 = vsel %vm718, %v1484, %v1553
      %1555 = vst [vmem:[%s1525 + $0x24] sm:$0x1] %v1554
      %v1556 = vld [vmem:[%s1525 + $0x28] sm:$0xf]
      %v1557 = vsel %vm712, %v1491, %v1556
      %1558 = vst [vmem:[%s1525 + $0x28] sm:$0xf] %v1557
      %v1559 = vld [vmem:[%s1525 + $0x2c] sm:$0x1]
      %v1560 = vsel %vm718, %v1492, %v1559
      %1561 = vst [vmem:[%s1525 + $0x2c] sm:$0x1] %v1560
      %v1562 = vld [vmem:[%s1525 + $0x30] sm:$0xf]
      %v1563 = vsel %vm712, %v1499, %v1562
      %1564 = vst [vmem:[%s1525 + $0x30] sm:$0xf] %v1563
      %v1565 = vld [vmem:[%s1525 + $0x34] sm:$0x1]
      %v1566 = vsel %vm718, %v1500, %v1565
      %1567 = vst [vmem:[%s1525 + $0x34] sm:$0x1] %v1566
      %v1568 = vld [vmem:[%s1525 + $0x38] sm:$0xf]
      %v1569 = vsel %vm712, %v1507, %v1568
      %1570 = vst [vmem:[%s1525 + $0x38] sm:$0xf] %v1569
      %v1571 = vld [vmem:[%s1525 + $0x3c] sm:$0x1]
      %v1572 = vsel %vm718, %v1508, %v1571
      %1573 = vst [vmem:[%s1525 + $0x3c] sm:$0x1] %v1572
      %v1574 = vld [vmem:[#allocation5] sm:$0xf]
      %v1575 = vld [vmem:[#allocation5 + $0x8] sm:$0xf]
      %v1576 = vld [vmem:[#allocation5 + $0x10] sm:$0xf]
      %v1577 = vld [vmem:[#allocation5 + $0x18] sm:$0xf]
      %v1578 = vld [vmem:[#allocation5 + $0x20] sm:$0xf]
      %v1579 = vld [vmem:[#allocation5 + $0x28] sm:$0xf]
      %v1580 = vld [vmem:[#allocation5 + $0x30] sm:$0xf]
      %v1581 = vld [vmem:[#allocation5 + $0x38] sm:$0xf]
      %v1582 = vld [vmem:[%s6] sm:$0xf]
      %v1583 = vld [vmem:[%s6 + $0x4] sm:$0xf]
      %v1584 = vld [vmem:[%s6 + $0x8] sm:$0xf]
      %v1585 = vld [vmem:[%s6 + $0xc] sm:$0xf]
      %v1586 = vld [vmem:[%s6 + $0x10] sm:$0xf]
      %v1587 = vld [vmem:[%s6 + $0x14] sm:$0xf]
      %v1588 = vld [vmem:[%s6 + $0x18] sm:$0xf]
      %v1589 = vld [vmem:[%s6 + $0x1c] sm:$0xf]
      %v1590 = vld [vmem:[%s6 + $0x20] sm:$0xf]
      %v1591 = vld [vmem:[%s6 + $0x24] sm:$0xf]
      %v1592 = vld [vmem:[%s6 + $0x28] sm:$0xf]
      %v1593 = vld [vmem:[%s6 + $0x2c] sm:$0xf]
      %v1594 = vld [vmem:[%s6 + $0x30] sm:$0xf]
      %v1595 = vld [vmem:[%s6 + $0x34] sm:$0xf]
      %v1596 = vld [vmem:[%s6 + $0x38] sm:$0xf]
      %v1597 = vld [vmem:[%s6 + $0x3c] sm:$0xf]
      %v1598 = vld [vmem:[#allocation4] sm:$0xf]
      %v1599 = vld [vmem:[#allocation4 + $0x4] sm:$0x1]
      %v1600 = vld [vmem:[#allocation4 + $0x8] sm:$0xf]
      %v1601 = vld [vmem:[#allocation4 + $0xc] sm:$0x1]
      %v1602 = vld [vmem:[#allocation4 + $0x10] sm:$0xf]
      %v1603 = vld [vmem:[#allocation4 + $0x14] sm:$0x1]
      %v1604 = vld [vmem:[#allocation4 + $0x18] sm:$0xf]
      %v1605 = vld [vmem:[#allocation4 + $0x1c] sm:$0x1]
      %v1606 = vld [vmem:[#allocation4 + $0x20] sm:$0xf]
      %v1607 = vld [vmem:[#allocation4 + $0x24] sm:$0x1]
      %v1608 = vld [vmem:[#allocation4 + $0x28] sm:$0xf]
      %v1609 = vld [vmem:[#allocation4 + $0x2c] sm:$0x1]
      %v1610 = vld [vmem:[#allocation4 + $0x30] sm:$0xf]
      %v1611 = vld [vmem:[#allocation4 + $0x34] sm:$0x1]
      %v1612 = vld [vmem:[#allocation4 + $0x38] sm:$0xf]
      %v1613 = vld [vmem:[#allocation4 + $0x3c] sm:$0x1]
      %vm1614 = vsmask.f32 3328
      %vm1615 = vsmask.f32 7440
      %vm1616 = vmor %vm1614, %vm1615
      %v1618 = vshrl.u32 %v1598, 16
      %v1620 = vrot.slane %v1618, 4
      %v1621 = vshll.u32 %v1598, 16
      %v1623 = vrot.slane %v1621, 5
      %v1624 = vor.u32 %v1620, %v1623
      %v1625 = vrot.slane %v1624, 4
      %v1627 = vshll.u32 %v1599, 16
      %v1629 = vrot.slane %v1627, 5
      %v1630 = vsel %vm1616, %v1625, %v1629
      %v1632 = vshrl.u32 %v1600, 16
      %v1634 = vrot.slane %v1632, 4
      %v1635 = vshll.u32 %v1600, 16
      %v1637 = vrot.slane %v1635, 5
      %v1638 = vor.u32 %v1634, %v1637
      %v1639 = vrot.slane %v1638, 4
      %v1641 = vshll.u32 %v1601, 16
      %v1643 = vrot.slane %v1641, 5
      %v1644 = vsel %vm1616, %v1639, %v1643
      %v1646 = vshrl.u32 %v1602, 16
      %v1648 = vrot.slane %v1646, 4
      %v1649 = vshll.u32 %v1602, 16
      %v1651 = vrot.slane %v1649, 5
      %v1652 = vor.u32 %v1648, %v1651
      %v1653 = vrot.slane %v1652, 4
      %v1655 = vshll.u32 %v1603, 16
      %v1657 = vrot.slane %v1655, 5
      %v1658 = vsel %vm1616, %v1653, %v1657
      %v1660 = vshrl.u32 %v1604, 16
      %v1662 = vrot.slane %v1660, 4
      %v1663 = vshll.u32 %v1604, 16
      %v1665 = vrot.slane %v1663, 5
      %v1666 = vor.u32 %v1662, %v1665
      %v1667 = vrot.slane %v1666, 4
      %v1669 = vshll.u32 %v1605, 16
      %v1671 = vrot.slane %v1669, 5
      %v1672 = vsel %vm1616, %v1667, %v1671
      %v1674 = vshrl.u32 %v1606, 16
      %v1676 = vrot.slane %v1674, 4
      %v1677 = vshll.u32 %v1606, 16
      %v1679 = vrot.slane %v1677, 5
      %v1680 = vor.u32 %v1676, %v1679
      %v1681 = vrot.slane %v1680, 4
      %v1683 = vshll.u32 %v1607, 16
      %v1685 = vrot.slane %v1683, 5
      %v1686 = vsel %vm1616, %v1681, %v1685
      %v1688 = vshrl.u32 %v1608, 16
      %v1690 = vrot.slane %v1688, 4
      %v1691 = vshll.u32 %v1608, 16
      %v1693 = vrot.slane %v1691, 5
      %v1694 = vor.u32 %v1690, %v1693
      %v1695 = vrot.slane %v1694, 4
      %v1697 = vshll.u32 %v1609, 16
      %v1699 = vrot.slane %v1697, 5
      %v1700 = vsel %vm1616, %v1695, %v1699
      %v1702 = vshrl.u32 %v1610, 16
      %v1704 = vrot.slane %v1702, 4
      %v1705 = vshll.u32 %v1610, 16
      %v1707 = vrot.slane %v1705, 5
      %v1708 = vor.u32 %v1704, %v1707
      %v1709 = vrot.slane %v1708, 4
      %v1711 = vshll.u32 %v1611, 16
      %v1713 = vrot.slane %v1711, 5
      %v1714 = vsel %vm1616, %v1709, %v1713
      %v1716 = vshrl.u32 %v1612, 16
      %v1718 = vrot.slane %v1716, 4
      %v1719 = vshll.u32 %v1612, 16
      %v1721 = vrot.slane %v1719, 5
      %v1722 = vor.u32 %v1718, %v1721
      %v1723 = vrot.slane %v1722, 4
      %v1725 = vshll.u32 %v1613, 16
      %v1727 = vrot.slane %v1725, 5
      %v1728 = vsel %vm1616, %v1723, %v1727
      %s1729 = scalar_lea.vmem %s6, 64
      %v1730 = vld [vmem:[%s1729] sm:$0xf]
      %v1731 = vld [vmem:[%s1729 + $0x4] sm:$0xf]
      %v1732 = vld [vmem:[%s1729 + $0x8] sm:$0xf]
      %v1733 = vld [vmem:[%s1729 + $0xc] sm:$0xf]
      %v1734 = vld [vmem:[%s1729 + $0x10] sm:$0xf]
      %v1735 = vld [vmem:[%s1729 + $0x14] sm:$0xf]
      %v1736 = vld [vmem:[%s1729 + $0x18] sm:$0xf]
      %v1737 = vld [vmem:[%s1729 + $0x1c] sm:$0xf]
      %v1738 = vld [vmem:[%s1729 + $0x20] sm:$0xf]
      %v1739 = vld [vmem:[%s1729 + $0x24] sm:$0xf]
      %v1740 = vld [vmem:[%s1729 + $0x28] sm:$0xf]
      %v1741 = vld [vmem:[%s1729 + $0x2c] sm:$0xf]
      %v1742 = vld [vmem:[%s1729 + $0x30] sm:$0xf]
      %v1743 = vld [vmem:[%s1729 + $0x34] sm:$0xf]
      %v1744 = vld [vmem:[%s1729 + $0x38] sm:$0xf]
      %v1745 = vld [vmem:[%s1729 + $0x3c] sm:$0xf]
      %v1746 = vunpack.c.l.b16 %v1630
      %v1747 = vunpack.c.l.b16 %v1644
      %v1748 = vunpack.c.l.b16 %v1658
      %v1749 = vunpack.c.l.b16 %v1672
      %v1750 = vunpack.c.l.b16 %v1686
      %v1751 = vunpack.c.l.b16 %v1700
      %v1752 = vunpack.c.l.b16 %v1714
      %v1753 = vunpack.c.l.b16 %v1728
      %v1754 = vpack.c.b16 %v1747, %v1746
      %v1755 = vpack.c.b16 %v1749, %v1748
      %v1756 = vpack.c.b16 %v1751, %v1750
      %v1757 = vpack.c.b16 %v1753, %v1752
      %v1778 = vunpack.c.l.b16 %v1730
      %v1779 = vunpack.c.l.b16 %v1731
      %v1780 = vunpack.c.l.b16 %v1732
      %v1781 = vunpack.c.l.b16 %v1733
      %v1782 = vunpack.c.l.b16 %v1734
      %v1783 = vunpack.c.l.b16 %v1735
      %v1784 = vunpack.c.l.b16 %v1736
      %v1785 = vunpack.c.l.b16 %v1737
      %v1786 = vunpack.c.l.b16 %v1738
      %v1787 = vunpack.c.l.b16 %v1739
      %v1788 = vunpack.c.l.b16 %v1740
      %v1789 = vunpack.c.l.b16 %v1741
      %v1790 = vunpack.c.l.b16 %v1742
      %v1791 = vunpack.c.l.b16 %v1743
      %v1792 = vunpack.c.l.b16 %v1744
      %v1793 = vunpack.c.l.b16 %v1745
      %v1794 = vpack.c.b16 %v1779, %v1778
      %v1795 = vpack.c.b16 %v1781, %v1780
      %v1796 = vpack.c.b16 %v1783, %v1782
      %v1797 = vpack.c.b16 %v1785, %v1784
      %v1798 = vpack.c.b16 %v1787, %v1786
      %v1799 = vpack.c.b16 %v1789, %v1788
      %v1800 = vpack.c.b16 %v1791, %v1790
      %v1801 = vpack.c.b16 %v1793, %v1792
      %1810 = vmatprep.subr.bf16.mxu0 0
      %1811 = vmatpush1.bf16.msra.mxu0 %v1801
      %1812 = vmatprep.subr.bf16.mxu0 0
      %1813 = vmatpush1.bf16.msra.mxu0 %v1800
      %1814 = vmatprep.subr.bf16.mxu0 0
      %1815 = vmatpush1.bf16.msra.mxu0 %v1799
      %1816 = vmatprep.subr.bf16.mxu0 0
      %1817 = vmatpush1.bf16.msra.mxu0 %v1798
      %1818 = vmatprep.subr.bf16.mxu0 0
      %1819 = vmatpush1.bf16.msra.mxu0 %v1797
      %1820 = vmatprep.subr.bf16.mxu0 0
      %1821 = vmatpush1.bf16.msra.mxu0 %v1796
      %1822 = vmatprep.subr.bf16.mxu0 0
      %1823 = vmatpush1.bf16.msra.mxu0 %v1795
      %1824 = vmatprep.subr.bf16.mxu0 0
      %1825 = vmatpush1.bf16.msra.mxu0 %v1794
      %1826 = vmatprep.subr.bf16.mxu0 0
      %1827 = vmatpush2.bf16.msra.mxu0 0
      %1828 = vmatprep.subr.bf16.mxu0 0
      %1829 = vmatpush2.bf16.msra.mxu0 0
      %1830 = vmatprep.subr.bf16.mxu0 0
      %1831 = vmatpush2.bf16.msra.mxu0 0
      %1832 = vmatprep.subr.bf16.mxu0 0
      %1833 = vmatpush2.bf16.msra.mxu0 0
      %1834 = vmatprep.subr.bf16.mxu0 0
      %1835 = vmatpush2.bf16.msra.mxu0 0
      %1836 = vmatprep.subr.bf16.mxu0 0
      %1837 = vmatpush2.bf16.msra.mxu0 0
      %1838 = vmatprep.subr.bf16.mxu0 0
      %1839 = vmatpush2.bf16.msra.mxu0 0
      %1840 = vmatprep.subr.bf16.mxu0 0
      %1841 = vmatpush2.bf16.msra.mxu0 0
      %1842 = vmatprep.mubr.bf16.mxu0 0
      %1843 = vmatmul.mubr.bf16.gmra.mxu0 %v1754
      %v1844 = vpop.f32.mrf.mxu0
      %v1845 = vadd.f32 0.0, %v1844
      %v1846 = vpop.f32.mrf.mxu0
      %v1847 = vpop.f32.mrf.mxu0
      %v1848 = vadd.f32 0.0, %v1847
      %v1849 = vpop.f32.mrf.mxu0
      %1850 = vmatprep.mubr.bf16.mxu0 0
      %1851 = vmatmul.mubr.bf16.gmra.mxu0 %v1755
      %v1852 = vpop.f32.mrf.mxu0
      %v1853 = vadd.f32 0.0, %v1852
      %v1854 = vpop.f32.mrf.mxu0
      %v1855 = vpop.f32.mrf.mxu0
      %v1856 = vadd.f32 0.0, %v1855
      %v1857 = vpop.f32.mrf.mxu0
      %1858 = vmatprep.mubr.bf16.mxu0 0
      %1859 = vmatmul.mubr.bf16.gmra.mxu0 %v1756
      %v1860 = vpop.f32.mrf.mxu0
      %v1861 = vadd.f32 0.0, %v1860
      %v1862 = vpop.f32.mrf.mxu0
      %v1863 = vpop.f32.mrf.mxu0
      %v1864 = vadd.f32 0.0, %v1863
      %v1865 = vpop.f32.mrf.mxu0
      %1866 = vmatprep.mubr.bf16.mxu0 0
      %1867 = vmatmul.mubr.bf16.gmra.mxu0 %v1757
      %v1868 = vpop.f32.mrf.mxu0
      %v1869 = vadd.f32 0.0, %v1868
      %v1870 = vpop.f32.mrf.mxu0
      %v1871 = vpop.f32.mrf.mxu0
      %v1872 = vadd.f32 0.0, %v1871
      %v1873 = vpop.f32.mrf.mxu0
      %1874 = vdwg.mxu0
      %v1883 = vunpack.c.l.b16 %v1574
      %v1884 = vunpack.c.l.b16 %v1575
      %v1885 = vunpack.c.l.b16 %v1576
      %v1886 = vunpack.c.l.b16 %v1577
      %v1887 = vunpack.c.l.b16 %v1578
      %v1888 = vunpack.c.l.b16 %v1579
      %v1889 = vunpack.c.l.b16 %v1580
      %v1890 = vunpack.c.l.b16 %v1581
      %v1891 = vpack.c.b16 %v1884, %v1883
      %v1892 = vpack.c.b16 %v1886, %v1885
      %v1893 = vpack.c.b16 %v1888, %v1887
      %v1894 = vpack.c.b16 %v1890, %v1889
      %v1915 = vunpack.c.l.b16 %v1582
      %v1916 = vunpack.c.l.b16 %v1583
      %v1917 = vunpack.c.l.b16 %v1584
      %v1918 = vunpack.c.l.b16 %v1585
      %v1919 = vunpack.c.l.b16 %v1586
      %v1920 = vunpack.c.l.b16 %v1587
      %v1921 = vunpack.c.l.b16 %v1588
      %v1922 = vunpack.c.l.b16 %v1589
      %v1923 = vunpack.c.l.b16 %v1590
      %v1924 = vunpack.c.l.b16 %v1591
      %v1925 = vunpack.c.l.b16 %v1592
      %v1926 = vunpack.c.l.b16 %v1593
      %v1927 = vunpack.c.l.b16 %v1594
      %v1928 = vunpack.c.l.b16 %v1595
      %v1929 = vunpack.c.l.b16 %v1596
      %v1930 = vunpack.c.l.b16 %v1597
      %v1931 = vpack.c.b16 %v1916, %v1915
      %v1932 = vpack.c.b16 %v1918, %v1917
      %v1933 = vpack.c.b16 %v1920, %v1919
      %v1934 = vpack.c.b16 %v1922, %v1921
      %v1935 = vpack.c.b16 %v1924, %v1923
      %v1936 = vpack.c.b16 %v1926, %v1925
      %v1937 = vpack.c.b16 %v1928, %v1927
      %v1938 = vpack.c.b16 %v1930, %v1929
      %1947 = vmatprep.subr.bf16.mxu0 0
      %1948 = vmatpush1.bf16.msra.mxu0 %v1938
      %1949 = vmatprep.subr.bf16.mxu0 0
      %1950 = vmatpush1.bf16.msra.mxu0 %v1937
      %1951 = vmatprep.subr.bf16.mxu0 0
      %1952 = vmatpush1.bf16.msra.mxu0 %v1936
      %1953 = vmatprep.subr.bf16.mxu0 0
      %1954 = vmatpush1.bf16.msra.mxu0 %v1935
      %1955 = vmatprep.subr.bf16.mxu0 0
      %1956 = vmatpush1.bf16.msra.mxu0 %v1934
      %1957 = vmatprep.subr.bf16.mxu0 0
      %1958 = vmatpush1.bf16.msra.mxu0 %v1933
      %1959 = vmatprep.subr.bf16.mxu0 0
      %1960 = vmatpush1.bf16.msra.mxu0 %v1932
      %1961 = vmatprep.subr.bf16.mxu0 0
      %1962 = vmatpush1.bf16.msra.mxu0 %v1931
      %1963 = vmatprep.subr.bf16.mxu0 0
      %1964 = vmatpush2.bf16.msra.mxu0 0
      %1965 = vmatprep.subr.bf16.mxu0 0
      %1966 = vmatpush2.bf16.msra.mxu0 0
      %1967 = vmatprep.subr.bf16.mxu0 0
      %1968 = vmatpush2.bf16.msra.mxu0 0
      %1969 = vmatprep.subr.bf16.mxu0 0
      %1970 = vmatpush2.bf16.msra.mxu0 0
      %1971 = vmatprep.subr.bf16.mxu0 0
      %1972 = vmatpush2.bf16.msra.mxu0 0
      %1973 = vmatprep.subr.bf16.mxu0 0
      %1974 = vmatpush2.bf16.msra.mxu0 0
      %1975 = vmatprep.subr.bf16.mxu0 0
      %1976 = vmatpush2.bf16.msra.mxu0 0
      %1977 = vmatprep.subr.bf16.mxu0 0
      %1978 = vmatpush2.bf16.msra.mxu0 0
      %1979 = vmatprep.mubr.bf16.mxu0 0
      %1980 = vmatmul.mubr.bf16.gmra.mxu0 %v1891
      %v1981 = vpop.f32.mrf.mxu0
      %v1982 = vadd.f32 %v1845, %v1981
      %v1983 = vpop.f32.mrf.mxu0
      %v1984 = vpop.f32.mrf.mxu0
      %v1985 = vadd.f32 %v1848, %v1984
      %v1986 = vpop.f32.mrf.mxu0
      %1987 = vmatprep.mubr.bf16.mxu0 0
      %1988 = vmatmul.mubr.bf16.gmra.mxu0 %v1892
      %v1989 = vpop.f32.mrf.mxu0
      %v1990 = vadd.f32 %v1853, %v1989
      %v1991 = vpop.f32.mrf.mxu0
      %v1992 = vpop.f32.mrf.mxu0
      %v1993 = vadd.f32 %v1856, %v1992
      %v1994 = vpop.f32.mrf.mxu0
      %1995 = vmatprep.mubr.bf16.mxu0 0
      %1996 = vmatmul.mubr.bf16.gmra.mxu0 %v1893
      %v1997 = vpop.f32.mrf.mxu0
      %v1998 = vadd.f32 %v1861, %v1997
      %v1999 = vpop.f32.mrf.mxu0
      %v2000 = vpop.f32.mrf.mxu0
      %v2001 = vadd.f32 %v1864, %v2000
      %v2002 = vpop.f32.mrf.mxu0
      %2003 = vmatprep.mubr.bf16.mxu0 0
      %2004 = vmatmul.mubr.bf16.gmra.mxu0 %v1894
      %v2005 = vpop.f32.mrf.mxu0
      %v2006 = vadd.f32 %v1869, %v2005
      %v2007 = vpop.f32.mrf.mxu0
      %v2008 = vpop.f32.mrf.mxu0
      %v2009 = vadd.f32 %v1872, %v2008
      %v2010 = vpop.f32.mrf.mxu0
      %2011 = vdwg.mxu0
      %v2012 = vld [vmem:[#allocation5] sm:$0xf]
      %v2013 = vld [vmem:[#allocation5 + $0x4] sm:$0x1]
      %v2014 = vld [vmem:[#allocation5 + $0x8] sm:$0xf]
      %v2015 = vld [vmem:[#allocation5 + $0xc] sm:$0x1]
      %v2016 = vld [vmem:[#allocation5 + $0x10] sm:$0xf]
      %v2017 = vld [vmem:[#allocation5 + $0x14] sm:$0x1]
      %v2018 = vld [vmem:[#allocation5 + $0x18] sm:$0xf]
      %v2019 = vld [vmem:[#allocation5 + $0x1c] sm:$0x1]
      %v2020 = vld [vmem:[#allocation5 + $0x20] sm:$0xf]
      %v2021 = vld [vmem:[#allocation5 + $0x24] sm:$0x1]
      %v2022 = vld [vmem:[#allocation5 + $0x28] sm:$0xf]
      %v2023 = vld [vmem:[#allocation5 + $0x2c] sm:$0x1]
      %v2024 = vld [vmem:[#allocation5 + $0x30] sm:$0xf]
      %v2025 = vld [vmem:[#allocation5 + $0x34] sm:$0x1]
      %v2026 = vld [vmem:[#allocation5 + $0x38] sm:$0xf]
      %v2027 = vld [vmem:[#allocation5 + $0x3c] sm:$0x1]
      %v2029 = vshrl.u32 %v2012, 16
      %v2031 = vrot.slane %v2029, 4
      %v2032 = vshll.u32 %v2012, 16
      %v2034 = vrot.slane %v2032, 5
      %v2035 = vor.u32 %v2031, %v2034
      %v2036 = vrot.slane %v2035, 4
      %v2038 = vshll.u32 %v2013, 16
      %v2040 = vrot.slane %v2038, 5
      %v2041 = vsel %vm1616, %v2036, %v2040
      %v2043 = vshrl.u32 %v2014, 16
      %v2045 = vrot.slane %v2043, 4
      %v2046 = vshll.u32 %v2014, 16
      %v2048 = vrot.slane %v2046, 5
      %v2049 = vor.u32 %v2045, %v2048
      %v2050 = vrot.slane %v2049, 4
      %v2052 = vshll.u32 %v2015, 16
      %v2054 = vrot.slane %v2052, 5
      %v2055 = vsel %vm1616, %v2050, %v2054
      %v2057 = vshrl.u32 %v2016, 16
      %v2059 = vrot.slane %v2057, 4
      %v2060 = vshll.u32 %v2016, 16
      %v2062 = vrot.slane %v2060, 5
      %v2063 = vor.u32 %v2059, %v2062
      %v2064 = vrot.slane %v2063, 4
      %v2066 = vshll.u32 %v2017, 16
      %v2068 = vrot.slane %v2066, 5
      %v2069 = vsel %vm1616, %v2064, %v2068
      %v2071 = vshrl.u32 %v2018, 16
      %v2073 = vrot.slane %v2071, 4
      %v2074 = vshll.u32 %v2018, 16
      %v2076 = vrot.slane %v2074, 5
      %v2077 = vor.u32 %v2073, %v2076
      %v2078 = vrot.slane %v2077, 4
      %v2080 = vshll.u32 %v2019, 16
      %v2082 = vrot.slane %v2080, 5
      %v2083 = vsel %vm1616, %v2078, %v2082
      %v2085 = vshrl.u32 %v2020, 16
      %v2087 = vrot.slane %v2085, 4
      %v2088 = vshll.u32 %v2020, 16
      %v2090 = vrot.slane %v2088, 5
      %v2091 = vor.u32 %v2087, %v2090
      %v2092 = vrot.slane %v2091, 4
      %v2094 = vshll.u32 %v2021, 16
      %v2096 = vrot.slane %v2094, 5
      %v2097 = vsel %vm1616, %v2092, %v2096
      %v2099 = vshrl.u32 %v2022, 16
      %v2101 = vrot.slane %v2099, 4
      %v2102 = vshll.u32 %v2022, 16
      %v2104 = vrot.slane %v2102, 5
      %v2105 = vor.u32 %v2101, %v2104
      %v2106 = vrot.slane %v2105, 4
      %v2108 = vshll.u32 %v2023, 16
      %v2110 = vrot.slane %v2108, 5
      %v2111 = vsel %vm1616, %v2106, %v2110
      %v2113 = vshrl.u32 %v2024, 16
      %v2115 = vrot.slane %v2113, 4
      %v2116 = vshll.u32 %v2024, 16
      %v2118 = vrot.slane %v2116, 5
      %v2119 = vor.u32 %v2115, %v2118
      %v2120 = vrot.slane %v2119, 4
      %v2122 = vshll.u32 %v2025, 16
      %v2124 = vrot.slane %v2122, 5
      %v2125 = vsel %vm1616, %v2120, %v2124
      %v2127 = vshrl.u32 %v2026, 16
      %v2129 = vrot.slane %v2127, 4
      %v2130 = vshll.u32 %v2026, 16
      %v2132 = vrot.slane %v2130, 5
      %v2133 = vor.u32 %v2129, %v2132
      %v2134 = vrot.slane %v2133, 4
      %v2136 = vshll.u32 %v2027, 16
      %v2138 = vrot.slane %v2136, 5
      %v2139 = vsel %vm1616, %v2134, %v2138
      %s2140 = scalar_lea.vmem %s6, 128
      %v2141 = vld [vmem:[%s2140] sm:$0xf]
      %v2142 = vld [vmem:[%s2140 + $0x4] sm:$0xf]
      %v2143 = vld [vmem:[%s2140 + $0x8] sm:$0xf]
      %v2144 = vld [vmem:[%s2140 + $0xc] sm:$0xf]
      %v2145 = vld [vmem:[%s2140 + $0x10] sm:$0xf]
      %v2146 = vld [vmem:[%s2140 + $0x14] sm:$0xf]
      %v2147 = vld [vmem:[%s2140 + $0x18] sm:$0xf]
      %v2148 = vld [vmem:[%s2140 + $0x1c] sm:$0xf]
      %v2149 = vld [vmem:[%s2140 + $0x20] sm:$0xf]
      %v2150 = vld [vmem:[%s2140 + $0x24] sm:$0xf]
      %v2151 = vld [vmem:[%s2140 + $0x28] sm:$0xf]
      %v2152 = vld [vmem:[%s2140 + $0x2c] sm:$0xf]
      %v2153 = vld [vmem:[%s2140 + $0x30] sm:$0xf]
      %v2154 = vld [vmem:[%s2140 + $0x34] sm:$0xf]
      %v2155 = vld [vmem:[%s2140 + $0x38] sm:$0xf]
      %v2156 = vld [vmem:[%s2140 + $0x3c] sm:$0xf]
      %v2157 = vunpack.c.l.b16 %v2041
      %v2158 = vunpack.c.l.b16 %v2055
      %v2159 = vunpack.c.l.b16 %v2069
      %v2160 = vunpack.c.l.b16 %v2083
      %v2161 = vunpack.c.l.b16 %v2097
      %v2162 = vunpack.c.l.b16 %v2111
      %v2163 = vunpack.c.l.b16 %v2125
      %v2164 = vunpack.c.l.b16 %v2139
      %v2165 = vpack.c.b16 %v2158, %v2157
      %v2166 = vpack.c.b16 %v2160, %v2159
      %v2167 = vpack.c.b16 %v2162, %v2161
      %v2168 = vpack.c.b16 %v2164, %v2163
      %v2189 = vunpack.c.l.b16 %v2141
      %v2190 = vunpack.c.l.b16 %v2142
      %v2191 = vunpack.c.l.b16 %v2143
      %v2192 = vunpack.c.l.b16 %v2144
      %v2193 = vunpack.c.l.b16 %v2145
      %v2194 = vunpack.c.l.b16 %v2146
      %v2195 = vunpack.c.l.b16 %v2147
      %v2196 = vunpack.c.l.b16 %v2148
      %v2197 = vunpack.c.l.b16 %v2149
      %v2198 = vunpack.c.l.b16 %v2150
      %v2199 = vunpack.c.l.b16 %v2151
      %v2200 = vunpack.c.l.b16 %v2152
      %v2201 = vunpack.c.l.b16 %v2153
      %v2202 = vunpack.c.l.b16 %v2154
      %v2203 = vunpack.c.l.b16 %v2155
      %v2204 = vunpack.c.l.b16 %v2156
      %v2205 = vpack.c.b16 %v2190, %v2189
      %v2206 = vpack.c.b16 %v2192, %v2191
      %v2207 = vpack.c.b16 %v2194, %v2193
      %v2208 = vpack.c.b16 %v2196, %v2195
      %v2209 = vpack.c.b16 %v2198, %v2197
      %v2210 = vpack.c.b16 %v2200, %v2199
      %v2211 = vpack.c.b16 %v2202, %v2201
      %v2212 = vpack.c.b16 %v2204, %v2203
      %2221 = vmatprep.subr.bf16.mxu0 0
      %2222 = vmatpush1.bf16.msra.mxu0 %v2212
      %2223 = vmatprep.subr.bf16.mxu0 0
      %2224 = vmatpush1.bf16.msra.mxu0 %v2211
      %2225 = vmatprep.subr.bf16.mxu0 0
      %2226 = vmatpush1.bf16.msra.mxu0 %v2210
      %2227 = vmatprep.subr.bf16.mxu0 0
      %2228 = vmatpush1.bf16.msra.mxu0 %v2209
      %2229 = vmatprep.subr.bf16.mxu0 0
      %2230 = vmatpush1.bf16.msra.mxu0 %v2208
      %2231 = vmatprep.subr.bf16.mxu0 0
      %2232 = vmatpush1.bf16.msra.mxu0 %v2207
      %2233 = vmatprep.subr.bf16.mxu0 0
      %2234 = vmatpush1.bf16.msra.mxu0 %v2206
      %2235 = vmatprep.subr.bf16.mxu0 0
      %2236 = vmatpush1.bf16.msra.mxu0 %v2205
      %2237 = vmatprep.subr.bf16.mxu0 0
      %2238 = vmatpush2.bf16.msra.mxu0 0
      %2239 = vmatprep.subr.bf16.mxu0 0
      %2240 = vmatpush2.bf16.msra.mxu0 0
      %2241 = vmatprep.subr.bf16.mxu0 0
      %2242 = vmatpush2.bf16.msra.mxu0 0
      %2243 = vmatprep.subr.bf16.mxu0 0
      %2244 = vmatpush2.bf16.msra.mxu0 0
      %2245 = vmatprep.subr.bf16.mxu0 0
      %2246 = vmatpush2.bf16.msra.mxu0 0
      %2247 = vmatprep.subr.bf16.mxu0 0
      %2248 = vmatpush2.bf16.msra.mxu0 0
      %2249 = vmatprep.subr.bf16.mxu0 0
      %2250 = vmatpush2.bf16.msra.mxu0 0
      %2251 = vmatprep.subr.bf16.mxu0 0
      %2252 = vmatpush2.bf16.msra.mxu0 0
      %2253 = vmatprep.mubr.bf16.mxu0 0
      %2254 = vmatmul.mubr.bf16.gmra.mxu0 %v2165
      %v2255 = vpop.f32.mrf.mxu0
      %v2256 = vadd.f32 0.0, %v2255
      %v2257 = vpop.f32.mrf.mxu0
      %v2258 = vpop.f32.mrf.mxu0
      %v2259 = vadd.f32 0.0, %v2258
      %v2260 = vpop.f32.mrf.mxu0
      %2261 = vmatprep.mubr.bf16.mxu0 0
      %2262 = vmatmul.mubr.bf16.gmra.mxu0 %v2166
      %v2263 = vpop.f32.mrf.mxu0
      %v2264 = vadd.f32 0.0, %v2263
      %v2265 = vpop.f32.mrf.mxu0
      %v2266 = vpop.f32.mrf.mxu0
      %v2267 = vadd.f32 0.0, %v2266
      %v2268 = vpop.f32.mrf.mxu0
      %2269 = vmatprep.mubr.bf16.mxu0 0
      %2270 = vmatmul.mubr.bf16.gmra.mxu0 %v2167
      %v2271 = vpop.f32.mrf.mxu0
      %v2272 = vadd.f32 0.0, %v2271
      %v2273 = vpop.f32.mrf.mxu0
      %v2274 = vpop.f32.mrf.mxu0
      %v2275 = vadd.f32 0.0, %v2274
      %v2276 = vpop.f32.mrf.mxu0
      %2277 = vmatprep.mubr.bf16.mxu0 0
      %2278 = vmatmul.mubr.bf16.gmra.mxu0 %v2168
      %v2279 = vpop.f32.mrf.mxu0
      %v2280 = vadd.f32 0.0, %v2279
      %v2281 = vpop.f32.mrf.mxu0
      %v2282 = vpop.f32.mrf.mxu0
      %v2283 = vadd.f32 0.0, %v2282
      %v2284 = vpop.f32.mrf.mxu0
      %2285 = vdwg.mxu0
      %v2286 = vadd.f32 %v1982, %v2256
      %v2287 = vadd.f32 %v1985, %v2259
      %v2288 = vadd.f32 %v1990, %v2264
      %v2289 = vadd.f32 %v1993, %v2267
      %v2290 = vadd.f32 %v1998, %v2272
      %v2291 = vadd.f32 %v2001, %v2275
      %v2292 = vadd.f32 %v2006, %v2280
      %v2293 = vadd.f32 %v2009, %v2283
      %v2294 = vld [vmem:[%s985] sm:$0xf]
      %v2295 = vld [vmem:[%s985 + $0x8] sm:$0xf]
      %v2296 = vld [vmem:[%s985 + $0x10] sm:$0xf]
      %v2297 = vld [vmem:[%s985 + $0x18] sm:$0xf]
      %v2298 = vld [vmem:[%s985 + $0x20] sm:$0xf]
      %v2299 = vld [vmem:[%s985 + $0x28] sm:$0xf]
      %v2300 = vld [vmem:[%s985 + $0x30] sm:$0xf]
      %v2301 = vld [vmem:[%s985 + $0x38] sm:$0xf]
      %s2302 = scalar_lea.vmem %s6, 192
      %v2303 = vld [vmem:[%s2302] sm:$0xf]
      %v2304 = vld [vmem:[%s2302 + $0x4] sm:$0xf]
      %v2305 = vld [vmem:[%s2302 + $0x8] sm:$0xf]
      %v2306 = vld [vmem:[%s2302 + $0xc] sm:$0xf]
      %v2307 = vld [vmem:[%s2302 + $0x10] sm:$0xf]
      %v2308 = vld [vmem:[%s2302 + $0x14] sm:$0xf]
      %v2309 = vld [vmem:[%s2302 + $0x18] sm:$0xf]
      %v2310 = vld [vmem:[%s2302 + $0x1c] sm:$0xf]
      %v2311 = vld [vmem:[%s2302 + $0x20] sm:$0xf]
      %v2312 = vld [vmem:[%s2302 + $0x24] sm:$0xf]
      %v2313 = vld [vmem:[%s2302 + $0x28] sm:$0xf]
      %v2314 = vld [vmem:[%s2302 + $0x2c] sm:$0xf]
      %v2315 = vld [vmem:[%s2302 + $0x30] sm:$0xf]
      %v2316 = vld [vmem:[%s2302 + $0x34] sm:$0xf]
      %v2317 = vld [vmem:[%s2302 + $0x38] sm:$0xf]
      %v2318 = vld [vmem:[%s2302 + $0x3c] sm:$0xf]
      %v2327 = vunpack.c.l.b16 %v2294
      %v2328 = vunpack.c.l.b16 %v2295
      %v2329 = vunpack.c.l.b16 %v2296
      %v2330 = vunpack.c.l.b16 %v2297
      %v2331 = vunpack.c.l.b16 %v2298
      %v2332 = vunpack.c.l.b16 %v2299
      %v2333 = vunpack.c.l.b16 %v2300
      %v2334 = vunpack.c.l.b16 %v2301
      %v2335 = vpack.c.b16 %v2328, %v2327
      %v2336 = vpack.c.b16 %v2330, %v2329
      %v2337 = vpack.c.b16 %v2332, %v2331
      %v2338 = vpack.c.b16 %v2334, %v2333
      %v2359 = vunpack.c.l.b16 %v2303
      %v2360 = vunpack.c.l.b16 %v2304
      %v2361 = vunpack.c.l.b16 %v2305
      %v2362 = vunpack.c.l.b16 %v2306
      %v2363 = vunpack.c.l.b16 %v2307
      %v2364 = vunpack.c.l.b16 %v2308
      %v2365 = vunpack.c.l.b16 %v2309
      %v2366 = vunpack.c.l.b16 %v2310
      %v2367 = vunpack.c.l.b16 %v2311
      %v2368 = vunpack.c.l.b16 %v2312
      %v2369 = vunpack.c.l.b16 %v2313
      %v2370 = vunpack.c.l.b16 %v2314
      %v2371 = vunpack.c.l.b16 %v2315
      %v2372 = vunpack.c.l.b16 %v2316
      %v2373 = vunpack.c.l.b16 %v2317
      %v2374 = vunpack.c.l.b16 %v2318
      %v2375 = vpack.c.b16 %v2360, %v2359
      %v2376 = vpack.c.b16 %v2362, %v2361
      %v2377 = vpack.c.b16 %v2364, %v2363
      %v2378 = vpack.c.b16 %v2366, %v2365
      %v2379 = vpack.c.b16 %v2368, %v2367
      %v2380 = vpack.c.b16 %v2370, %v2369
      %v2381 = vpack.c.b16 %v2372, %v2371
      %v2382 = vpack.c.b16 %v2374, %v2373
      %2391 = vmatprep.subr.bf16.mxu0 0
      %2392 = vmatpush1.bf16.msra.mxu0 %v2382
      %2393 = vmatprep.subr.bf16.mxu0 0
      %2394 = vmatpush1.bf16.msra.mxu0 %v2381
      %2395 = vmatprep.subr.bf16.mxu0 0
      %2396 = vmatpush1.bf16.msra.mxu0 %v2380
      %2397 = vmatprep.subr.bf16.mxu0 0
      %2398 = vmatpush1.bf16.msra.mxu0 %v2379
      %2399 = vmatprep.subr.bf16.mxu0 0
      %2400 = vmatpush1.bf16.msra.mxu0 %v2378
      %2401 = vmatprep.subr.bf16.mxu0 0
      %2402 = vmatpush1.bf16.msra.mxu0 %v2377
      %2403 = vmatprep.subr.bf16.mxu0 0
      %2404 = vmatpush1.bf16.msra.mxu0 %v2376
      %2405 = vmatprep.subr.bf16.mxu0 0
      %2406 = vmatpush1.bf16.msra.mxu0 %v2375
      %2407 = vmatprep.subr.bf16.mxu0 0
      %2408 = vmatpush2.bf16.msra.mxu0 0
      %2409 = vmatprep.subr.bf16.mxu0 0
      %2410 = vmatpush2.bf16.msra.mxu0 0
      %2411 = vmatprep.subr.bf16.mxu0 0
      %2412 = vmatpush2.bf16.msra.mxu0 0
      %2413 = vmatprep.subr.bf16.mxu0 0
      %2414 = vmatpush2.bf16.msra.mxu0 0
      %2415 = vmatprep.subr.bf16.mxu0 0
      %2416 = vmatpush2.bf16.msra.mxu0 0
      %2417 = vmatprep.subr.bf16.mxu0 0
      %2418 = vmatpush2.bf16.msra.mxu0 0
      %2419 = vmatprep.subr.bf16.mxu0 0
      %2420 = vmatpush2.bf16.msra.mxu0 0
      %2421 = vmatprep.subr.bf16.mxu0 0
      %2422 = vmatpush2.bf16.msra.mxu0 0
      %2423 = vmatprep.mubr.bf16.mxu0 0
      %2424 = vmatmul.mubr.bf16.gmra.mxu0 %v2335
      %v2425 = vpop.f32.mrf.mxu0
      %v2426 = vadd.f32 0.0, %v2425
      %v2427 = vpop.f32.mrf.mxu0
      %v2428 = vpop.f32.mrf.mxu0
      %v2429 = vadd.f32 0.0, %v2428
      %v2430 = vpop.f32.mrf.mxu0
      %2431 = vmatprep.mubr.bf16.mxu0 0
      %2432 = vmatmul.mubr.bf16.gmra.mxu0 %v2336
      %v2433 = vpop.f32.mrf.mxu0
      %v2434 = vadd.f32 0.0, %v2433
      %v2435 = vpop.f32.mrf.mxu0
      %v2436 = vpop.f32.mrf.mxu0
      %v2437 = vadd.f32 0.0, %v2436
      %v2438 = vpop.f32.mrf.mxu0
      %2439 = vmatprep.mubr.bf16.mxu0 0
      %2440 = vmatmul.mubr.bf16.gmra.mxu0 %v2337
      %v2441 = vpop.f32.mrf.mxu0
      %v2442 = vadd.f32 0.0, %v2441
      %v2443 = vpop.f32.mrf.mxu0
      %v2444 = vpop.f32.mrf.mxu0
      %v2445 = vadd.f32 0.0, %v2444
      %v2446 = vpop.f32.mrf.mxu0
      %2447 = vmatprep.mubr.bf16.mxu0 0
      %2448 = vmatmul.mubr.bf16.gmra.mxu0 %v2338
      %v2449 = vpop.f32.mrf.mxu0
      %v2450 = vadd.f32 0.0, %v2449
      %v2451 = vpop.f32.mrf.mxu0
      %v2452 = vpop.f32.mrf.mxu0
      %v2453 = vadd.f32 0.0, %v2452
      %v2454 = vpop.f32.mrf.mxu0
      %2455 = vdwg.mxu0
      %v2456 = vadd.f32 %v2286, %v2426
      %v2457 = vadd.f32 %v2287, %v2429
      %v2458 = vadd.f32 %v2288, %v2434
      %v2459 = vadd.f32 %v2289, %v2437
      %v2460 = vadd.f32 %v2290, %v2442
      %v2461 = vadd.f32 %v2291, %v2445
      %v2462 = vadd.f32 %v2292, %v2450
      %v2463 = vadd.f32 %v2293, %v2453
      %v2464 = vld [vmem:[%s709] sm:$0xf]
      %v2465 = vld [vmem:[%s709 + $0x4] sm:$0x1]
      %v2466 = vld [vmem:[%s709 + $0x8] sm:$0xf]
      %v2467 = vld [vmem:[%s709 + $0xc] sm:$0x1]
      %v2468 = vld [vmem:[%s709 + $0x10] sm:$0xf]
      %v2469 = vld [vmem:[%s709 + $0x14] sm:$0x1]
      %v2470 = vld [vmem:[%s709 + $0x18] sm:$0xf]
      %v2471 = vld [vmem:[%s709 + $0x1c] sm:$0x1]
      %v2472 = vld [vmem:[%s709 + $0x20] sm:$0xf]
      %v2473 = vld [vmem:[%s709 + $0x24] sm:$0x1]
      %v2474 = vld [vmem:[%s709 + $0x28] sm:$0xf]
      %v2475 = vld [vmem:[%s709 + $0x2c] sm:$0x1]
      %v2476 = vld [vmem:[%s709 + $0x30] sm:$0xf]
      %v2477 = vld [vmem:[%s709 + $0x34] sm:$0x1]
      %v2478 = vld [vmem:[%s709 + $0x38] sm:$0xf]
      %v2479 = vld [vmem:[%s709 + $0x3c] sm:$0x1]
      %v2481 = vshrl.u32 %v2464, 16
      %v2483 = vrot.slane %v2481, 4
      %v2484 = vshll.u32 %v2464, 16
      %v2486 = vrot.slane %v2484, 5
      %v2487 = vor.u32 %v2483, %v2486
      %v2488 = vrot.slane %v2487, 4
      %v2490 = vshll.u32 %v2465, 16
      %v2492 = vrot.slane %v2490, 5
      %v2493 = vsel %vm1616, %v2488, %v2492
      %v2495 = vshrl.u32 %v2466, 16
      %v2497 = vrot.slane %v2495, 4
      %v2498 = vshll.u32 %v2466, 16
      %v2500 = vrot.slane %v2498, 5
      %v2501 = vor.u32 %v2497, %v2500
      %v2502 = vrot.slane %v2501, 4
      %v2504 = vshll.u32 %v2467, 16
      %v2506 = vrot.slane %v2504, 5
      %v2507 = vsel %vm1616, %v2502, %v2506
      %v2509 = vshrl.u32 %v2468, 16
      %v2511 = vrot.slane %v2509, 4
      %v2512 = vshll.u32 %v2468, 16
      %v2514 = vrot.slane %v2512, 5
      %v2515 = vor.u32 %v2511, %v2514
      %v2516 = vrot.slane %v2515, 4
      %v2518 = vshll.u32 %v2469, 16
      %v2520 = vrot.slane %v2518, 5
      %v2521 = vsel %vm1616, %v2516, %v2520
      %v2523 = vshrl.u32 %v2470, 16
      %v2525 = vrot.slane %v2523, 4
      %v2526 = vshll.u32 %v2470, 16
      %v2528 = vrot.slane %v2526, 5
      %v2529 = vor.u32 %v2525, %v2528
      %v2530 = vrot.slane %v2529, 4
      %v2532 = vshll.u32 %v2471, 16
      %v2534 = vrot.slane %v2532, 5
      %v2535 = vsel %vm1616, %v2530, %v2534
      %v2537 = vshrl.u32 %v2472, 16
      %v2539 = vrot.slane %v2537, 4
      %v2540 = vshll.u32 %v2472, 16
      %v2542 = vrot.slane %v2540, 5
      %v2543 = vor.u32 %v2539, %v2542
      %v2544 = vrot.slane %v2543, 4
      %v2546 = vshll.u32 %v2473, 16
      %v2548 = vrot.slane %v2546, 5
      %v2549 = vsel %vm1616, %v2544, %v2548
      %v2551 = vshrl.u32 %v2474, 16
      %v2553 = vrot.slane %v2551, 4
      %v2554 = vshll.u32 %v2474, 16
      %v2556 = vrot.slane %v2554, 5
      %v2557 = vor.u32 %v2553, %v2556
      %v2558 = vrot.slane %v2557, 4
      %v2560 = vshll.u32 %v2475, 16
      %v2562 = vrot.slane %v2560, 5
      %v2563 = vsel %vm1616, %v2558, %v2562
      %v2565 = vshrl.u32 %v2476, 16
      %v2567 = vrot.slane %v2565, 4
      %v2568 = vshll.u32 %v2476, 16
      %v2570 = vrot.slane %v2568, 5
      %v2571 = vor.u32 %v2567, %v2570
      %v2572 = vrot.slane %v2571, 4
      %v2574 = vshll.u32 %v2477, 16
      %v2576 = vrot.slane %v2574, 5
      %v2577 = vsel %vm1616, %v2572, %v2576
      %v2579 = vshrl.u32 %v2478, 16
      %v2581 = vrot.slane %v2579, 4
      %v2582 = vshll.u32 %v2478, 16
      %v2584 = vrot.slane %v2582, 5
      %v2585 = vor.u32 %v2581, %v2584
      %v2586 = vrot.slane %v2585, 4
      %v2588 = vshll.u32 %v2479, 16
      %v2590 = vrot.slane %v2588, 5
      %v2591 = vsel %vm1616, %v2586, %v2590
      %s2592 = scalar_lea.vmem %s6, 256
      %v2593 = vld [vmem:[%s2592] sm:$0xf]
      %v2594 = vld [vmem:[%s2592 + $0x4] sm:$0xf]
      %v2595 = vld [vmem:[%s2592 + $0x8] sm:$0xf]
      %v2596 = vld [vmem:[%s2592 + $0xc] sm:$0xf]
      %v2597 = vld [vmem:[%s2592 + $0x10] sm:$0xf]
      %v2598 = vld [vmem:[%s2592 + $0x14] sm:$0xf]
      %v2599 = vld [vmem:[%s2592 + $0x18] sm:$0xf]
      %v2600 = vld [vmem:[%s2592 + $0x1c] sm:$0xf]
      %v2601 = vld [vmem:[%s2592 + $0x20] sm:$0xf]
      %v2602 = vld [vmem:[%s2592 + $0x24] sm:$0xf]
      %v2603 = vld [vmem:[%s2592 + $0x28] sm:$0xf]
      %v2604 = vld [vmem:[%s2592 + $0x2c] sm:$0xf]
      %v2605 = vld [vmem:[%s2592 + $0x30] sm:$0xf]
      %v2606 = vld [vmem:[%s2592 + $0x34] sm:$0xf]
      %v2607 = vld [vmem:[%s2592 + $0x38] sm:$0xf]
      %v2608 = vld [vmem:[%s2592 + $0x3c] sm:$0xf]
      %v2609 = vunpack.c.l.b16 %v2493
      %v2610 = vunpack.c.l.b16 %v2507
      %v2611 = vunpack.c.l.b16 %v2521
      %v2612 = vunpack.c.l.b16 %v2535
      %v2613 = vunpack.c.l.b16 %v2549
      %v2614 = vunpack.c.l.b16 %v2563
      %v2615 = vunpack.c.l.b16 %v2577
      %v2616 = vunpack.c.l.b16 %v2591
      %v2617 = vpack.c.b16 %v2610, %v2609
      %v2618 = vpack.c.b16 %v2612, %v2611
      %v2619 = vpack.c.b16 %v2614, %v2613
      %v2620 = vpack.c.b16 %v2616, %v2615
      %v2641 = vunpack.c.l.b16 %v2593
      %v2642 = vunpack.c.l.b16 %v2594
      %v2643 = vunpack.c.l.b16 %v2595
      %v2644 = vunpack.c.l.b16 %v2596
      %v2645 = vunpack.c.l.b16 %v2597
      %v2646 = vunpack.c.l.b16 %v2598
      %v2647 = vunpack.c.l.b16 %v2599
      %v2648 = vunpack.c.l.b16 %v2600
      %v2649 = vunpack.c.l.b16 %v2601
      %v2650 = vunpack.c.l.b16 %v2602
      %v2651 = vunpack.c.l.b16 %v2603
      %v2652 = vunpack.c.l.b16 %v2604
      %v2653 = vunpack.c.l.b16 %v2605
      %v2654 = vunpack.c.l.b16 %v2606
      %v2655 = vunpack.c.l.b16 %v2607
      %v2656 = vunpack.c.l.b16 %v2608
      %v2657 = vpack.c.b16 %v2642, %v2641
      %v2658 = vpack.c.b16 %v2644, %v2643
      %v2659 = vpack.c.b16 %v2646, %v2645
      %v2660 = vpack.c.b16 %v2648, %v2647
      %v2661 = vpack.c.b16 %v2650, %v2649
      %v2662 = vpack.c.b16 %v2652, %v2651
      %v2663 = vpack.c.b16 %v2654, %v2653
      %v2664 = vpack.c.b16 %v2656, %v2655
      %2673 = vmatprep.subr.bf16.mxu0 0
      %2674 = vmatpush1.bf16.msra.mxu0 %v2664
      %2675 = vmatprep.subr.bf16.mxu0 0
      %2676 = vmatpush1.bf16.msra.mxu0 %v2663
      %2677 = vmatprep.subr.bf16.mxu0 0
      %2678 = vmatpush1.bf16.msra.mxu0 %v2662
      %2679 = vmatprep.subr.bf16.mxu0 0
      %2680 = vmatpush1.bf16.msra.mxu0 %v2661
      %2681 = vmatprep.subr.bf16.mxu0 0
      %2682 = vmatpush1.bf16.msra.mxu0 %v2660
      %2683 = vmatprep.subr.bf16.mxu0 0
      %2684 = vmatpush1.bf16.msra.mxu0 %v2659
      %2685 = vmatprep.subr.bf16.mxu0 0
      %2686 = vmatpush1.bf16.msra.mxu0 %v2658
      %2687 = vmatprep.subr.bf16.mxu0 0
      %2688 = vmatpush1.bf16.msra.mxu0 %v2657
      %2689 = vmatprep.subr.bf16.mxu0 0
      %2690 = vmatpush2.bf16.msra.mxu0 0
      %2691 = vmatprep.subr.bf16.mxu0 0
      %2692 = vmatpush2.bf16.msra.mxu0 0
      %2693 = vmatprep.subr.bf16.mxu0 0
      %2694 = vmatpush2.bf16.msra.mxu0 0
      %2695 = vmatprep.subr.bf16.mxu0 0
      %2696 = vmatpush2.bf16.msra.mxu0 0
      %2697 = vmatprep.subr.bf16.mxu0 0
      %2698 = vmatpush2.bf16.msra.mxu0 0
      %2699 = vmatprep.subr.bf16.mxu0 0
      %2700 = vmatpush2.bf16.msra.mxu0 0
      %2701 = vmatprep.subr.bf16.mxu0 0
      %2702 = vmatpush2.bf16.msra.mxu0 0
      %2703 = vmatprep.subr.bf16.mxu0 0
      %2704 = vmatpush2.bf16.msra.mxu0 0
      %2705 = vmatprep.mubr.bf16.mxu0 0
      %2706 = vmatmul.mubr.bf16.gmra.mxu0 %v2617
      %v2707 = vpop.f32.mrf.mxu0
      %v2708 = vadd.f32 0.0, %v2707
      %v2709 = vpop.f32.mrf.mxu0
      %v2710 = vpop.f32.mrf.mxu0
      %v2711 = vadd.f32 0.0, %v2710
      %v2712 = vpop.f32.mrf.mxu0
      %2713 = vmatprep.mubr.bf16.mxu0 0
      %2714 = vmatmul.mubr.bf16.gmra.mxu0 %v2618
      %v2715 = vpop.f32.mrf.mxu0
      %v2716 = vadd.f32 0.0, %v2715
      %v2717 = vpop.f32.mrf.mxu0
      %v2718 = vpop.f32.mrf.mxu0
      %v2719 = vadd.f32 0.0, %v2718
      %v2720 = vpop.f32.mrf.mxu0
      %2721 = vmatprep.mubr.bf16.mxu0 0
      %2722 = vmatmul.mubr.bf16.gmra.mxu0 %v2619
      %v2723 = vpop.f32.mrf.mxu0
      %v2724 = vadd.f32 0.0, %v2723
      %v2725 = vpop.f32.mrf.mxu0
      %v2726 = vpop.f32.mrf.mxu0
      %v2727 = vadd.f32 0.0, %v2726
      %v2728 = vpop.f32.mrf.mxu0
      %2729 = vmatprep.mubr.bf16.mxu0 0
      %2730 = vmatmul.mubr.bf16.gmra.mxu0 %v2620
      %v2731 = vpop.f32.mrf.mxu0
      %v2732 = vadd.f32 0.0, %v2731
      %v2733 = vpop.f32.mrf.mxu0
      %v2734 = vpop.f32.mrf.mxu0
      %v2735 = vadd.f32 0.0, %v2734
      %v2736 = vpop.f32.mrf.mxu0
      %2737 = vdwg.mxu0
      %v2738 = vadd.f32 %v2456, %v2708
      %v2739 = vadd.f32 %v2457, %v2711
      %v2740 = vadd.f32 %v2458, %v2716
      %v2741 = vadd.f32 %v2459, %v2719
      %v2742 = vadd.f32 %v2460, %v2724
      %v2743 = vadd.f32 %v2461, %v2727
      %v2744 = vadd.f32 %v2462, %v2732
      %v2745 = vadd.f32 %v2463, %v2735
      %v2746 = vld [vmem:[%s985] sm:$0xf]
      %v2747 = vld [vmem:[%s985 + $0x4] sm:$0x1]
      %v2748 = vld [vmem:[%s985 + $0x8] sm:$0xf]
      %v2749 = vld [vmem:[%s985 + $0xc] sm:$0x1]
      %v2750 = vld [vmem:[%s985 + $0x10] sm:$0xf]
      %v2751 = vld [vmem:[%s985 + $0x14] sm:$0x1]
      %v2752 = vld [vmem:[%s985 + $0x18] sm:$0xf]
      %v2753 = vld [vmem:[%s985 + $0x1c] sm:$0x1]
      %v2754 = vld [vmem:[%s985 + $0x20] sm:$0xf]
      %v2755 = vld [vmem:[%s985 + $0x24] sm:$0x1]
      %v2756 = vld [vmem:[%s985 + $0x28] sm:$0xf]
      %v2757 = vld [vmem:[%s985 + $0x2c] sm:$0x1]
      %v2758 = vld [vmem:[%s985 + $0x30] sm:$0xf]
      %v2759 = vld [vmem:[%s985 + $0x34] sm:$0x1]
      %v2760 = vld [vmem:[%s985 + $0x38] sm:$0xf]
      %v2761 = vld [vmem:[%s985 + $0x3c] sm:$0x1]
      %v2763 = vshrl.u32 %v2746, 16
      %v2765 = vrot.slane %v2763, 4
      %v2766 = vshll.u32 %v2746, 16
      %v2768 = vrot.slane %v2766, 5
      %v2769 = vor.u32 %v2765, %v2768
      %v2770 = vrot.slane %v2769, 4
      %v2772 = vshll.u32 %v2747, 16
      %v2774 = vrot.slane %v2772, 5
      %v2775 = vsel %vm1616, %v2770, %v2774
      %v2777 = vshrl.u32 %v2748, 16
      %v2779 = vrot.slane %v2777, 4
      %v2780 = vshll.u32 %v2748, 16
      %v2782 = vrot.slane %v2780, 5
      %v2783 = vor.u32 %v2779, %v2782
      %v2784 = vrot.slane %v2783, 4
      %v2786 = vshll.u32 %v2749, 16
      %v2788 = vrot.slane %v2786, 5
      %v2789 = vsel %vm1616, %v2784, %v2788
      %v2791 = vshrl.u32 %v2750, 16
      %v2793 = vrot.slane %v2791, 4
      %v2794 = vshll.u32 %v2750, 16
      %v2796 = vrot.slane %v2794, 5
      %v2797 = vor.u32 %v2793, %v2796
      %v2798 = vrot.slane %v2797, 4
      %v2800 = vshll.u32 %v2751, 16
      %v2802 = vrot.slane %v2800, 5
      %v2803 = vsel %vm1616, %v2798, %v2802
      %v2805 = vshrl.u32 %v2752, 16
      %v2807 = vrot.slane %v2805, 4
      %v2808 = vshll.u32 %v2752, 16
      %v2810 = vrot.slane %v2808, 5
      %v2811 = vor.u32 %v2807, %v2810
      %v2812 = vrot.slane %v2811, 4
      %v2814 = vshll.u32 %v2753, 16
      %v2816 = vrot.slane %v2814, 5
      %v2817 = vsel %vm1616, %v2812, %v2816
      %v2819 = vshrl.u32 %v2754, 16
      %v2821 = vrot.slane %v2819, 4
      %v2822 = vshll.u32 %v2754, 16
      %v2824 = vrot.slane %v2822, 5
      %v2825 = vor.u32 %v2821, %v2824
      %v2826 = vrot.slane %v2825, 4
      %v2828 = vshll.u32 %v2755, 16
      %v2830 = vrot.slane %v2828, 5
      %v2831 = vsel %vm1616, %v2826, %v2830
      %v2833 = vshrl.u32 %v2756, 16
      %v2835 = vrot.slane %v2833, 4
      %v2836 = vshll.u32 %v2756, 16
      %v2838 = vrot.slane %v2836, 5
      %v2839 = vor.u32 %v2835, %v2838
      %v2840 = vrot.slane %v2839, 4
      %v2842 = vshll.u32 %v2757, 16
      %v2844 = vrot.slane %v2842, 5
      %v2845 = vsel %vm1616, %v2840, %v2844
      %v2847 = vshrl.u32 %v2758, 16
      %v2849 = vrot.slane %v2847, 4
      %v2850 = vshll.u32 %v2758, 16
      %v2852 = vrot.slane %v2850, 5
      %v2853 = vor.u32 %v2849, %v2852
      %v2854 = vrot.slane %v2853, 4
      %v2856 = vshll.u32 %v2759, 16
      %v2858 = vrot.slane %v2856, 5
      %v2859 = vsel %vm1616, %v2854, %v2858
      %v2861 = vshrl.u32 %v2760, 16
      %v2863 = vrot.slane %v2861, 4
      %v2864 = vshll.u32 %v2760, 16
      %v2866 = vrot.slane %v2864, 5
      %v2867 = vor.u32 %v2863, %v2866
      %v2868 = vrot.slane %v2867, 4
      %v2870 = vshll.u32 %v2761, 16
      %v2872 = vrot.slane %v2870, 5
      %v2873 = vsel %vm1616, %v2868, %v2872
      %s2874 = scalar_lea.vmem %s6, 320
      %v2875 = vld [vmem:[%s2874] sm:$0xf]
      %v2876 = vld [vmem:[%s2874 + $0x4] sm:$0xf]
      %v2877 = vld [vmem:[%s2874 + $0x8] sm:$0xf]
      %v2878 = vld [vmem:[%s2874 + $0xc] sm:$0xf]
      %v2879 = vld [vmem:[%s2874 + $0x10] sm:$0xf]
      %v2880 = vld [vmem:[%s2874 + $0x14] sm:$0xf]
      %v2881 = vld [vmem:[%s2874 + $0x18] sm:$0xf]
      %v2882 = vld [vmem:[%s2874 + $0x1c] sm:$0xf]
      %v2883 = vld [vmem:[%s2874 + $0x20] sm:$0xf]
      %v2884 = vld [vmem:[%s2874 + $0x24] sm:$0xf]
      %v2885 = vld [vmem:[%s2874 + $0x28] sm:$0xf]
      %v2886 = vld [vmem:[%s2874 + $0x2c] sm:$0xf]
      %v2887 = vld [vmem:[%s2874 + $0x30] sm:$0xf]
      %v2888 = vld [vmem:[%s2874 + $0x34] sm:$0xf]
      %v2889 = vld [vmem:[%s2874 + $0x38] sm:$0xf]
      %v2890 = vld [vmem:[%s2874 + $0x3c] sm:$0xf]
      %v2891 = vunpack.c.l.b16 %v2775
      %v2892 = vunpack.c.l.b16 %v2789
      %v2893 = vunpack.c.l.b16 %v2803
      %v2894 = vunpack.c.l.b16 %v2817
      %v2895 = vunpack.c.l.b16 %v2831
      %v2896 = vunpack.c.l.b16 %v2845
      %v2897 = vunpack.c.l.b16 %v2859
      %v2898 = vunpack.c.l.b16 %v2873
      %v2899 = vpack.c.b16 %v2892, %v2891
      %v2900 = vpack.c.b16 %v2894, %v2893
      %v2901 = vpack.c.b16 %v2896, %v2895
      %v2902 = vpack.c.b16 %v2898, %v2897
      %v2923 = vunpack.c.l.b16 %v2875
      %v2924 = vunpack.c.l.b16 %v2876
      %v2925 = vunpack.c.l.b16 %v2877
      %v2926 = vunpack.c.l.b16 %v2878
      %v2927 = vunpack.c.l.b16 %v2879
      %v2928 = vunpack.c.l.b16 %v2880
      %v2929 = vunpack.c.l.b16 %v2881
      %v2930 = vunpack.c.l.b16 %v2882
      %v2931 = vunpack.c.l.b16 %v2883
      %v2932 = vunpack.c.l.b16 %v2884
      %v2933 = vunpack.c.l.b16 %v2885
      %v2934 = vunpack.c.l.b16 %v2886
      %v2935 = vunpack.c.l.b16 %v2887
      %v2936 = vunpack.c.l.b16 %v2888
      %v2937 = vunpack.c.l.b16 %v2889
      %v2938 = vunpack.c.l.b16 %v2890
      %v2939 = vpack.c.b16 %v2924, %v2923
      %v2940 = vpack.c.b16 %v2926, %v2925
      %v2941 = vpack.c.b16 %v2928, %v2927
      %v2942 = vpack.c.b16 %v2930, %v2929
      %v2943 = vpack.c.b16 %v2932, %v2931
      %v2944 = vpack.c.b16 %v2934, %v2933
      %v2945 = vpack.c.b16 %v2936, %v2935
      %v2946 = vpack.c.b16 %v2938, %v2937
      %2955 = vmatprep.subr.bf16.mxu0 0
      %2956 = vmatpush1.bf16.msra.mxu0 %v2946
      %2957 = vmatprep.subr.bf16.mxu0 0
      %2958 = vmatpush1.bf16.msra.mxu0 %v2945
      %2959 = vmatprep.subr.bf16.mxu0 0
      %2960 = vmatpush1.bf16.msra.mxu0 %v2944
      %2961 = vmatprep.subr.bf16.mxu0 0
      %2962 = vmatpush1.bf16.msra.mxu0 %v2943
      %2963 = vmatprep.subr.bf16.mxu0 0
      %2964 = vmatpush1.bf16.msra.mxu0 %v2942
      %2965 = vmatprep.subr.bf16.mxu0 0
      %2966 = vmatpush1.bf16.msra.mxu0 %v2941
      %2967 = vmatprep.subr.bf16.mxu0 0
      %2968 = vmatpush1.bf16.msra.mxu0 %v2940
      %2969 = vmatprep.subr.bf16.mxu0 0
      %2970 = vmatpush1.bf16.msra.mxu0 %v2939
      %2971 = vmatprep.subr.bf16.mxu0 0
      %2972 = vmatpush2.bf16.msra.mxu0 0
      %2973 = vmatprep.subr.bf16.mxu0 0
      %2974 = vmatpush2.bf16.msra.mxu0 0
      %2975 = vmatprep.subr.bf16.mxu0 0
      %2976 = vmatpush2.bf16.msra.mxu0 0
      %2977 = vmatprep.subr.bf16.mxu0 0
      %2978 = vmatpush2.bf16.msra.mxu0 0
      %2979 = vmatprep.subr.bf16.mxu0 0
      %2980 = vmatpush2.bf16.msra.mxu0 0
      %2981 = vmatprep.subr.bf16.mxu0 0
      %2982 = vmatpush2.bf16.msra.mxu0 0
      %2983 = vmatprep.subr.bf16.mxu0 0
      %2984 = vmatpush2.bf16.msra.mxu0 0
      %2985 = vmatprep.subr.bf16.mxu0 0
      %2986 = vmatpush2.bf16.msra.mxu0 0
      %2987 = vmatprep.mubr.bf16.mxu0 0
      %2988 = vmatmul.mubr.bf16.gmra.mxu0 %v2899
      %v2989 = vpop.f32.mrf.mxu0
      %v2990 = vadd.f32 0.0, %v2989
      %v2991 = vpop.f32.mrf.mxu0
      %v2992 = vpop.f32.mrf.mxu0
      %v2993 = vadd.f32 0.0, %v2992
      %v2994 = vpop.f32.mrf.mxu0
      %2995 = vmatprep.mubr.bf16.mxu0 0
      %2996 = vmatmul.mubr.bf16.gmra.mxu0 %v2900
      %v2997 = vpop.f32.mrf.mxu0
      %v2998 = vadd.f32 0.0, %v2997
      %v2999 = vpop.f32.mrf.mxu0
      %v3000 = vpop.f32.mrf.mxu0
      %v3001 = vadd.f32 0.0, %v3000
      %v3002 = vpop.f32.mrf.mxu0
      %3003 = vmatprep.mubr.bf16.mxu0 0
      %3004 = vmatmul.mubr.bf16.gmra.mxu0 %v2901
      %v3005 = vpop.f32.mrf.mxu0
      %v3006 = vadd.f32 0.0, %v3005
      %v3007 = vpop.f32.mrf.mxu0
      %v3008 = vpop.f32.mrf.mxu0
      %v3009 = vadd.f32 0.0, %v3008
      %v3010 = vpop.f32.mrf.mxu0
      %3011 = vmatprep.mubr.bf16.mxu0 0
      %3012 = vmatmul.mubr.bf16.gmra.mxu0 %v2902
      %v3013 = vpop.f32.mrf.mxu0
      %v3014 = vadd.f32 0.0, %v3013
      %v3015 = vpop.f32.mrf.mxu0
      %v3016 = vpop.f32.mrf.mxu0
      %v3017 = vadd.f32 0.0, %v3016
      %v3018 = vpop.f32.mrf.mxu0
      %3019 = vdwg.mxu0
      %v3020 = vadd.f32 %v2738, %v2990
      %v3021 = vadd.f32 %v2739, %v2993
      %v3022 = vadd.f32 %v2740, %v2998
      %v3023 = vadd.f32 %v2741, %v3001
      %v3024 = vadd.f32 %v2742, %v3006
      %v3025 = vadd.f32 %v2743, %v3009
      %v3026 = vadd.f32 %v2744, %v3014
      %v3027 = vadd.f32 %v2745, %v3017
      %v3028 = vld [vmem:[%s1525] sm:$0xf]
      %v3029 = vld [vmem:[%s1525 + $0x8] sm:$0xf]
      %v3030 = vld [vmem:[%s1525 + $0x10] sm:$0xf]
      %v3031 = vld [vmem:[%s1525 + $0x18] sm:$0xf]
      %v3032 = vld [vmem:[%s1525 + $0x20] sm:$0xf]
      %v3033 = vld [vmem:[%s1525 + $0x28] sm:$0xf]
      %v3034 = vld [vmem:[%s1525 + $0x30] sm:$0xf]
      %v3035 = vld [vmem:[%s1525 + $0x38] sm:$0xf]
      %s3036 = scalar_lea.vmem %s6, 384
      %v3037 = vld [vmem:[%s3036] sm:$0xf]
      %v3038 = vld [vmem:[%s3036 + $0x4] sm:$0xf]
      %v3039 = vld [vmem:[%s3036 + $0x8] sm:$0xf]
      %v3040 = vld [vmem:[%s3036 + $0xc] sm:$0xf]
      %v3041 = vld [vmem:[%s3036 + $0x10] sm:$0xf]
      %v3042 = vld [vmem:[%s3036 + $0x14] sm:$0xf]
      %v3043 = vld [vmem:[%s3036 + $0x18] sm:$0xf]
      %v3044 = vld [vmem:[%s3036 + $0x1c] sm:$0xf]
      %v3045 = vld [vmem:[%s3036 + $0x20] sm:$0xf]
      %v3046 = vld [vmem:[%s3036 + $0x24] sm:$0xf]
      %v3047 = vld [vmem:[%s3036 + $0x28] sm:$0xf]
      %v3048 = vld [vmem:[%s3036 + $0x2c] sm:$0xf]
      %v3049 = vld [vmem:[%s3036 + $0x30] sm:$0xf]
      %v3050 = vld [vmem:[%s3036 + $0x34] sm:$0xf]
      %v3051 = vld [vmem:[%s3036 + $0x38] sm:$0xf]
      %v3052 = vld [vmem:[%s3036 + $0x3c] sm:$0xf]
      %v3061 = vunpack.c.l.b16 %v3028
      %v3062 = vunpack.c.l.b16 %v3029
      %v3063 = vunpack.c.l.b16 %v3030
      %v3064 = vunpack.c.l.b16 %v3031
      %v3065 = vunpack.c.l.b16 %v3032
      %v3066 = vunpack.c.l.b16 %v3033
      %v3067 = vunpack.c.l.b16 %v3034
      %v3068 = vunpack.c.l.b16 %v3035
      %v3069 = vpack.c.b16 %v3062, %v3061
      %v3070 = vpack.c.b16 %v3064, %v3063
      %v3071 = vpack.c.b16 %v3066, %v3065
      %v3072 = vpack.c.b16 %v3068, %v3067
      %v3093 = vunpack.c.l.b16 %v3037
      %v3094 = vunpack.c.l.b16 %v3038
      %v3095 = vunpack.c.l.b16 %v3039
      %v3096 = vunpack.c.l.b16 %v3040
      %v3097 = vunpack.c.l.b16 %v3041
      %v3098 = vunpack.c.l.b16 %v3042
      %v3099 = vunpack.c.l.b16 %v3043
      %v3100 = vunpack.c.l.b16 %v3044
      %v3101 = vunpack.c.l.b16 %v3045
      %v3102 = vunpack.c.l.b16 %v3046
      %v3103 = vunpack.c.l.b16 %v3047
      %v3104 = vunpack.c.l.b16 %v3048
      %v3105 = vunpack.c.l.b16 %v3049
      %v3106 = vunpack.c.l.b16 %v3050
      %v3107 = vunpack.c.l.b16 %v3051
      %v3108 = vunpack.c.l.b16 %v3052
      %v3109 = vpack.c.b16 %v3094, %v3093
      %v3110 = vpack.c.b16 %v3096, %v3095
      %v3111 = vpack.c.b16 %v3098, %v3097
      %v3112 = vpack.c.b16 %v3100, %v3099
      %v3113 = vpack.c.b16 %v3102, %v3101
      %v3114 = vpack.c.b16 %v3104, %v3103
      %v3115 = vpack.c.b16 %v3106, %v3105
      %v3116 = vpack.c.b16 %v3108, %v3107
      %3125 = vmatprep.subr.bf16.mxu0 0
      %3126 = vmatpush1.bf16.msra.mxu0 %v3116
      %3127 = vmatprep.subr.bf16.mxu0 0
      %3128 = vmatpush1.bf16.msra.mxu0 %v3115
      %3129 = vmatprep.subr.bf16.mxu0 0
      %3130 = vmatpush1.bf16.msra.mxu0 %v3114
      %3131 = vmatprep.subr.bf16.mxu0 0
      %3132 = vmatpush1.bf16.msra.mxu0 %v3113
      %3133 = vmatprep.subr.bf16.mxu0 0
      %3134 = vmatpush1.bf16.msra.mxu0 %v3112
      %3135 = vmatprep.subr.bf16.mxu0 0
      %3136 = vmatpush1.bf16.msra.mxu0 %v3111
      %3137 = vmatprep.subr.bf16.mxu0 0
      %3138 = vmatpush1.bf16.msra.mxu0 %v3110
      %3139 = vmatprep.subr.bf16.mxu0 0
      %3140 = vmatpush1.bf16.msra.mxu0 %v3109
      %3141 = vmatprep.subr.bf16.mxu0 0
      %3142 = vmatpush2.bf16.msra.mxu0 0
      %3143 = vmatprep.subr.bf16.mxu0 0
      %3144 = vmatpush2.bf16.msra.mxu0 0
      %3145 = vmatprep.subr.bf16.mxu0 0
      %3146 = vmatpush2.bf16.msra.mxu0 0
      %3147 = vmatprep.subr.bf16.mxu0 0
      %3148 = vmatpush2.bf16.msra.mxu0 0
      %3149 = vmatprep.subr.bf16.mxu0 0
      %3150 = vmatpush2.bf16.msra.mxu0 0
      %3151 = vmatprep.subr.bf16.mxu0 0
      %3152 = vmatpush2.bf16.msra.mxu0 0
      %3153 = vmatprep.subr.bf16.mxu0 0
      %3154 = vmatpush2.bf16.msra.mxu0 0
      %3155 = vmatprep.subr.bf16.mxu0 0
      %3156 = vmatpush2.bf16.msra.mxu0 0
      %3157 = vmatprep.mubr.bf16.mxu0 0
      %3158 = vmatmul.mubr.bf16.gmra.mxu0 %v3069
      %v3159 = vpop.f32.mrf.mxu0
      %v3160 = vadd.f32 0.0, %v3159
      %v3161 = vpop.f32.mrf.mxu0
      %v3162 = vpop.f32.mrf.mxu0
      %v3163 = vadd.f32 0.0, %v3162
      %v3164 = vpop.f32.mrf.mxu0
      %3165 = vmatprep.mubr.bf16.mxu0 0
      %3166 = vmatmul.mubr.bf16.gmra.mxu0 %v3070
      %v3167 = vpop.f32.mrf.mxu0
      %v3168 = vadd.f32 0.0, %v3167
      %v3169 = vpop.f32.mrf.mxu0
      %v3170 = vpop.f32.mrf.mxu0
      %v3171 = vadd.f32 0.0, %v3170
      %v3172 = vpop.f32.mrf.mxu0
      %3173 = vmatprep.mubr.bf16.mxu0 0
      %3174 = vmatmul.mubr.bf16.gmra.mxu0 %v3071
      %v3175 = vpop.f32.mrf.mxu0
      %v3176 = vadd.f32 0.0, %v3175
      %v3177 = vpop.f32.mrf.mxu0
      %v3178 = vpop.f32.mrf.mxu0
      %v3179 = vadd.f32 0.0, %v3178
      %v3180 = vpop.f32.mrf.mxu0
      %3181 = vmatprep.mubr.bf16.mxu0 0
      %3182 = vmatmul.mubr.bf16.gmra.mxu0 %v3072
      %v3183 = vpop.f32.mrf.mxu0
      %v3184 = vadd.f32 0.0, %v3183
      %v3185 = vpop.f32.mrf.mxu0
      %v3186 = vpop.f32.mrf.mxu0
      %v3187 = vadd.f32 0.0, %v3186
      %v3188 = vpop.f32.mrf.mxu0
      %3189 = vdwg.mxu0
      %v3190 = vadd.f32 %v3020, %v3160
      %v3191 = vadd.f32 %v3021, %v3163
      %v3192 = vadd.f32 %v3022, %v3168
      %v3193 = vadd.f32 %v3023, %v3171
      %v3194 = vadd.f32 %v3024, %v3176
      %v3195 = vadd.f32 %v3025, %v3179
      %v3196 = vadd.f32 %v3026, %v3184
      %v3197 = vadd.f32 %v3027, %v3187
      %v3198 = vld [vmem:[%s1255] sm:$0xf]
      %v3199 = vld [vmem:[%s1255 + $0x4] sm:$0x1]
      %v3200 = vld [vmem:[%s1255 + $0x8] sm:$0xf]
      %v3201 = vld [vmem:[%s1255 + $0xc] sm:$0x1]
      %v3202 = vld [vmem:[%s1255 + $0x10] sm:$0xf]
      %v3203 = vld [vmem:[%s1255 + $0x14] sm:$0x1]
      %v3204 = vld [vmem:[%s1255 + $0x18] sm:$0xf]
      %v3205 = vld [vmem:[%s1255 + $0x1c] sm:$0x1]
      %v3206 = vld [vmem:[%s1255 + $0x20] sm:$0xf]
      %v3207 = vld [vmem:[%s1255 + $0x24] sm:$0x1]
      %v3208 = vld [vmem:[%s1255 + $0x28] sm:$0xf]
      %v3209 = vld [vmem:[%s1255 + $0x2c] sm:$0x1]
      %v3210 = vld [vmem:[%s1255 + $0x30] sm:$0xf]
      %v3211 = vld [vmem:[%s1255 + $0x34] sm:$0x1]
      %v3212 = vld [vmem:[%s1255 + $0x38] sm:$0xf]
      %v3213 = vld [vmem:[%s1255 + $0x3c] sm:$0x1]
      %v3215 = vshrl.u32 %v3198, 16
      %v3217 = vrot.slane %v3215, 4
      %v3218 = vshll.u32 %v3198, 16
      %v3220 = vrot.slane %v3218, 5
      %v3221 = vor.u32 %v3217, %v3220
      %v3222 = vrot.slane %v3221, 4
      %v3224 = vshll.u32 %v3199, 16
      %v3226 = vrot.slane %v3224, 5
      %v3227 = vsel %vm1616, %v3222, %v3226
      %v3229 = vshrl.u32 %v3200, 16
      %v3231 = vrot.slane %v3229, 4
      %v3232 = vshll.u32 %v3200, 16
      %v3234 = vrot.slane %v3232, 5
      %v3235 = vor.u32 %v3231, %v3234
      %v3236 = vrot.slane %v3235, 4
      %v3238 = vshll.u32 %v3201, 16
      %v3240 = vrot.slane %v3238, 5
      %v3241 = vsel %vm1616, %v3236, %v3240
      %v3243 = vshrl.u32 %v3202, 16
      %v3245 = vrot.slane %v3243, 4
      %v3246 = vshll.u32 %v3202, 16
      %v3248 = vrot.slane %v3246, 5
      %v3249 = vor.u32 %v3245, %v3248
      %v3250 = vrot.slane %v3249, 4
      %v3252 = vshll.u32 %v3203, 16
      %v3254 = vrot.slane %v3252, 5
      %v3255 = vsel %vm1616, %v3250, %v3254
      %v3257 = vshrl.u32 %v3204, 16
      %v3259 = vrot.slane %v3257, 4
      %v3260 = vshll.u32 %v3204, 16
      %v3262 = vrot.slane %v3260, 5
      %v3263 = vor.u32 %v3259, %v3262
      %v3264 = vrot.slane %v3263, 4
      %v3266 = vshll.u32 %v3205, 16
      %v3268 = vrot.slane %v3266, 5
      %v3269 = vsel %vm1616, %v3264, %v3268
      %v3271 = vshrl.u32 %v3206, 16
      %v3273 = vrot.slane %v3271, 4
      %v3274 = vshll.u32 %v3206, 16
      %v3276 = vrot.slane %v3274, 5
      %v3277 = vor.u32 %v3273, %v3276
      %v3278 = vrot.slane %v3277, 4
      %v3280 = vshll.u32 %v3207, 16
      %v3282 = vrot.slane %v3280, 5
      %v3283 = vsel %vm1616, %v3278, %v3282
      %v3285 = vshrl.u32 %v3208, 16
      %v3287 = vrot.slane %v3285, 4
      %v3288 = vshll.u32 %v3208, 16
      %v3290 = vrot.slane %v3288, 5
      %v3291 = vor.u32 %v3287, %v3290
      %v3292 = vrot.slane %v3291, 4
      %v3294 = vshll.u32 %v3209, 16
      %v3296 = vrot.slane %v3294, 5
      %v3297 = vsel %vm1616, %v3292, %v3296
      %v3299 = vshrl.u32 %v3210, 16
      %v3301 = vrot.slane %v3299, 4
      %v3302 = vshll.u32 %v3210, 16
      %v3304 = vrot.slane %v3302, 5
      %v3305 = vor.u32 %v3301, %v3304
      %v3306 = vrot.slane %v3305, 4
      %v3308 = vshll.u32 %v3211, 16
      %v3310 = vrot.slane %v3308, 5
      %v3311 = vsel %vm1616, %v3306, %v3310
      %v3313 = vshrl.u32 %v3212, 16
      %v3315 = vrot.slane %v3313, 4
      %v3316 = vshll.u32 %v3212, 16
      %v3318 = vrot.slane %v3316, 5
      %v3319 = vor.u32 %v3315, %v3318
      %v3320 = vrot.slane %v3319, 4
      %v3322 = vshll.u32 %v3213, 16
      %v3324 = vrot.slane %v3322, 5
      %v3325 = vsel %vm1616, %v3320, %v3324
      %s3326 = scalar_lea.vmem %s6, 448
      %v3327 = vld [vmem:[%s3326] sm:$0xf]
      %v3328 = vld [vmem:[%s3326 + $0x4] sm:$0xf]
      %v3329 = vld [vmem:[%s3326 + $0x8] sm:$0xf]
      %v3330 = vld [vmem:[%s3326 + $0xc] sm:$0xf]
      %v3331 = vld [vmem:[%s3326 + $0x10] sm:$0xf]
      %v3332 = vld [vmem:[%s3326 + $0x14] sm:$0xf]
      %v3333 = vld [vmem:[%s3326 + $0x18] sm:$0xf]
      %v3334 = vld [vmem:[%s3326 + $0x1c] sm:$0xf]
      %v3335 = vld [vmem:[%s3326 + $0x20] sm:$0xf]
      %v3336 = vld [vmem:[%s3326 + $0x24] sm:$0xf]
      %v3337 = vld [vmem:[%s3326 + $0x28] sm:$0xf]
      %v3338 = vld [vmem:[%s3326 + $0x2c] sm:$0xf]
      %v3339 = vld [vmem:[%s3326 + $0x30] sm:$0xf]
      %v3340 = vld [vmem:[%s3326 + $0x34] sm:$0xf]
      %v3341 = vld [vmem:[%s3326 + $0x38] sm:$0xf]
      %v3342 = vld [vmem:[%s3326 + $0x3c] sm:$0xf]
      %v3343 = vunpack.c.l.b16 %v3227
      %v3344 = vunpack.c.l.b16 %v3241
      %v3345 = vunpack.c.l.b16 %v3255
      %v3346 = vunpack.c.l.b16 %v3269
      %v3347 = vunpack.c.l.b16 %v3283
      %v3348 = vunpack.c.l.b16 %v3297
      %v3349 = vunpack.c.l.b16 %v3311
      %v3350 = vunpack.c.l.b16 %v3325
      %v3351 = vpack.c.b16 %v3344, %v3343
      %v3352 = vpack.c.b16 %v3346, %v3345
      %v3353 = vpack.c.b16 %v3348, %v3347
      %v3354 = vpack.c.b16 %v3350, %v3349
      %v3375 = vunpack.c.l.b16 %v3327
      %v3376 = vunpack.c.l.b16 %v3328
      %v3377 = vunpack.c.l.b16 %v3329
      %v3378 = vunpack.c.l.b16 %v3330
      %v3379 = vunpack.c.l.b16 %v3331
      %v3380 = vunpack.c.l.b16 %v3332
      %v3381 = vunpack.c.l.b16 %v3333
      %v3382 = vunpack.c.l.b16 %v3334
      %v3383 = vunpack.c.l.b16 %v3335
      %v3384 = vunpack.c.l.b16 %v3336
      %v3385 = vunpack.c.l.b16 %v3337
      %v3386 = vunpack.c.l.b16 %v3338
      %v3387 = vunpack.c.l.b16 %v3339
      %v3388 = vunpack.c.l.b16 %v3340
      %v3389 = vunpack.c.l.b16 %v3341
      %v3390 = vunpack.c.l.b16 %v3342
      %v3391 = vpack.c.b16 %v3376, %v3375
      %v3392 = vpack.c.b16 %v3378, %v3377
      %v3393 = vpack.c.b16 %v3380, %v3379
      %v3394 = vpack.c.b16 %v3382, %v3381
      %v3395 = vpack.c.b16 %v3384, %v3383
      %v3396 = vpack.c.b16 %v3386, %v3385
      %v3397 = vpack.c.b16 %v3388, %v3387
      %v3398 = vpack.c.b16 %v3390, %v3389
      %3407 = vmatprep.subr.bf16.mxu0 0
      %3408 = vmatpush1.bf16.msra.mxu0 %v3398
      %3409 = vmatprep.subr.bf16.mxu0 0
      %3410 = vmatpush1.bf16.msra.mxu0 %v3397
      %3411 = vmatprep.subr.bf16.mxu0 0
      %3412 = vmatpush1.bf16.msra.mxu0 %v3396
      %3413 = vmatprep.subr.bf16.mxu0 0
      %3414 = vmatpush1.bf16.msra.mxu0 %v3395
      %3415 = vmatprep.subr.bf16.mxu0 0
      %3416 = vmatpush1.bf16.msra.mxu0 %v3394
      %3417 = vmatprep.subr.bf16.mxu0 0
      %3418 = vmatpush1.bf16.msra.mxu0 %v3393
      %3419 = vmatprep.subr.bf16.mxu0 0
      %3420 = vmatpush1.bf16.msra.mxu0 %v3392
      %3421 = vmatprep.subr.bf16.mxu0 0
      %3422 = vmatpush1.bf16.msra.mxu0 %v3391
      %3423 = vmatprep.subr.bf16.mxu0 0
      %3424 = vmatpush2.bf16.msra.mxu0 0
      %3425 = vmatprep.subr.bf16.mxu0 0
      %3426 = vmatpush2.bf16.msra.mxu0 0
      %3427 = vmatprep.subr.bf16.mxu0 0
      %3428 = vmatpush2.bf16.msra.mxu0 0
      %3429 = vmatprep.subr.bf16.mxu0 0
      %3430 = vmatpush2.bf16.msra.mxu0 0
      %3431 = vmatprep.subr.bf16.mxu0 0
      %3432 = vmatpush2.bf16.msra.mxu0 0
      %3433 = vmatprep.subr.bf16.mxu0 0
      %3434 = vmatpush2.bf16.msra.mxu0 0
      %3435 = vmatprep.subr.bf16.mxu0 0
      %3436 = vmatpush2.bf16.msra.mxu0 0
      %3437 = vmatprep.subr.bf16.mxu0 0
      %3438 = vmatpush2.bf16.msra.mxu0 0
      %3439 = vmatprep.mubr.bf16.mxu0 0
      %3440 = vmatmul.mubr.bf16.gmra.mxu0 %v3351
      %v3441 = vpop.f32.mrf.mxu0
      %v3442 = vadd.f32 0.0, %v3441
      %v3443 = vpop.f32.mrf.mxu0
      %v3444 = vpop.f32.mrf.mxu0
      %v3445 = vadd.f32 0.0, %v3444
      %v3446 = vpop.f32.mrf.mxu0
      %3447 = vmatprep.mubr.bf16.mxu0 0
      %3448 = vmatmul.mubr.bf16.gmra.mxu0 %v3352
      %v3449 = vpop.f32.mrf.mxu0
      %v3450 = vadd.f32 0.0, %v3449
      %v3451 = vpop.f32.mrf.mxu0
      %v3452 = vpop.f32.mrf.mxu0
      %v3453 = vadd.f32 0.0, %v3452
      %v3454 = vpop.f32.mrf.mxu0
      %3455 = vmatprep.mubr.bf16.mxu0 0
      %3456 = vmatmul.mubr.bf16.gmra.mxu0 %v3353
      %v3457 = vpop.f32.mrf.mxu0
      %v3458 = vadd.f32 0.0, %v3457
      %v3459 = vpop.f32.mrf.mxu0
      %v3460 = vpop.f32.mrf.mxu0
      %v3461 = vadd.f32 0.0, %v3460
      %v3462 = vpop.f32.mrf.mxu0
      %3463 = vmatprep.mubr.bf16.mxu0 0
      %3464 = vmatmul.mubr.bf16.gmra.mxu0 %v3354
      %v3465 = vpop.f32.mrf.mxu0
      %v3466 = vadd.f32 0.0, %v3465
      %v3467 = vpop.f32.mrf.mxu0
      %v3468 = vpop.f32.mrf.mxu0
      %v3469 = vadd.f32 0.0, %v3468
      %v3470 = vpop.f32.mrf.mxu0
      %3471 = vdwg.mxu0
      %v3472 = vadd.f32 %v3190, %v3442
      %v3473 = vadd.f32 %v3191, %v3445
      %v3474 = vadd.f32 %v3192, %v3450
      %v3475 = vadd.f32 %v3193, %v3453
      %v3476 = vadd.f32 %v3194, %v3458
      %v3477 = vadd.f32 %v3195, %v3461
      %v3478 = vadd.f32 %v3196, %v3466
      %v3479 = vadd.f32 %v3197, %v3469
      %v3480 = vld [vmem:[%s1525] sm:$0xf]
      %v3481 = vld [vmem:[%s1525 + $0x4] sm:$0x1]
      %v3482 = vld [vmem:[%s1525 + $0x8] sm:$0xf]
      %v3483 = vld [vmem:[%s1525 + $0xc] sm:$0x1]
      %v3484 = vld [vmem:[%s1525 + $0x10] sm:$0xf]
      %v3485 = vld [vmem:[%s1525 + $0x14] sm:$0x1]
      %v3486 = vld [vmem:[%s1525 + $0x18] sm:$0xf]
      %v3487 = vld [vmem:[%s1525 + $0x1c] sm:$0x1]
      %v3488 = vld [vmem:[%s1525 + $0x20] sm:$0xf]
      %v3489 = vld [vmem:[%s1525 + $0x24] sm:$0x1]
      %v3490 = vld [vmem:[%s1525 + $0x28] sm:$0xf]
      %v3491 = vld [vmem:[%s1525 + $0x2c] sm:$0x1]
      %v3492 = vld [vmem:[%s1525 + $0x30] sm:$0xf]
      %v3493 = vld [vmem:[%s1525 + $0x34] sm:$0x1]
      %v3494 = vld [vmem:[%s1525 + $0x38] sm:$0xf]
      %v3495 = vld [vmem:[%s1525 + $0x3c] sm:$0x1]
      %v3497 = vshrl.u32 %v3480, 16
      %v3499 = vrot.slane %v3497, 4
      %v3500 = vshll.u32 %v3480, 16
      %v3502 = vrot.slane %v3500, 5
      %v3503 = vor.u32 %v3499, %v3502
      %v3504 = vrot.slane %v3503, 4
      %v3506 = vshll.u32 %v3481, 16
      %v3508 = vrot.slane %v3506, 5
      %v3509 = vsel %vm1616, %v3504, %v3508
      %v3511 = vshrl.u32 %v3482, 16
      %v3513 = vrot.slane %v3511, 4
      %v3514 = vshll.u32 %v3482, 16
      %v3516 = vrot.slane %v3514, 5
      %v3517 = vor.u32 %v3513, %v3516
      %v3518 = vrot.slane %v3517, 4
      %v3520 = vshll.u32 %v3483, 16
      %v3522 = vrot.slane %v3520, 5
      %v3523 = vsel %vm1616, %v3518, %v3522
      %v3525 = vshrl.u32 %v3484, 16
      %v3527 = vrot.slane %v3525, 4
      %v3528 = vshll.u32 %v3484, 16
      %v3530 = vrot.slane %v3528, 5
      %v3531 = vor.u32 %v3527, %v3530
      %v3532 = vrot.slane %v3531, 4
      %v3534 = vshll.u32 %v3485, 16
      %v3536 = vrot.slane %v3534, 5
      %v3537 = vsel %vm1616, %v3532, %v3536
      %v3539 = vshrl.u32 %v3486, 16
      %v3541 = vrot.slane %v3539, 4
      %v3542 = vshll.u32 %v3486, 16
      %v3544 = vrot.slane %v3542, 5
      %v3545 = vor.u32 %v3541, %v3544
      %v3546 = vrot.slane %v3545, 4
      %v3548 = vshll.u32 %v3487, 16
      %v3550 = vrot.slane %v3548, 5
      %v3551 = vsel %vm1616, %v3546, %v3550
      %v3553 = vshrl.u32 %v3488, 16
      %v3555 = vrot.slane %v3553, 4
      %v3556 = vshll.u32 %v3488, 16
      %v3558 = vrot.slane %v3556, 5
      %v3559 = vor.u32 %v3555, %v3558
      %v3560 = vrot.slane %v3559, 4
      %v3562 = vshll.u32 %v3489, 16
      %v3564 = vrot.slane %v3562, 5
      %v3565 = vsel %vm1616, %v3560, %v3564
      %v3567 = vshrl.u32 %v3490, 16
      %v3569 = vrot.slane %v3567, 4
      %v3570 = vshll.u32 %v3490, 16
      %v3572 = vrot.slane %v3570, 5
      %v3573 = vor.u32 %v3569, %v3572
      %v3574 = vrot.slane %v3573, 4
      %v3576 = vshll.u32 %v3491, 16
      %v3578 = vrot.slane %v3576, 5
      %v3579 = vsel %vm1616, %v3574, %v3578
      %v3581 = vshrl.u32 %v3492, 16
      %v3583 = vrot.slane %v3581, 4
      %v3584 = vshll.u32 %v3492, 16
      %v3586 = vrot.slane %v3584, 5
      %v3587 = vor.u32 %v3583, %v3586
      %v3588 = vrot.slane %v3587, 4
      %v3590 = vshll.u32 %v3493, 16
      %v3592 = vrot.slane %v3590, 5
      %v3593 = vsel %vm1616, %v3588, %v3592
      %v3595 = vshrl.u32 %v3494, 16
      %v3597 = vrot.slane %v3595, 4
      %v3598 = vshll.u32 %v3494, 16
      %v3600 = vrot.slane %v3598, 5
      %v3601 = vor.u32 %v3597, %v3600
      %v3602 = vrot.slane %v3601, 4
      %v3604 = vshll.u32 %v3495, 16
      %v3606 = vrot.slane %v3604, 5
      %v3607 = vsel %vm1616, %v3602, %v3606
      %s3608 = scalar_lea.vmem %s6, 512
      %v3609 = vld [vmem:[%s3608] sm:$0xf]
      %v3610 = vld [vmem:[%s3608 + $0x4] sm:$0xf]
      %v3611 = vld [vmem:[%s3608 + $0x8] sm:$0xf]
      %v3612 = vld [vmem:[%s3608 + $0xc] sm:$0xf]
      %v3613 = vld [vmem:[%s3608 + $0x10] sm:$0xf]
      %v3614 = vld [vmem:[%s3608 + $0x14] sm:$0xf]
      %v3615 = vld [vmem:[%s3608 + $0x18] sm:$0xf]
      %v3616 = vld [vmem:[%s3608 + $0x1c] sm:$0xf]
      %v3617 = vld [vmem:[%s3608 + $0x20] sm:$0xf]
      %v3618 = vld [vmem:[%s3608 + $0x24] sm:$0xf]
      %v3619 = vld [vmem:[%s3608 + $0x28] sm:$0xf]
      %v3620 = vld [vmem:[%s3608 + $0x2c] sm:$0xf]
      %v3621 = vld [vmem:[%s3608 + $0x30] sm:$0xf]
      %v3622 = vld [vmem:[%s3608 + $0x34] sm:$0xf]
      %v3623 = vld [vmem:[%s3608 + $0x38] sm:$0xf]
      %v3624 = vld [vmem:[%s3608 + $0x3c] sm:$0xf]
      %v3625 = vunpack.c.l.b16 %v3509
      %v3626 = vunpack.c.l.b16 %v3523
      %v3627 = vunpack.c.l.b16 %v3537
      %v3628 = vunpack.c.l.b16 %v3551
      %v3629 = vunpack.c.l.b16 %v3565
      %v3630 = vunpack.c.l.b16 %v3579
      %v3631 = vunpack.c.l.b16 %v3593
      %v3632 = vunpack.c.l.b16 %v3607
      %v3633 = vpack.c.b16 %v3626, %v3625
      %v3634 = vpack.c.b16 %v3628, %v3627
      %v3635 = vpack.c.b16 %v3630, %v3629
      %v3636 = vpack.c.b16 %v3632, %v3631
      %v3657 = vunpack.c.l.b16 %v3609
      %v3658 = vunpack.c.l.b16 %v3610
      %v3659 = vunpack.c.l.b16 %v3611
      %v3660 = vunpack.c.l.b16 %v3612
      %v3661 = vunpack.c.l.b16 %v3613
      %v3662 = vunpack.c.l.b16 %v3614
      %v3663 = vunpack.c.l.b16 %v3615
      %v3664 = vunpack.c.l.b16 %v3616
      %v3665 = vunpack.c.l.b16 %v3617
      %v3666 = vunpack.c.l.b16 %v3618
      %v3667 = vunpack.c.l.b16 %v3619
      %v3668 = vunpack.c.l.b16 %v3620
      %v3669 = vunpack.c.l.b16 %v3621
      %v3670 = vunpack.c.l.b16 %v3622
      %v3671 = vunpack.c.l.b16 %v3623
      %v3672 = vunpack.c.l.b16 %v3624
      %v3673 = vpack.c.b16 %v3658, %v3657
      %v3674 = vpack.c.b16 %v3660, %v3659
      %v3675 = vpack.c.b16 %v3662, %v3661
      %v3676 = vpack.c.b16 %v3664, %v3663
      %v3677 = vpack.c.b16 %v3666, %v3665
      %v3678 = vpack.c.b16 %v3668, %v3667
      %v3679 = vpack.c.b16 %v3670, %v3669
      %v3680 = vpack.c.b16 %v3672, %v3671
      %3689 = vmatprep.subr.bf16.mxu0 0
      %3690 = vmatpush1.bf16.msra.mxu0 %v3680
      %3691 = vmatprep.subr.bf16.mxu0 0
      %3692 = vmatpush1.bf16.msra.mxu0 %v3679
      %3693 = vmatprep.subr.bf16.mxu0 0
      %3694 = vmatpush1.bf16.msra.mxu0 %v3678
      %3695 = vmatprep.subr.bf16.mxu0 0
      %3696 = vmatpush1.bf16.msra.mxu0 %v3677
      %3697 = vmatprep.subr.bf16.mxu0 0
      %3698 = vmatpush1.bf16.msra.mxu0 %v3676
      %3699 = vmatprep.subr.bf16.mxu0 0
      %3700 = vmatpush1.bf16.msra.mxu0 %v3675
      %3701 = vmatprep.subr.bf16.mxu0 0
      %3702 = vmatpush1.bf16.msra.mxu0 %v3674
      %3703 = vmatprep.subr.bf16.mxu0 0
      %3704 = vmatpush1.bf16.msra.mxu0 %v3673
      %3705 = vmatprep.subr.bf16.mxu0 0
      %3706 = vmatpush2.bf16.msra.mxu0 0
      %3707 = vmatprep.subr.bf16.mxu0 0
      %3708 = vmatpush2.bf16.msra.mxu0 0
      %3709 = vmatprep.subr.bf16.mxu0 0
      %3710 = vmatpush2.bf16.msra.mxu0 0
      %3711 = vmatprep.subr.bf16.mxu0 0
      %3712 = vmatpush2.bf16.msra.mxu0 0
      %3713 = vmatprep.subr.bf16.mxu0 0
      %3714 = vmatpush2.bf16.msra.mxu0 0
      %3715 = vmatprep.subr.bf16.mxu0 0
      %3716 = vmatpush2.bf16.msra.mxu0 0
      %3717 = vmatprep.subr.bf16.mxu0 0
      %3718 = vmatpush2.bf16.msra.mxu0 0
      %3719 = vmatprep.subr.bf16.mxu0 0
      %3720 = vmatpush2.bf16.msra.mxu0 0
      %3721 = vmatprep.mubr.bf16.mxu0 0
      %3722 = vmatmul.mubr.bf16.gmra.mxu0 %v3633
      %v3723 = vpop.f32.mrf.mxu0
      %v3724 = vadd.f32 0.0, %v3723
      %v3725 = vpop.f32.mrf.mxu0
      %v3726 = vpop.f32.mrf.mxu0
      %v3727 = vadd.f32 0.0, %v3726
      %v3728 = vpop.f32.mrf.mxu0
      %3729 = vmatprep.mubr.bf16.mxu0 0
      %3730 = vmatmul.mubr.bf16.gmra.mxu0 %v3634
      %v3731 = vpop.f32.mrf.mxu0
      %v3732 = vadd.f32 0.0, %v3731
      %v3733 = vpop.f32.mrf.mxu0
      %v3734 = vpop.f32.mrf.mxu0
      %v3735 = vadd.f32 0.0, %v3734
      %v3736 = vpop.f32.mrf.mxu0
      %3737 = vmatprep.mubr.bf16.mxu0 0
      %3738 = vmatmul.mubr.bf16.gmra.mxu0 %v3635
      %v3739 = vpop.f32.mrf.mxu0
      %v3740 = vadd.f32 0.0, %v3739
      %v3741 = vpop.f32.mrf.mxu0
      %v3742 = vpop.f32.mrf.mxu0
      %v3743 = vadd.f32 0.0, %v3742
      %v3744 = vpop.f32.mrf.mxu0
      %3745 = vmatprep.mubr.bf16.mxu0 0
      %3746 = vmatmul.mubr.bf16.gmra.mxu0 %v3636
      %v3747 = vpop.f32.mrf.mxu0
      %v3748 = vadd.f32 0.0, %v3747
      %v3749 = vpop.f32.mrf.mxu0
      %v3750 = vpop.f32.mrf.mxu0
      %v3751 = vadd.f32 0.0, %v3750
      %v3752 = vpop.f32.mrf.mxu0
      %3753 = vdwg.mxu0
      %v3754 = vadd.f32 %v3472, %v3724
      %v3755 = vadd.f32 %v3473, %v3727
      %v3756 = vadd.f32 %v3474, %v3732
      %v3757 = vadd.f32 %v3475, %v3735
      %v3758 = vadd.f32 %v3476, %v3740
      %v3759 = vadd.f32 %v3477, %v3743
      %v3760 = vadd.f32 %v3478, %v3748
      %v3761 = vadd.f32 %v3479, %v3751
      %v3762 = vld [vmem:[%s7] sm:$0x1]
      %v3764 = vlaneseq
      %v3765 = vshrl.u32 %v3764, 7
      %v3766 = vsub.s32 0, %v3765
      %v3767 = vrot.slane %v3762, %v3766
      %v3769 = vadd.f32 %v3754, %v3767
      %v3770 = vadd.f32 %v3755, %v3767
      %v3771 = vadd.f32 %v3756, %v3767
      %v3772 = vadd.f32 %v3757, %v3767
      %v3773 = vadd.f32 %v3758, %v3767
      %v3774 = vadd.f32 %v3759, %v3767
      %v3775 = vadd.f32 %v3760, %v3767
      %v3776 = vadd.f32 %v3761, %v3767
      %v3777 = vmax.f32 %v3769, 0.0
      %v3778 = vmax.f32 %v3770, 0.0
      %v3779 = vmax.f32 %v3771, 0.0
      %v3780 = vmax.f32 %v3772, 0.0
      %v3781 = vmax.f32 %v3773, 0.0
      %v3782 = vmax.f32 %v3774, 0.0
      %v3783 = vmax.f32 %v3775, 0.0
      %v3784 = vmax.f32 %v3776, 0.0
      %v3785 = vpack.c.bf16 %v3778, %v3777
      %v3786 = vpack.c.bf16 %v3780, %v3779
      %v3787 = vpack.c.bf16 %v3782, %v3781
      %v3788 = vpack.c.bf16 %v3784, %v3783
      %v3789 = vld [vmem:[%s8] sm:$0xf]
      %v3790 = vld [vmem:[%s8 + $0x4] sm:$0xf]
      %v3791 = vld [vmem:[%s8 + $0x8] sm:$0xf]
      %v3792 = vld [vmem:[%s8 + $0xc] sm:$0xf]
      %v3793 = vld [vmem:[%s8 + $0x10] sm:$0xf]
      %v3794 = vld [vmem:[%s8 + $0x14] sm:$0xf]
      %v3795 = vld [vmem:[%s8 + $0x18] sm:$0xf]
      %v3796 = vld [vmem:[%s8 + $0x1c] sm:$0xf]
      %v3797 = vld [vmem:[%s8 + $0x20] sm:$0xf]
      %v3798 = vld [vmem:[%s8 + $0x24] sm:$0xf]
      %v3799 = vld [vmem:[%s8 + $0x28] sm:$0xf]
      %v3800 = vld [vmem:[%s8 + $0x2c] sm:$0xf]
      %v3801 = vld [vmem:[%s8 + $0x30] sm:$0xf]
      %v3802 = vld [vmem:[%s8 + $0x34] sm:$0xf]
      %v3803 = vld [vmem:[%s8 + $0x38] sm:$0xf]
      %v3804 = vld [vmem:[%s8 + $0x3c] sm:$0xf]
      %v3805 = vld [vmem:[%s9] sm:$0x1]
      %v3807 = vlaneseq
      %v3808 = vshrl.u32 %v3807, 7
      %v3809 = vsub.s32 0, %v3808
      %v3810 = vrot.slane %v3805, %v3809
      %v3828 = vunpack.c.l.b16 %v3789
      %v3829 = vunpack.c.l.b16 %v3790
      %v3830 = vunpack.c.l.b16 %v3791
      %v3831 = vunpack.c.l.b16 %v3792
      %v3832 = vunpack.c.l.b16 %v3793
      %v3833 = vunpack.c.l.b16 %v3794
      %v3834 = vunpack.c.l.b16 %v3795
      %v3835 = vunpack.c.l.b16 %v3796
      %v3836 = vunpack.c.l.b16 %v3797
      %v3837 = vunpack.c.l.b16 %v3798
      %v3838 = vunpack.c.l.b16 %v3799
      %v3839 = vunpack.c.l.b16 %v3800
      %v3840 = vunpack.c.l.b16 %v3801
      %v3841 = vunpack.c.l.b16 %v3802
      %v3842 = vunpack.c.l.b16 %v3803
      %v3843 = vunpack.c.l.b16 %v3804
      %v3844 = vpack.c.b16 %v3829, %v3828
      %v3845 = vpack.c.b16 %v3831, %v3830
      %v3846 = vpack.c.b16 %v3833, %v3832
      %v3847 = vpack.c.b16 %v3835, %v3834
      %v3848 = vpack.c.b16 %v3837, %v3836
      %v3849 = vpack.c.b16 %v3839, %v3838
      %v3850 = vpack.c.b16 %v3841, %v3840
      %v3851 = vpack.c.b16 %v3843, %v3842
      %3860 = vmatprep.subr.bf16.mxu0 0
      %3861 = vmatpush1.bf16.msra.mxu0 %v3851
      %3862 = vmatprep.subr.bf16.mxu0 0
      %3863 = vmatpush1.bf16.msra.mxu0 %v3850
      %3864 = vmatprep.subr.bf16.mxu0 0
      %3865 = vmatpush1.bf16.msra.mxu0 %v3849
      %3866 = vmatprep.subr.bf16.mxu0 0
      %3867 = vmatpush1.bf16.msra.mxu0 %v3848
      %3868 = vmatprep.subr.bf16.mxu0 0
      %3869 = vmatpush1.bf16.msra.mxu0 %v3847
      %3870 = vmatprep.subr.bf16.mxu0 0
      %3871 = vmatpush1.bf16.msra.mxu0 %v3846
      %3872 = vmatprep.subr.bf16.mxu0 0
      %3873 = vmatpush1.bf16.msra.mxu0 %v3845
      %3874 = vmatprep.subr.bf16.mxu0 0
      %3875 = vmatpush1.bf16.msra.mxu0 %v3844
      %3876 = vmatprep.subr.bf16.mxu0 0
      %3877 = vmatpush2.bf16.msra.mxu0 0
      %3878 = vmatprep.subr.bf16.mxu0 0
      %3879 = vmatpush2.bf16.msra.mxu0 0
      %3880 = vmatprep.subr.bf16.mxu0 0
      %3881 = vmatpush2.bf16.msra.mxu0 0
      %3882 = vmatprep.subr.bf16.mxu0 0
      %3883 = vmatpush2.bf16.msra.mxu0 0
      %3884 = vmatprep.subr.bf16.mxu0 0
      %3885 = vmatpush2.bf16.msra.mxu0 0
      %3886 = vmatprep.subr.bf16.mxu0 0
      %3887 = vmatpush2.bf16.msra.mxu0 0
      %3888 = vmatprep.subr.bf16.mxu0 0
      %3889 = vmatpush2.bf16.msra.mxu0 0
      %3890 = vmatprep.subr.bf16.mxu0 0
      %3891 = vmatpush2.bf16.msra.mxu0 0
      %3892 = vmatprep.mubr.bf16.mxu0 0
      %3893 = vmatmul.mubr.bf16.gmra.mxu0 %v3785
      %v3894 = vpop.f32.mrf.mxu0
      %v3895 = vadd.f32 %v3810, %v3894
      %v3896 = vpop.f32.mrf.mxu0
      %v3897 = vpop.f32.mrf.mxu0
      %v3898 = vadd.f32 %v3810, %v3897
      %v3899 = vpop.f32.mrf.mxu0
      %3900 = vmatprep.mubr.bf16.mxu0 0
      %3901 = vmatmul.mubr.bf16.gmra.mxu0 %v3786
      %v3902 = vpop.f32.mrf.mxu0
      %v3903 = vadd.f32 %v3810, %v3902
      %v3904 = vpop.f32.mrf.mxu0
      %v3905 = vpop.f32.mrf.mxu0
      %v3906 = vadd.f32 %v3810, %v3905
      %v3907 = vpop.f32.mrf.mxu0
      %3908 = vmatprep.mubr.bf16.mxu0 0
      %3909 = vmatmul.mubr.bf16.gmra.mxu0 %v3787
      %v3910 = vpop.f32.mrf.mxu0
      %v3911 = vadd.f32 %v3810, %v3910
      %v3912 = vpop.f32.mrf.mxu0
      %v3913 = vpop.f32.mrf.mxu0
      %v3914 = vadd.f32 %v3810, %v3913
      %v3915 = vpop.f32.mrf.mxu0
      %3916 = vmatprep.mubr.bf16.mxu0 0
      %3917 = vmatmul.mubr.bf16.gmra.mxu0 %v3788
      %v3918 = vpop.f32.mrf.mxu0
      %v3919 = vadd.f32 %v3810, %v3918
      %v3920 = vpop.f32.mrf.mxu0
      %v3921 = vpop.f32.mrf.mxu0
      %v3922 = vadd.f32 %v3810, %v3921
      %v3923 = vpop.f32.mrf.mxu0
      %3924 = vdwg.mxu0
      %v3925 = vld [vmem:[%s453] sm:$0xff]
      %v3926 = vld [vmem:[%s453 + $0x8] sm:$0xff]
      %v3927 = vld [vmem:[%s453 + $0x10] sm:$0xff]
      %v3928 = vld [vmem:[%s453 + $0x18] sm:$0xff]
      %v3929 = vld [vmem:[%s453 + $0x20] sm:$0xff]
      %v3930 = vld [vmem:[%s453 + $0x28] sm:$0xff]
      %v3931 = vld [vmem:[%s453 + $0x30] sm:$0xff]
      %v3932 = vld [vmem:[%s453 + $0x38] sm:$0xff]
      %v3933 = vpack.c.bf16 %v3926, %v3925
      %v3934 = vpack.c.bf16 %v3928, %v3927
      %v3935 = vpack.c.bf16 %v3930, %v3929
      %v3936 = vpack.c.bf16 %v3932, %v3931
      %v3937 = vld [vmem:[%s10] sm:$0x3]
      %v3938 = vld [vmem:[%s11] sm:$0x1]
      %v3940 = vlaneseq
      %v3941 = vshrl.u32 %v3940, 7
      %v3942 = vsub.s32 0, %v3941
      %v3943 = vrot.slane %v3938, %v3942
      %v3946 = vsel %vm515, %v3933, 0
      %v3949 = vsel %vm515, %v3934, 0
      %v3952 = vsel %vm515, %v3935, 0
      %v3955 = vsel %vm515, %v3936, 0
      %v3958 = vsel %vm528, %v3937, 0
      %3960 = vmatprep.subr.bf16.mxu0 0
      %3961 = vmatpush1.bf16.msra.mxu0 0
      %3962 = vmatprep.subr.bf16.mxu0 0
      %3963 = vmatpush1.bf16.msra.mxu0 0
      %3964 = vmatprep.subr.bf16.mxu0 0
      %3965 = vmatpush1.bf16.msra.mxu0 0
      %3966 = vmatprep.subr.bf16.mxu0 0
      %3967 = vmatpush1.bf16.msra.mxu0 0
      %3968 = vmatprep.subr.bf16.mxu0 0
      %3969 = vmatpush1.bf16.msra.mxu0 0
      %3970 = vmatprep.subr.bf16.mxu0 0
      %3971 = vmatpush1.bf16.msra.mxu0 0
      %3972 = vmatprep.subr.bf16.mxu0 0
      %3973 = vmatpush1.bf16.msra.mxu0 0
      %3974 = vmatprep.subr.bf16.mxu0 0
      %3975 = vmatpush1.bf16.msra.mxu0 %v3958
      %3976 = vmatprep.subr.bf16.mxu0 0
      %3977 = vmatpush2.bf16.msra.mxu0 0
      %3978 = vmatprep.subr.bf16.mxu0 0
      %3979 = vmatpush2.bf16.msra.mxu0 0
      %3980 = vmatprep.subr.bf16.mxu0 0
      %3981 = vmatpush2.bf16.msra.mxu0 0
      %3982 = vmatprep.subr.bf16.mxu0 0
      %3983 = vmatpush2.bf16.msra.mxu0 0
      %3984 = vmatprep.subr.bf16.mxu0 0
      %3985 = vmatpush2.bf16.msra.mxu0 0
      %3986 = vmatprep.subr.bf16.mxu0 0
      %3987 = vmatpush2.bf16.msra.mxu0 0
      %3988 = vmatprep.subr.bf16.mxu0 0
      %3989 = vmatpush2.bf16.msra.mxu0 0
      %3990 = vmatprep.subr.bf16.mxu0 0
      %3991 = vmatpush2.bf16.msra.mxu0 0
      %3992 = vmatprep.mubr.bf16.mxu0 0
      %3993 = vmatmul.mubr.bf16.gmra.mxu0 %v3946
      %v3994 = vpop.f32.mrf.mxu0
      %v3995 = vadd.f32 %v3943, %v3994
      %v3996 = vpop.f32.mrf.mxu0
      %v3997 = vpop.f32.mrf.mxu0
      %v3998 = vadd.f32 %v3943, %v3997
      %v3999 = vpop.f32.mrf.mxu0
      %4000 = vmatprep.mubr.bf16.mxu0 0
      %4001 = vmatmul.mubr.bf16.gmra.mxu0 %v3949
      %v4002 = vpop.f32.mrf.mxu0
      %v4003 = vadd.f32 %v3943, %v4002
      %v4004 = vpop.f32.mrf.mxu0
      %v4005 = vpop.f32.mrf.mxu0
      %v4006 = vadd.f32 %v3943, %v4005
      %v4007 = vpop.f32.mrf.mxu0
      %4008 = vmatprep.mubr.bf16.mxu0 0
      %4009 = vmatmul.mubr.bf16.gmra.mxu0 %v3952
      %v4010 = vpop.f32.mrf.mxu0
      %v4011 = vadd.f32 %v3943, %v4010
      %v4012 = vpop.f32.mrf.mxu0
      %v4013 = vpop.f32.mrf.mxu0
      %v4014 = vadd.f32 %v3943, %v4013
      %v4015 = vpop.f32.mrf.mxu0
      %4016 = vmatprep.mubr.bf16.mxu0 0
      %4017 = vmatmul.mubr.bf16.gmra.mxu0 %v3955
      %v4018 = vpop.f32.mrf.mxu0
      %v4019 = vadd.f32 %v3943, %v4018
      %v4020 = vpop.f32.mrf.mxu0
      %v4021 = vpop.f32.mrf.mxu0
      %v4022 = vadd.f32 %v3943, %v4021
      %v4023 = vpop.f32.mrf.mxu0
      %4024 = vdwg.mxu0
      %v4025 = vadd.f32 %v3895, %v3995
      %v4026 = vadd.f32 %v3898, %v3998
      %v4027 = vadd.f32 %v3903, %v4003
      %v4028 = vadd.f32 %v3906, %v4006
      %v4029 = vadd.f32 %v3911, %v4011
      %v4030 = vadd.f32 %v3914, %v4014
      %v4031 = vadd.f32 %v3919, %v4019
      %v4032 = vadd.f32 %v3922, %v4022
      %v4033 = vmax.f32 %v4025, 0.0
      %v4034 = vmax.f32 %v4026, 0.0
      %v4035 = vmax.f32 %v4027, 0.0
      %v4036 = vmax.f32 %v4028, 0.0
      %v4037 = vmax.f32 %v4029, 0.0
      %v4038 = vmax.f32 %v4030, 0.0
      %v4039 = vmax.f32 %v4031, 0.0
      %v4040 = vmax.f32 %v4032, 0.0
      %4041 = vst [vmem:[%s473] sm:$0xff] %v4033
      %4042 = vst [vmem:[%s473 + $0x8] sm:$0xff] %v4034
      %4043 = vst [vmem:[%s473 + $0x10] sm:$0xff] %v4035
      %4044 = vst [vmem:[%s473 + $0x18] sm:$0xff] %v4036
      %4045 = vst [vmem:[%s473 + $0x20] sm:$0xff] %v4037
      %4046 = vst [vmem:[%s473 + $0x28] sm:$0xff] %v4038
      %4047 = vst [vmem:[%s473 + $0x30] sm:$0xff] %v4039
      %4048 = vst [vmem:[%s473 + $0x38] sm:$0xff] %v4040
      %p4049 = scmp.lt.s32.totalorder %s23, 1
      %s4050 = scalar_select %p4049, %s23, 1
      %s4051 = smul.addr %s4050, 8
      %s4052 = smul.addr %s4051, 8
      %s4053 = scalar_lea.vmem %s12, %s4052
      // Predicated region
      $region69: #{bottleneck_forward.1} parent=67 // pred_check
        %p4054 = pneg %p313
      $region70: #{bottleneck_forward.1} parent=67 // pred_check_branch
        %4056 = sbr.rel (%p4054) target = $region72
      $region71: #{bottleneck_forward.1} parent=67 // pred_region
        _
      $region72: #{bottleneck_forward.1} parent=67 // pred_fallthru
        _
    $region68: #{bottleneck_forward.1} parent=5 // pred_fallthru
      _
    %p4057 = scmp.le.s32.totalorder 2, %s18
    // Predicated region
    $region73: #{bottleneck_forward.1} parent=5 // pred_check
      %p4058 = pneg %p4057
    $region74: #{bottleneck_forward.1} parent=5 // pred_check_branch
      %4060 = sbr.rel (%p4058) target = $region76
    $region75: #{bottleneck_forward.1} parent=5 // pred_region
      %s4061 = ssub.s32 %s18, 2
      // Predicated region
      $region77: #{bottleneck_forward.1} parent=75 // pred_check
        %p4062 = pneg %p319
      $region78: #{bottleneck_forward.1} parent=75 // pred_check_branch
        %4064 = sbr.rel (%p4062) target = $region80
      $region79: #{bottleneck_forward.1} parent=75 // pred_region
        %p4065 = scmp.lt.s32.totalorder %s24, 1
        %s4066 = scalar_select %p4065, %s24, 1
        %s4067 = smul.addr %s4066, 8
        %s4068 = smul.addr %s4067, 8
        %s4069 = scalar_lea.vmem %s12, %s4068
      $region80: #{bottleneck_forward.1} parent=75 // pred_fallthru
        _
    $region76: #{bottleneck_forward.1} parent=5 // pred_fallthru
      _
  $region6: #{bottleneck_forward.1} parent=0 // loop_footer
    %s22 = sadd.s32 1, %s18
  $region7: #{bottleneck_forward.1} parent=0 // loop_footer_branch
    %17 = sbr.rel target = $region3
  $region8: #{bottleneck_forward.1} parent=0 // loop_exit
    _

</llo_original>
